<compile_context>
chip_gen: v7x
topology: tpu7x:2x2x1
jax: 0.10.0
libtpu: 0.0.40
codegen_flags: <defaults>
</compile_context>

<pallas_src>
import functools
import math

import jax
import jax.numpy as jnp
import numpy as np
from jax.experimental import pallas as pl
from jax.experimental.pallas import tpu as pltpu

LN_EPS = 1e-5  # torch.nn.LayerNorm default (ESPnet LayerNorm subclass keeps it)


def _cdiv(a, b):
    return -(-a // b)


def _round_up(x, m):
    return _cdiv(x, m) * m


def _variance_predictor_kernel(T, n_chans, has_mask, use_bf16, x_ref, *refs):
    if has_mask:
        (keep_ref, w1_ref, b1_ref, g1_ref, be1_ref,
         w2_ref, b2_ref, g2_ref, be2_ref, lw_ref, lb_ref, o_ref) = refs
    else:
        keep_ref = None
        (w1_ref, b1_ref, g1_ref, be1_ref,
         w2_ref, b2_ref, g2_ref, be2_ref, lw_ref, lb_ref, o_ref) = refs

    x = x_ref[...]                                   # (R, idim) f32
    R = x.shape[0]

    # Sequence-boundary masks, hoisted: built once, reused by both conv layers.
    row = jax.lax.broadcasted_iota(jnp.int32, (R, 1), 0)
    t_in_seq = row % T
    is_first = t_in_seq == 0                         # (R, 1) bool
    is_last = t_in_seq == (T - 1)                    # (R, 1) bool

    inv_c = 1.0 / n_chans                            # real channel count (pre-padding)
    mm_dtype = jnp.bfloat16 if use_bf16 else jnp.float32

    def conv_relu(h, w_ref, b_ref):
        # Conv1d(k=3, pad=1) + ReLU as three accumulating MXU matmuls
        # (no (R, 3C) concat buffer).  Shifts use non-negative cyclic rolls;
        # the wrapped rows are exactly the sequence-boundary rows and get zeroed.
        h_m1 = jnp.where(is_first, 0.0, pltpu.roll(h, shift=1, axis=0))      # h[t-1]
        h_p1 = jnp.where(is_last, 0.0, pltpu.roll(h, shift=R - 1, axis=0))   # h[t+1]
        y = jnp.dot(h_m1.astype(mm_dtype), w_ref[0],
                    preferred_element_type=jnp.float32)
        y = y + jnp.dot(h.astype(mm_dtype), w_ref[1],
                        preferred_element_type=jnp.float32)
        y = y + jnp.dot(h_p1.astype(mm_dtype), w_ref[2],
                        preferred_element_type=jnp.float32)
        return jnp.maximum(y + b_ref[...], 0.0)

    def layernorm(h, g_ref, be_ref):
        # Two independent lane reductions; var = E[h^2] - mean^2.
        # Padded channel lanes are exactly zero, so dividing by the REAL channel
        # count gives correct statistics without any extra masking; padded
        # gamma/beta lanes are zero so padded lanes stay zero downstream.
        mean = jnp.sum(h, axis=-1, keepdims=True) * inv_c
        ex2 = jnp.sum(h * h, axis=-1, keepdims=True) * inv_c
        var = jnp.maximum(ex2 - mean * mean, 0.0)
        return (h - mean) * jax.lax.rsqrt(var + LN_EPS) * g_ref[...] + be_ref[...]

    h = conv_relu(x, w1_ref, b1_ref)                 # (R, Cp)
    h = layernorm(h, g1_ref, be1_ref)
    # dropout: identity (eval)
    h = conv_relu(h, w2_ref, b2_ref)                 # (R, Cp)
    h = layernorm(h, g2_ref, be2_ref)
    # dropout: identity (eval)

    # Linear(n_chans, 1) with a lane-dense output row: transpose h to (Cp, R) on
    # the XLU, broadcast the (Cp, 1) weight column, sublane-reduce to (1, R).
    hT = jnp.transpose(h)                                                    # (Cp, R)
    out = jnp.sum(hT * lw_ref[...], axis=0, keepdims=True) + lb_ref[...]     # (1, R)

    if has_mask:
        out = out * keep_ref[...]     # fused masked_fill(padding_mask, 0.0)
    o_ref[...] = out


def _choose_blocking(B, T, rows_per_block):
    """Pick sequences-per-block bb and padded batch B_pad.

    Invariants: every block holds WHOLE sequences (r_blk = bb*T), and when the
    grid has more than one block, r_blk is a multiple of 128 so the lane-dense
    (1, r_blk) output/mask blocks satisfy the (8, 128) BlockSpec rule.
    """
    bb128 = 128 // math.gcd(T, 128)   # min bb with (bb*T) % 128 == 0
    bb8 = 8 // math.gcd(T, 8)         # min bb with (bb*T) % 8 == 0
    bb_target = max(1, rows_per_block // T)
    if B > bb128 and bb_target >= bb128:
        bb = (bb_target // bb128) * bb128
        bb = min(bb, _round_up(B, bb128))        # don't pad the batch past need
        B_pad = _round_up(B, bb)
        # Prefer >= 2 blocks so a 2-TensorCore part (v7x) can shard the grid.
        if B_pad // bb == 1 and bb >= 2 * bb128:
            bb = max(bb128, ((bb // 2) // bb128) * bb128)
            B_pad = _round_up(B, bb)
    else:
        # Single block covering the (padded) batch; minor dims equal the full
        # array dims so no 128 alignment is needed.
        # TODO(synk): if T is nearly coprime with 128 and B*T is huge, this
        # fallback can exceed the VMEM budget; a lengths-based retiling via
        # scalar prefetch would be needed for that regime.
        bb = _round_up(B, bb8)
        B_pad = bb
    return bb, B_pad


def _pick_vmem_limit(request_bytes):
    cap = 64 * 1024 * 1024            # conservative default = v7x per-core VMEM
    try:
        cap = int(pltpu.get_tpu_info().vmem_capacity_bytes)
    except Exception:
        pass
    return int(min(max(request_bytes, 32 * 1024 * 1024), int(0.75 * cap)))


def variance_predictor(xs, params, padding_mask=None, *,
                       rows_per_block=2048, use_bf16=False):
    """xs: (B, T, idim) f32 -> (B, T, 1) f32.  params use PyTorch layouts."""
    B, T, idim = xs.shape
    n_chans = params["c1w"].shape[0]                 # Conv1d weight (Cout, Cin, k)
    Cp = _round_up(n_chans, 128)
    has_mask = padding_mask is not None

    bb, B_pad = _choose_blocking(B, T, rows_per_block)
    r_blk = bb * T
    grid = (B_pad * T) // r_blk
    pad_rows = (B_pad - B) * T

    # ---- operand preparation (PyTorch layouts -> kernel layouts, zero padding) ----
    w1 = jnp.transpose(params["c1w"], (2, 1, 0))                   # (3, idim, C)
    w1 = jnp.pad(w1, ((0, 0), (0, 0), (0, Cp - n_chans)))
    w2 = jnp.transpose(params["c2w"], (2, 1, 0))                   # (3, C, C)
    w2 = jnp.pad(w2, ((0, 0), (0, Cp - n_chans), (0, Cp - n_chans)))

    def row_pad(v):
        return jnp.pad(v.reshape(1, n_chans), ((0, 0), (0, Cp - n_chans)))

    b1, g1, be1 = row_pad(params["c1b"]), row_pad(params["ln1_g"]), row_pad(params["ln1_b"])
    b2, g2, be2 = row_pad(params["c2b"]), row_pad(params["ln2_g"]), row_pad(params["ln2_b"])
    lw = jnp.pad(params["lin_w"].reshape(n_chans, 1), ((0, Cp - n_chans), (0, 0)))  # (Cp, 1)
    lb = params["lin_b"].reshape(1, 1).astype(jnp.float32)

    if use_bf16:
        w1, w2 = w1.astype(jnp.bfloat16), w2.astype(jnp.bfloat16)

    xs_flat = xs.reshape(B * T, idim).astype(jnp.float32)
    if pad_rows:
        xs_flat = jnp.pad(xs_flat, ((0, pad_rows), (0, 0)))

    operands = [xs_flat]
    in_specs = [pl.BlockSpec((r_blk, idim), lambda g: (g, 0))]
    if has_mask:
        keep = 1.0 - padding_mask.reshape(1, B * T).astype(jnp.float32)
        if pad_rows:
            keep = jnp.pad(keep, ((0, 0), (0, pad_rows)))
        operands.append(keep)
        in_specs.append(pl.BlockSpec((1, r_blk), lambda g: (0, g)))  # lane-dense mask

    def resident(a):
        # Constant index map -> block never changes -> stays resident in VMEM.
        return pl.BlockSpec(a.shape, lambda g: (0,) * a.ndim)

    for a in (w1, b1, g1, be1, w2, b2, g2, be2, lw, lb):
        operands.append(a)
        in_specs.append(resident(a))

    # Rough VMEM budget: double-buffered streams + live per-block intermediates.
    est = 4 * (2 * r_blk * idim + 4 * r_blk + 8 * r_blk * Cp
               + 2 * (w1.size + w2.size + 8 * Cp + 1))
    vmem_limit = _pick_vmem_limit(int(est * 1.25))

    out = pl.pallas_call(
        functools.partial(_variance_predictor_kernel, T, n_chans, has_mask, use_bf16),
        out_shape=jax.ShapeDtypeStruct((1, B_pad * T), jnp.float32),
        grid_spec=pltpu.PrefetchScalarGridSpec(
            num_scalar_prefetch=0,
            grid=(grid,),
            in_specs=in_specs,
            out_specs=pl.BlockSpec((1, r_blk), lambda g: (0, g)),   # lane-dense output
        ),
        compiler_params=pltpu.CompilerParams(
            dimension_semantics=("parallel",),
            vmem_limit_bytes=vmem_limit,
        ),
    )(*operands)

    return out.reshape(B_pad, T, 1)[:B]


def make_params(key, idim, n_chans):
    """Parameters in PyTorch layouts: Conv1d (Cout, Cin, k), Linear (out, in)."""
    ks = jax.random.split(key, 10)
    s = 0.1
    return {
        "c1w": s * jax.random.normal(ks[0], (n_chans, idim, 3), jnp.float32),
        "c1b": s * jax.random.normal(ks[1], (n_chans,), jnp.float32),
        "ln1_g": 1.0 + 0.1 * jax.random.normal(ks[2], (n_chans,), jnp.float32),
        "ln1_b": 0.1 * jax.random.normal(ks[3], (n_chans,), jnp.float32),
        "c2w": s * jax.random.normal(ks[4], (n_chans, n_chans, 3), jnp.float32),
        "c2b": s * jax.random.normal(ks[5], (n_chans,), jnp.float32),
        "ln2_g": 1.0 + 0.1 * jax.random.normal(ks[6], (n_chans,), jnp.float32),
        "ln2_b": 0.1 * jax.random.normal(ks[7], (n_chans,), jnp.float32),
        "lin_w": s * jax.random.normal(ks[8], (1, n_chans), jnp.float32),
        "lin_b": s * jax.random.normal(ks[9], (1,), jnp.float32),
    }


def reference_jax(xs, params, padding_mask=None):
    """Pure-JAX reference (same math, PyTorch-layout params) for validation."""
    hi = jax.lax.Precision.HIGHEST
    w1 = jnp.transpose(params["c1w"], (2, 1, 0))
    w2 = jnp.transpose(params["c2w"], (2, 1, 0))

    def conv_relu(x, w, b):                       # x: (B, T, Cin)
        xp = jnp.pad(x, ((0, 0), (1, 1), (0, 0)))
        y = (jnp.einsum("btc,cd->btd", xp[:, :-2], w[0], precision=hi)
             + jnp.einsum("btc,cd->btd", xp[:, 1:-1], w[1], precision=hi)
             + jnp.einsum("btc,cd->btd", xp[:, 2:], w[2], precision=hi) + b)
        return jnp.maximum(y, 0.0)

    def ln(x, g, b):
        m = jnp.mean(x, axis=-1, keepdims=True)
        v = jnp.mean(jnp.square(x - m), axis=-1, keepdims=True)
        return (x - m) / jnp.sqrt(v + LN_EPS) * g + b

    h = conv_relu(xs, w1, params["c1b"])
    h = ln(h, params["ln1_g"], params["ln1_b"])
    h = conv_relu(h, w2, params["c2b"])
    h = ln(h, params["ln2_g"], params["ln2_b"])
    out = jnp.einsum("btc,dc->btd", h, params["lin_w"], precision=hi) + params["lin_b"]
    if padding_mask is not None:
        out = jnp.where(padding_mask[..., None], 0.0, out)
    return out


if __name__ == "__main__":
    B, T, idim, n_chans = 4, 64, 48, 80

    key = jax.random.PRNGKey(0)
    k_x, k_p = jax.random.split(key)
    xs = jax.random.normal(k_x, (B, T, idim), jnp.float32)
    params = make_params(k_p, idim, n_chans)
    padding_mask = jnp.zeros((B, T), dtype=bool).at[:, T - 5:].set(True)

    # Small rows_per_block -> 2 sequences per block, grid=(2,): exercises the
    # multi-block pipeline, cross-block sequence boundaries, channel padding and
    # the fused lane-dense padding mask.
    out = variance_predictor(xs, params, padding_mask, rows_per_block=128)
    out = jax.block_until_ready(out)
    assert out.shape == (B, T, 1)
    ref = reference_jax(xs, params, padding_mask)
    np.testing.assert_allclose(np.asarray(out), np.asarray(ref), atol=2e-4, rtol=2e-3)

    # Default blocking, no padding mask (mask input + masked_fill specialized away).
    out2 = jax.block_until_ready(variance_predictor(xs, params))
    ref2 = reference_jax(xs, params)
    np.testing.assert_allclose(np.asarray(out2), np.asarray(ref2), atol=2e-4, rtol=2e-3)

    print("KERNEL_OK")
</pallas_src>

<mosaic_0001>
module attributes {stable_mosaic.version = 11 : i64} {
  func.func @_variance_predictor_kernel(%arg0: i32, %arg1: memref<128x48xf32, #tpu.memory_space<vmem>>, %arg2: memref<1x128xf32, #tpu.memory_space<vmem>>, %arg3: memref<3x48x128xf32, #tpu.memory_space<vmem>>, %arg4: memref<1x128xf32, #tpu.memory_space<vmem>>, %arg5: memref<1x128xf32, #tpu.memory_space<vmem>>, %arg6: memref<1x128xf32, #tpu.memory_space<vmem>>, %arg7: memref<3x128x128xf32, #tpu.memory_space<vmem>>, %arg8: memref<1x128xf32, #tpu.memory_space<vmem>>, %arg9: memref<1x128xf32, #tpu.memory_space<vmem>>, %arg10: memref<1x128xf32, #tpu.memory_space<vmem>>, %arg11: memref<128x1xf32, #tpu.memory_space<vmem>>, %arg12: memref<1x1xf32, #tpu.memory_space<vmem>>, %arg13: memref<1x128xf32, #tpu.memory_space<vmem>>) attributes {dimension_semantics = [#tpu.dimension_semantics<parallel>], iteration_bounds = array<i64: 2>, scalar_prefetch = 0 : i64, scratch_operands = 0 : i64, tpu.core_type = #tpu.core_type<tc>, window_params = [{transform_indices = @transform_0, window_bounds = array<i64: 128, 48>}, {transform_indices = @transform_1, window_bounds = array<i64: 1, 128>}, {pipeline_mode = #tpu.pipeline_mode<synchronous>, transform_indices = @transform_2, window_bounds = array<i64: 3, 48, 128>}, {pipeline_mode = #tpu.pipeline_mode<synchronous>, transform_indices = @transform_3, window_bounds = array<i64: 1, 128>}, {pipeline_mode = #tpu.pipeline_mode<synchronous>, transform_indices = @transform_4, window_bounds = array<i64: 1, 128>}, {pipeline_mode = #tpu.pipeline_mode<synchronous>, transform_indices = @transform_5, window_bounds = array<i64: 1, 128>}, {pipeline_mode = #tpu.pipeline_mode<synchronous>, transform_indices = @transform_6, window_bounds = array<i64: 3, 128, 128>}, {pipeline_mode = #tpu.pipeline_mode<synchronous>, transform_indices = @transform_7, window_bounds = array<i64: 1, 128>}, {pipeline_mode = #tpu.pipeline_mode<synchronous>, transform_indices = @transform_8, window_bounds = array<i64: 1, 128>}, {pipeline_mode = #tpu.pipeline_mode<synchronous>, transform_indices = @transform_9, window_bounds = array<i64: 1, 128>}, {pipeline_mode = #tpu.pipeline_mode<synchronous>, transform_indices = @transform_10, window_bounds = array<i64: 128, 1>}, {pipeline_mode = #tpu.pipeline_mode<synchronous>, transform_indices = @transform_11, window_bounds = array<i64: 1, 1>}, {transform_indices = @transform_12, window_bounds = array<i64: 1, 128>}]} {
    %c0 = arith.constant 0 : index
    %c0_0 = arith.constant 0 : index
    %0 = vector.load %arg1[%c0, %c0_0] : memref<128x48xf32, #tpu.memory_space<vmem>>, vector<128x48xf32>
    %1 = tpu.iota {dimensions = array<i32: 0>} : vector<128x1xi32>
    %c64_i32 = arith.constant 64 : i32
    %c0_i32 = arith.constant 0 : i32
    %2 = arith.cmpi eq, %c64_i32, %c0_i32 : i32
    %c1_i32 = arith.constant 1 : i32
    %3 = arith.select %2, %c1_i32, %c64_i32 : i32
    %4 = vector.broadcast %3 : i32 to vector<128x1xi32>
    %5 = arith.remsi %1, %4 : vector<128x1xi32>
    %c0_i32_1 = arith.constant 0 : i32
    %6 = vector.broadcast %c0_i32_1 : i32 to vector<128x1xi32>
    %7 = arith.cmpi ne, %5, %6 : vector<128x1xi32>
    %c0_i32_2 = arith.constant 0 : i32
    %8 = vector.broadcast %c0_i32_2 : i32 to vector<128x1xi32>
    %9 = arith.cmpi slt, %5, %8 : vector<128x1xi32>
    %c0_i32_3 = arith.constant 0 : i32
    %10 = arith.cmpi slt, %3, %c0_i32_3 : i32
    %11 = vector.broadcast %10 : i1 to vector<128x1xi1>
    %12 = vector.broadcast %11 : vector<128x1xi1> to vector<128x1xi1>
    %13 = arith.xori %9, %12 : vector<128x1xi1>
    %14 = arith.andi %13, %7 : vector<128x1xi1>
    %15 = vector.broadcast %3 : i32 to vector<128x1xi32>
    %16 = arith.addi %5, %15 : vector<128x1xi32>
    %17 = arith.select %14, %16, %5 : vector<128x1xi1>, vector<128x1xi32>
    %c0_i32_4 = arith.constant 0 : i32
    %18 = vector.broadcast %c0_i32_4 : i32 to vector<128x1xi32>
    %19 = arith.cmpi eq, %17, %18 : vector<128x1xi32>
    %c63_i32 = arith.constant 63 : i32
    %20 = vector.broadcast %c63_i32 : i32 to vector<128x1xi32>
    %21 = arith.cmpi eq, %17, %20 : vector<128x1xi32>
    %c1_i32_5 = arith.constant 1 : i32
    %22 = tpu.dynamic_rotate %0 by %c1_i32_5 dim 0 : vector<128x48xf32>, i32 -> vector<128x48xf32>
    %cst = arith.constant 0.000000e+00 : f32
    %23 = vector.shape_cast %19 : vector<128x1xi1> to vector<128x1xi1>
    %24 = vector.broadcast %23 : vector<128x1xi1> to vector<128x48xi1>
    %25 = vector.broadcast %cst : f32 to vector<128x48xf32>
    %26 = arith.select %24, %25, %22 : vector<128x48xi1>, vector<128x48xf32>
    %c127_i32 = arith.constant 127 : i32
    %27 = tpu.dynamic_rotate %0 by %c127_i32 dim 0 : vector<128x48xf32>, i32 -> vector<128x48xf32>
    %cst_6 = arith.constant 0.000000e+00 : f32
    %28 = vector.shape_cast %21 : vector<128x1xi1> to vector<128x1xi1>
    %29 = vector.broadcast %28 : vector<128x1xi1> to vector<128x48xi1>
    %30 = vector.broadcast %cst_6 : f32 to vector<128x48xf32>
    %31 = arith.select %29, %30, %27 : vector<128x48xi1>, vector<128x48xf32>
    %c0_7 = arith.constant 0 : index
    %c0_8 = arith.constant 0 : index
    %c0_9 = arith.constant 0 : index
    %32 = vector.load %arg3[%c0_7, %c0_8, %c0_9] : memref<3x48x128xf32, #tpu.memory_space<vmem>>, vector<1x48x128xf32>
    %33 = vector.shape_cast %32 : vector<1x48x128xf32> to vector<48x128xf32>
    %cst_10 = arith.constant dense<0.000000e+00> : vector<128x128xf32>
    %34 = tpu.matmul %26, %33, %cst_10 {dimension_numbers = #tpu.dot_dimension_numbers<[1], [0], [0], [1], [0, 0, 1, 1], [], []>} : vector<128x48xf32>, vector<48x128xf32>, vector<128x128xf32> -> vector<128x128xf32>
    %c1 = arith.constant 1 : index
    %c0_11 = arith.constant 0 : index
    %c0_12 = arith.constant 0 : index
    %35 = vector.load %arg3[%c1, %c0_11, %c0_12] : memref<3x48x128xf32, #tpu.memory_space<vmem>>, vector<1x48x128xf32>
    %36 = vector.shape_cast %35 : vector<1x48x128xf32> to vector<48x128xf32>
    %cst_13 = arith.constant dense<0.000000e+00> : vector<128x128xf32>
    %37 = tpu.matmul %0, %36, %cst_13 {dimension_numbers = #tpu.dot_dimension_numbers<[1], [0], [0], [1], [0, 0, 1, 1], [], []>} : vector<128x48xf32>, vector<48x128xf32>, vector<128x128xf32> -> vector<128x128xf32>
    %38 = arith.addf %34, %37 : vector<128x128xf32>
    %c2 = arith.constant 2 : index
    %c0_14 = arith.constant 0 : index
    %c0_15 = arith.constant 0 : index
    %39 = vector.load %arg3[%c2, %c0_14, %c0_15] : memref<3x48x128xf32, #tpu.memory_space<vmem>>, vector<1x48x128xf32>
    %40 = vector.shape_cast %39 : vector<1x48x128xf32> to vector<48x128xf32>
    %cst_16 = arith.constant dense<0.000000e+00> : vector<128x128xf32>
    %41 = tpu.matmul %31, %40, %cst_16 {dimension_numbers = #tpu.dot_dimension_numbers<[1], [0], [0], [1], [0, 0, 1, 1], [], []>} : vector<128x48xf32>, vector<48x128xf32>, vector<128x128xf32> -> vector<128x128xf32>
    %42 = arith.addf %38, %41 : vector<128x128xf32>
    %c0_17 = arith.constant 0 : index
    %c0_18 = arith.constant 0 : index
    %43 = vector.load %arg4[%c0_17, %c0_18] : memref<1x128xf32, #tpu.memory_space<vmem>>, vector<1x128xf32>
    %44 = vector.broadcast %43 : vector<1x128xf32> to vector<128x128xf32>
    %45 = arith.addf %42, %44 : vector<128x128xf32>
    %cst_19 = arith.constant 0.000000e+00 : f32
    %46 = vector.broadcast %cst_19 : f32 to vector<128x128xf32>
    %47 = arith.maximumf %45, %46 : vector<128x128xf32>
    %cst_20 = arith.constant dense<0.000000e+00> : vector<128xf32>
    %48 = vector.multi_reduction <add>, %47, %cst_20 [1] : vector<128x128xf32> to vector<128xf32>
    %49 = vector.shape_cast %48 : vector<128xf32> to vector<128x1xf32>
    %cst_21 = arith.constant 1.250000e-02 : f32
    %50 = vector.broadcast %cst_21 : f32 to vector<128x1xf32>
    %51 = arith.mulf %49, %50 : vector<128x1xf32>
    %52 = arith.mulf %47, %47 : vector<128x128xf32>
    %cst_22 = arith.constant dense<0.000000e+00> : vector<128xf32>
    %53 = vector.multi_reduction <add>, %52, %cst_22 [1] : vector<128x128xf32> to vector<128xf32>
    %54 = vector.shape_cast %53 : vector<128xf32> to vector<128x1xf32>
    %cst_23 = arith.constant 1.250000e-02 : f32
    %55 = vector.broadcast %cst_23 : f32 to vector<128x1xf32>
    %56 = arith.mulf %54, %55 : vector<128x1xf32>
    %57 = arith.mulf %51, %51 : vector<128x1xf32>
    %58 = arith.subf %56, %57 : vector<128x1xf32>
    %cst_24 = arith.constant 0.000000e+00 : f32
    %59 = vector.broadcast %cst_24 : f32 to vector<128x1xf32>
    %60 = arith.maximumf %58, %59 : vector<128x1xf32>
    %61 = vector.broadcast %51 : vector<128x1xf32> to vector<128x128xf32>
    %62 = arith.subf %47, %61 : vector<128x128xf32>
    %cst_25 = arith.constant 9.99999974E-6 : f32
    %63 = vector.broadcast %cst_25 : f32 to vector<128x1xf32>
    %64 = arith.addf %60, %63 : vector<128x1xf32>
    %65 = math.rsqrt %64 : vector<128x1xf32>
    %66 = vector.broadcast %65 : vector<128x1xf32> to vector<128x128xf32>
    %67 = arith.mulf %62, %66 : vector<128x128xf32>
    %c0_26 = arith.constant 0 : index
    %c0_27 = arith.constant 0 : index
    %68 = vector.load %arg5[%c0_26, %c0_27] : memref<1x128xf32, #tpu.memory_space<vmem>>, vector<1x128xf32>
    %69 = vector.broadcast %68 : vector<1x128xf32> to vector<128x128xf32>
    %70 = arith.mulf %67, %69 : vector<128x128xf32>
    %c0_28 = arith.constant 0 : index
    %c0_29 = arith.constant 0 : index
    %71 = vector.load %arg6[%c0_28, %c0_29] : memref<1x128xf32, #tpu.memory_space<vmem>>, vector<1x128xf32>
    %72 = vector.broadcast %71 : vector<1x128xf32> to vector<128x128xf32>
    %73 = arith.addf %70, %72 : vector<128x128xf32>
    %c1_i32_30 = arith.constant 1 : i32
    %74 = tpu.dynamic_rotate %73 by %c1_i32_30 dim 0 : vector<128x128xf32>, i32 -> vector<128x128xf32>
    %cst_31 = arith.constant 0.000000e+00 : f32
    %75 = vector.shape_cast %19 : vector<128x1xi1> to vector<128x1xi1>
    %76 = vector.broadcast %75 : vector<128x1xi1> to vector<128x128xi1>
    %77 = vector.broadcast %cst_31 : f32 to vector<128x128xf32>
    %78 = arith.select %76, %77, %74 : vector<128x128xi1>, vector<128x128xf32>
    %c127_i32_32 = arith.constant 127 : i32
    %79 = tpu.dynamic_rotate %73 by %c127_i32_32 dim 0 : vector<128x128xf32>, i32 -> vector<128x128xf32>
    %cst_33 = arith.constant 0.000000e+00 : f32
    %80 = vector.shape_cast %21 : vector<128x1xi1> to vector<128x1xi1>
    %81 = vector.broadcast %80 : vector<128x1xi1> to vector<128x128xi1>
    %82 = vector.broadcast %cst_33 : f32 to vector<128x128xf32>
    %83 = arith.select %81, %82, %79 : vector<128x128xi1>, vector<128x128xf32>
    %c0_34 = arith.constant 0 : index
    %c0_35 = arith.constant 0 : index
    %c0_36 = arith.constant 0 : index
    %84 = vector.load %arg7[%c0_34, %c0_35, %c0_36] : memref<3x128x128xf32, #tpu.memory_space<vmem>>, vector<1x128x128xf32>
    %85 = vector.shape_cast %84 : vector<1x128x128xf32> to vector<128x128xf32>
    %cst_37 = arith.constant dense<0.000000e+00> : vector<128x128xf32>
    %86 = tpu.matmul %78, %85, %cst_37 {dimension_numbers = #tpu.dot_dimension_numbers<[1], [0], [0], [1], [0, 0, 1, 1], [], []>} : vector<128x128xf32>, vector<128x128xf32>, vector<128x128xf32> -> vector<128x128xf32>
    %c1_38 = arith.constant 1 : index
    %c0_39 = arith.constant 0 : index
    %c0_40 = arith.constant 0 : index
    %87 = vector.load %arg7[%c1_38, %c0_39, %c0_40] : memref<3x128x128xf32, #tpu.memory_space<vmem>>, vector<1x128x128xf32>
    %88 = vector.shape_cast %87 : vector<1x128x128xf32> to vector<128x128xf32>
    %cst_41 = arith.constant dense<0.000000e+00> : vector<128x128xf32>
    %89 = tpu.matmul %73, %88, %cst_41 {dimension_numbers = #tpu.dot_dimension_numbers<[1], [0], [0], [1], [0, 0, 1, 1], [], []>} : vector<128x128xf32>, vector<128x128xf32>, vector<128x128xf32> -> vector<128x128xf32>
    %90 = arith.addf %86, %89 : vector<128x128xf32>
    %c2_42 = arith.constant 2 : index
    %c0_43 = arith.constant 0 : index
    %c0_44 = arith.constant 0 : index
    %91 = vector.load %arg7[%c2_42, %c0_43, %c0_44] : memref<3x128x128xf32, #tpu.memory_space<vmem>>, vector<1x128x128xf32>
    %92 = vector.shape_cast %91 : vector<1x128x128xf32> to vector<128x128xf32>
    %cst_45 = arith.constant dense<0.000000e+00> : vector<128x128xf32>
    %93 = tpu.matmul %83, %92, %cst_45 {dimension_numbers = #tpu.dot_dimension_numbers<[1], [0], [0], [1], [0, 0, 1, 1], [], []>} : vector<128x128xf32>, vector<128x128xf32>, vector<128x128xf32> -> vector<128x128xf32>
    %94 = arith.addf %90, %93 : vector<128x128xf32>
    %c0_46 = arith.constant 0 : index
    %c0_47 = arith.constant 0 : index
    %95 = vector.load %arg8[%c0_46, %c0_47] : memref<1x128xf32, #tpu.memory_space<vmem>>, vector<1x128xf32>
    %96 = vector.broadcast %95 : vector<1x128xf32> to vector<128x128xf32>
    %97 = arith.addf %94, %96 : vector<128x128xf32>
    %cst_48 = arith.constant 0.000000e+00 : f32
    %98 = vector.broadcast %cst_48 : f32 to vector<128x128xf32>
    %99 = arith.maximumf %97, %98 : vector<128x128xf32>
    %cst_49 = arith.constant dense<0.000000e+00> : vector<128xf32>
    %100 = vector.multi_reduction <add>, %99, %cst_49 [1] : vector<128x128xf32> to vector<128xf32>
    %101 = vector.shape_cast %100 : vector<128xf32> to vector<128x1xf32>
    %cst_50 = arith.constant 1.250000e-02 : f32
    %102 = vector.broadcast %cst_50 : f32 to vector<128x1xf32>
    %103 = arith.mulf %101, %102 : vector<128x1xf32>
    %104 = arith.mulf %99, %99 : vector<128x128xf32>
    %cst_51 = arith.constant dense<0.000000e+00> : vector<128xf32>
    %105 = vector.multi_reduction <add>, %104, %cst_51 [1] : vector<128x128xf32> to vector<128xf32>
    %106 = vector.shape_cast %105 : vector<128xf32> to vector<128x1xf32>
    %cst_52 = arith.constant 1.250000e-02 : f32
    %107 = vector.broadcast %cst_52 : f32 to vector<128x1xf32>
    %108 = arith.mulf %106, %107 : vector<128x1xf32>
    %109 = arith.mulf %103, %103 : vector<128x1xf32>
    %110 = arith.subf %108, %109 : vector<128x1xf32>
    %cst_53 = arith.constant 0.000000e+00 : f32
    %111 = vector.broadcast %cst_53 : f32 to vector<128x1xf32>
    %112 = arith.maximumf %110, %111 : vector<128x1xf32>
    %113 = vector.broadcast %103 : vector<128x1xf32> to vector<128x128xf32>
    %114 = arith.subf %99, %113 : vector<128x128xf32>
    %cst_54 = arith.constant 9.99999974E-6 : f32
    %115 = vector.broadcast %cst_54 : f32 to vector<128x1xf32>
    %116 = arith.addf %112, %115 : vector<128x1xf32>
    %117 = math.rsqrt %116 : vector<128x1xf32>
    %118 = vector.broadcast %117 : vector<128x1xf32> to vector<128x128xf32>
    %119 = arith.mulf %114, %118 : vector<128x128xf32>
    %c0_55 = arith.constant 0 : index
    %c0_56 = arith.constant 0 : index
    %120 = vector.load %arg9[%c0_55, %c0_56] : memref<1x128xf32, #tpu.memory_space<vmem>>, vector<1x128xf32>
    %121 = vector.broadcast %120 : vector<1x128xf32> to vector<128x128xf32>
    %122 = arith.mulf %119, %121 : vector<128x128xf32>
    %c0_57 = arith.constant 0 : index
    %c0_58 = arith.constant 0 : index
    %123 = vector.load %arg10[%c0_57, %c0_58] : memref<1x128xf32, #tpu.memory_space<vmem>>, vector<1x128xf32>
    %124 = vector.broadcast %123 : vector<1x128xf32> to vector<128x128xf32>
    %125 = arith.addf %122, %124 : vector<128x128xf32>
    %126 = tpu.transpose %125, [1, 0] : vector<128x128xf32> -> vector<128x128xf32>
    %c0_59 = arith.constant 0 : index
    %c0_60 = arith.constant 0 : index
    %127 = vector.load %arg11[%c0_59, %c0_60] : memref<128x1xf32, #tpu.memory_space<vmem>>, vector<128x1xf32>
    %128 = vector.broadcast %127 : vector<128x1xf32> to vector<128x128xf32>
    %129 = arith.mulf %126, %128 : vector<128x128xf32>
    %cst_61 = arith.constant dense<0.000000e+00> : vector<128xf32>
    %130 = vector.multi_reduction <add>, %129, %cst_61 [0] : vector<128x128xf32> to vector<128xf32>
    %131 = vector.shape_cast %130 : vector<128xf32> to vector<1x128xf32>
    %c0_62 = arith.constant 0 : index
    %c0_63 = arith.constant 0 : index
    %132 = vector.load %arg12[%c0_62, %c0_63] : memref<1x1xf32, #tpu.memory_space<vmem>>, vector<1x1xf32>
    %133 = vector.broadcast %132 : vector<1x1xf32> to vector<1x128xf32>
    %134 = arith.addf %131, %133 : vector<1x128xf32>
    %c0_64 = arith.constant 0 : index
    %c0_65 = arith.constant 0 : index
    %135 = vector.load %arg2[%c0_64, %c0_65] : memref<1x128xf32, #tpu.memory_space<vmem>>, vector<1x128xf32>
    %136 = arith.mulf %134, %135 : vector<1x128xf32>
    %c0_66 = arith.constant 0 : index
    %c0_67 = arith.constant 0 : index
    %137 = vector.load %arg13[%c0_66, %c0_67] : memref<1x128xf32, #tpu.memory_space<vmem>>, vector<1x128xf32>
    tpu.vector_store %arg13[%c0_66, %c0_67], %136 {strides = array<i32>} : memref<1x128xf32, #tpu.memory_space<vmem>>, vector<1x128xf32>,
    return
  }
  func.func @transform_0(%arg0: i32) -> (i32, i32) {
    %c0_i32 = arith.constant 0 : i32
    %c0_i32_0 = arith.constant 0 : i32
    return %arg0, %c0_i32 : i32, i32
  }
  func.func @transform_1(%arg0: i32) -> (i32, i32) {
    %c0_i32 = arith.constant 0 : i32
    %c0_i32_0 = arith.constant 0 : i32
    return %c0_i32, %arg0 : i32, i32
  }
  func.func @transform_2(%arg0: i32) -> (i32, i32, i32) {
    %c0_i32 = arith.constant 0 : i32
    %c0_i32_0 = arith.constant 0 : i32
    %c0_i32_1 = arith.constant 0 : i32
    %c0_i32_2 = arith.constant 0 : i32
    return %c0_i32, %c0_i32_0, %c0_i32_1 : i32, i32, i32
  }
  func.func @transform_3(%arg0: i32) -> (i32, i32) {
    %c0_i32 = arith.constant 0 : i32
    %c0_i32_0 = arith.constant 0 : i32
    %c0_i32_1 = arith.constant 0 : i32
    return %c0_i32, %c0_i32_0 : i32, i32
  }
  func.func @transform_4(%arg0: i32) -> (i32, i32) {
    %c0_i32 = arith.constant 0 : i32
    %c0_i32_0 = arith.constant 0 : i32
    %c0_i32_1 = arith.constant 0 : i32
    return %c0_i32, %c0_i32_0 : i32, i32
  }
  func.func @transform_5(%arg0: i32) -> (i32, i32) {
    %c0_i32 = arith.constant 0 : i32
    %c0_i32_0 = arith.constant 0 : i32
    %c0_i32_1 = arith.constant 0 : i32
    return %c0_i32, %c0_i32_0 : i32, i32
  }
  func.func @transform_6(%arg0: i32) -> (i32, i32, i32) {
    %c0_i32 = arith.constant 0 : i32
    %c0_i32_0 = arith.constant 0 : i32
    %c0_i32_1 = arith.constant 0 : i32
    %c0_i32_2 = arith.constant 0 : i32
    return %c0_i32, %c0_i32_0, %c0_i32_1 : i32, i32, i32
  }
  func.func @transform_7(%arg0: i32) -> (i32, i32) {
    %c0_i32 = arith.constant 0 : i32
    %c0_i32_0 = arith.constant 0 : i32
    %c0_i32_1 = arith.constant 0 : i32
    return %c0_i32, %c0_i32_0 : i32, i32
  }
  func.func @transform_8(%arg0: i32) -> (i32, i32) {
    %c0_i32 = arith.constant 0 : i32
    %c0_i32_0 = arith.constant 0 : i32
    %c0_i32_1 = arith.constant 0 : i32
    return %c0_i32, %c0_i32_0 : i32, i32
  }
  func.func @transform_9(%arg0: i32) -> (i32, i32) {
    %c0_i32 = arith.constant 0 : i32
    %c0_i32_0 = arith.constant 0 : i32
    %c0_i32_1 = arith.constant 0 : i32
    return %c0_i32, %c0_i32_0 : i32, i32
  }
  func.func @transform_10(%arg0: i32) -> (i32, i32) {
    %c0_i32 = arith.constant 0 : i32
    %c0_i32_0 = arith.constant 0 : i32
    %c0_i32_1 = arith.constant 0 : i32
    return %c0_i32, %c0_i32_0 : i32, i32
  }
  func.func @transform_11(%arg0: i32) -> (i32, i32) {
    %c0_i32 = arith.constant 0 : i32
    %c0_i32_0 = arith.constant 0 : i32
    %c0_i32_1 = arith.constant 0 : i32
    return %c0_i32, %c0_i32_0 : i32, i32
  }
  func.func @transform_12(%arg0: i32) -> (i32, i32) {
    %c0_i32 = arith.constant 0 : i32
    %c0_i32_0 = arith.constant 0 : i32
    return %c0_i32, %arg0 : i32, i32
  }
}

</mosaic_0001>

<llo_original>
// kernel: tpu_custom_call.1
$region0: #{tpu_custom_call.1}
  #allocation0 [shape = 'u32[]', space=smem, size = 0x4, offset = 0x4, fixed_abs, tag = 'smem constant byte address 0x4 - core index']
  #allocation1 [shape = 'u32[144,128]{1,0:T(1,128)}', space=vmem, size = 0x12000, scoped, tag = 'internal scratch']
  #allocation2 [shape = 'f32[1,1]{1,0:T(1,128)S(1)}', space=vmem, size = 0x200, scoped, tag = 'scoped memory for tpu_custom_call.1']
  %s0 = inlined_call_operand.vmem [shape: f32[256,48], index: 0, kind: input, shape index: {}]
  %s1 = inlined_call_operand.vmem [shape: f32[1,256], index: 1, kind: input, shape index: {}]
  %s2 = inlined_call_operand.hbm [shape: f32[3,48,128], index: 2, kind: input, shape index: {}]
  %s3 = inlined_call_operand.vmem [shape: f32[1,128], index: 3, kind: input, shape index: {}]
  %s4 = inlined_call_operand.vmem [shape: f32[1,128], index: 4, kind: input, shape index: {}]
  %s5 = inlined_call_operand.vmem [shape: f32[1,128], index: 5, kind: input, shape index: {}]
  %s6 = inlined_call_operand.vmem [shape: f32[3,128,128], index: 6, kind: input, shape index: {}]
  %s7 = inlined_call_operand.vmem [shape: f32[1,128], index: 7, kind: input, shape index: {}]
  %s8 = inlined_call_operand.vmem [shape: f32[1,128], index: 8, kind: input, shape index: {}]
  %s9 = inlined_call_operand.vmem [shape: f32[1,128], index: 9, kind: input, shape index: {}]
  %s10 = inlined_call_operand.vmem [shape: f32[128,1], index: 10, kind: input, shape index: {}]
  %s11 = inlined_call_operand.<no memory space> [shape: f32[1,1], index: 11, kind: input, shape index: {}]
  %s12 = inlined_call_operand.hbm [shape: f32[1,256], index: 12, kind: output, shape index: {}]
  %s13 = sld [smem:[#allocation0]]
  $region85: #{tpu_custom_call.1} parent=0
    _
  %s15 = ssub.s32 1, %s13
  %s16 = scalar_select 0, %s15, %s13
  %v17 = vstv %s11
  %18 = vst [vmem:[#allocation2] sm:$0x1] %v17
  $region1: #{tpu_custom_call.1} parent=0
    #allocation3 [shape = 'u8[73728]{0}', space=vmem, size = 0x12000, scoped, tag = 'input window, operand 2, single buffered']
    #allocation4 [shape = 's32[2]{0}', space=sflag, size = 0x8, scoped, tag = 'scoped memory for tpu_custom_call.1']
    #allocation5 [shape = 's32[2]{0}', space=sflag, size = 0x8, scoped, tag = 'scoped memory for tpu_custom_call.1']
    #allocation6 [shape = 'u8[1024]{0}', space=vmem, size = 0x400, scoped, tag = 'output window, operand 0']
    %19 = vsyncpa [#allocation4], 0
    %20 = vsyncpa [#allocation5], 0
    %s21 = scalar_lea.sflag [#allocation5], 1
    %22 = vsyncpa %s21, 0
    loop: start=0, step=1, limit=4
    $region2: #{tpu_custom_call.1} parent=1 // loop_pre_header
      _
    $region3: #{tpu_custom_call.1} parent=1 // loop_header
      %s24 = sphi 0, %s28
      %p25 = scmp.ge.s32.totalorder %s24, 4
      %s34 = sphi 0, %s36
      %s37 = sphi 0, %s34
      %s38 = sphi 0, %s37
      %s54 = sphi 0, %s38
      %s60 = sphi 0, %s62
      %s63 = sphi 0, %s60
      %s64 = sphi 0, %s63
      %s80 = sphi 0, %s64
      %s84 = sphi 0, %s84
      %s86 = sphi 0, %s84
      %s87 = sphi 0, %s86
      %s101 = sphi 0, %s87
      %s105 = sphi 0, %s105
      %s107 = sphi 0, %s105
      %s108 = sphi 0, %s107
      %s122 = sphi 0, %s108
      %s126 = sphi 0, %s126
      %s128 = sphi 0, %s126
      %s129 = sphi 0, %s128
      %s143 = sphi 0, %s129
      %s147 = sphi 0, %s147
      %s149 = sphi 0, %s147
      %s150 = sphi 0, %s149
      %s164 = sphi 0, %s150
      %s168 = sphi 0, %s168
      %s170 = sphi 0, %s168
      %s171 = sphi 0, %s170
      %s185 = sphi 0, %s171
      %s189 = sphi 0, %s189
      %s191 = sphi 0, %s189
      %s192 = sphi 0, %s191
      %s206 = sphi 0, %s192
      %s210 = sphi 0, %s210
      %s212 = sphi 0, %s210
      %s213 = sphi 0, %s212
      %s227 = sphi 0, %s213
      %s231 = sphi 0, %s231
      %s233 = sphi 0, %s231
      %s234 = sphi 0, %s233
      %s248 = sphi 0, %s234
      %s252 = sphi 0, %s252
      %s254 = sphi 0, %s252
      %s255 = sphi 0, %s254
      %s269 = sphi 0, %s255
      %s273 = sphi 0, %s273
      %s275 = sphi 0, %s273
      %s276 = sphi 0, %s275
      %s290 = sphi 0, %s276
      %s296 = sphi 0, %s298
      %s299 = sphi 0, %s296
      %s300 = sphi 0, %s299
      %s316 = sphi 0, %s300
    $region4: #{tpu_custom_call.1} parent=1 // loop_header_branch
      %27 = sbr.rel (%p25) target = $region8
    $region5: #{tpu_custom_call.1} parent=1 // loop_body
      %s29 = ssub.s32 %s24, 1
      %s30 = ssub.s32 %s24, 2
      %s31 = sadd.s32 %s24, 1
      %s32 = ssub.s32 %s24, %s31
      %p33 = scmp.eq.s32.totalorder %s32, 0
      %s35 = sadd.s32 %s34, 1
      %s36 = scalar_select %p33, %s34, %s35
      %p39 = pneg %p33
      %p40 = scmp.eq.s32.totalorder %s24, 1
      %p41 = por %p39, %p40
      %p42 = scmp.ne.s32.totalorder %s34, %s37
      %p43 = scmp.eq.s32.totalorder %s24, 0
      %p44 = por %p42, %p43
      %p45 = scmp.ne.s32.totalorder %s34, %s37
      %p46 = scmp.eq.s32.totalorder %s29, 1
      %p47 = por %p45, %p46
      %p48 = scmp.ne.s32.totalorder %s37, %s38
      %p49 = scmp.eq.s32.totalorder %s29, 0
      %p50 = por %p48, %p49
      %p51 = scmp.ne.s32.totalorder %s37, %s38
      %p52 = scmp.eq.s32.totalorder %s30, 1
      %p53 = por %p51, %p52
      %p55 = scmp.ne.s32.totalorder %s38, %s54
      %p56 = scmp.eq.s32.totalorder %s30, 0
      %p57 = por %p55, %p56
      %s58 = ssub.s32 %s24, %s31
      %p59 = scmp.eq.s32.totalorder %s58, 0
      %s61 = sadd.s32 %s60, 1
      %s62 = scalar_select %p59, %s60, %s61
      %p65 = pneg %p59
      %p66 = scmp.eq.s32.totalorder %s24, 1
      %p67 = por %p65, %p66
      %p68 = scmp.ne.s32.totalorder %s60, %s63
      %p69 = scmp.eq.s32.totalorder %s24, 0
      %p70 = por %p68, %p69
      %p71 = scmp.ne.s32.totalorder %s60, %s63
      %p72 = scmp.eq.s32.totalorder %s29, 1
      %p73 = por %p71, %p72
      %p74 = scmp.ne.s32.totalorder %s63, %s64
      %p75 = scmp.eq.s32.totalorder %s29, 0
      %p76 = por %p74, %p75
      %p77 = scmp.ne.s32.totalorder %s63, %s64
      %p78 = scmp.eq.s32.totalorder %s30, 1
      %p79 = por %p77, %p78
      %p81 = scmp.ne.s32.totalorder %s64, %s80
      %p82 = scmp.eq.s32.totalorder %s30, 0
      %p83 = por %p81, %p82
      %s85 = sadd.s32 %s84, 1
      %p88 = scmp.eq.s32.totalorder %s24, 1
      %p89 = scmp.ne.s32.totalorder %s84, %s86
      %p90 = scmp.eq.s32.totalorder %s24, 0
      %p91 = por %p89, %p90
      %p92 = scmp.ne.s32.totalorder %s84, %s86
      %p93 = scmp.eq.s32.totalorder %s29, 1
      %p94 = por %p92, %p93
      %p95 = scmp.ne.s32.totalorder %s86, %s87
      %p96 = scmp.eq.s32.totalorder %s29, 0
      %p97 = por %p95, %p96
      %p98 = scmp.ne.s32.totalorder %s86, %s87
      %p99 = scmp.eq.s32.totalorder %s30, 1
      %p100 = por %p98, %p99
      %p102 = scmp.ne.s32.totalorder %s87, %s101
      %p103 = scmp.eq.s32.totalorder %s30, 0
      %p104 = por %p102, %p103
      %s106 = sadd.s32 %s105, 1
      %p109 = scmp.eq.s32.totalorder %s24, 1
      %p110 = scmp.ne.s32.totalorder %s105, %s107
      %p111 = scmp.eq.s32.totalorder %s24, 0
      %p112 = por %p110, %p111
      %p113 = scmp.ne.s32.totalorder %s105, %s107
      %p114 = scmp.eq.s32.totalorder %s29, 1
      %p115 = por %p113, %p114
      %p116 = scmp.ne.s32.totalorder %s107, %s108
      %p117 = scmp.eq.s32.totalorder %s29, 0
      %p118 = por %p116, %p117
      %p119 = scmp.ne.s32.totalorder %s107, %s108
      %p120 = scmp.eq.s32.totalorder %s30, 1
      %p121 = por %p119, %p120
      %p123 = scmp.ne.s32.totalorder %s108, %s122
      %p124 = scmp.eq.s32.totalorder %s30, 0
      %p125 = por %p123, %p124
      %s127 = sadd.s32 %s126, 1
      %p130 = scmp.eq.s32.totalorder %s24, 1
      %p131 = scmp.ne.s32.totalorder %s126, %s128
      %p132 = scmp.eq.s32.totalorder %s24, 0
      %p133 = por %p131, %p132
      %p134 = scmp.ne.s32.totalorder %s126, %s128
      %p135 = scmp.eq.s32.totalorder %s29, 1
      %p136 = por %p134, %p135
      %p137 = scmp.ne.s32.totalorder %s128, %s129
      %p138 = scmp.eq.s32.totalorder %s29, 0
      %p139 = por %p137, %p138
      %p140 = scmp.ne.s32.totalorder %s128, %s129
      %p141 = scmp.eq.s32.totalorder %s30, 1
      %p142 = por %p140, %p141
      %p144 = scmp.ne.s32.totalorder %s129, %s143
      %p145 = scmp.eq.s32.totalorder %s30, 0
      %p146 = por %p144, %p145
      %s148 = sadd.s32 %s147, 1
      %p151 = scmp.eq.s32.totalorder %s24, 1
      %p152 = scmp.ne.s32.totalorder %s147, %s149
      %p153 = scmp.eq.s32.totalorder %s24, 0
      %p154 = por %p152, %p153
      %p155 = scmp.ne.s32.totalorder %s147, %s149
      %p156 = scmp.eq.s32.totalorder %s29, 1
      %p157 = por %p155, %p156
      %p158 = scmp.ne.s32.totalorder %s149, %s150
      %p159 = scmp.eq.s32.totalorder %s29, 0
      %p160 = por %p158, %p159
      %p161 = scmp.ne.s32.totalorder %s149, %s150
      %p162 = scmp.eq.s32.totalorder %s30, 1
      %p163 = por %p161, %p162
      %p165 = scmp.ne.s32.totalorder %s150, %s164
      %p166 = scmp.eq.s32.totalorder %s30, 0
      %p167 = por %p165, %p166
      %s169 = sadd.s32 %s168, 1
      %p172 = scmp.eq.s32.totalorder %s24, 1
      %p173 = scmp.ne.s32.totalorder %s168, %s170
      %p174 = scmp.eq.s32.totalorder %s24, 0
      %p175 = por %p173, %p174
      %p176 = scmp.ne.s32.totalorder %s168, %s170
      %p177 = scmp.eq.s32.totalorder %s29, 1
      %p178 = por %p176, %p177
      %p179 = scmp.ne.s32.totalorder %s170, %s171
      %p180 = scmp.eq.s32.totalorder %s29, 0
      %p181 = por %p179, %p180
      %p182 = scmp.ne.s32.totalorder %s170, %s171
      %p183 = scmp.eq.s32.totalorder %s30, 1
      %p184 = por %p182, %p183
      %p186 = scmp.ne.s32.totalorder %s171, %s185
      %p187 = scmp.eq.s32.totalorder %s30, 0
      %p188 = por %p186, %p187
      %s190 = sadd.s32 %s189, 1
      %p193 = scmp.eq.s32.totalorder %s24, 1
      %p194 = scmp.ne.s32.totalorder %s189, %s191
      %p195 = scmp.eq.s32.totalorder %s24, 0
      %p196 = por %p194, %p195
      %p197 = scmp.ne.s32.totalorder %s189, %s191
      %p198 = scmp.eq.s32.totalorder %s29, 1
      %p199 = por %p197, %p198
      %p200 = scmp.ne.s32.totalorder %s191, %s192
      %p201 = scmp.eq.s32.totalorder %s29, 0
      %p202 = por %p200, %p201
      %p203 = scmp.ne.s32.totalorder %s191, %s192
      %p204 = scmp.eq.s32.totalorder %s30, 1
      %p205 = por %p203, %p204
      %p207 = scmp.ne.s32.totalorder %s192, %s206
      %p208 = scmp.eq.s32.totalorder %s30, 0
      %p209 = por %p207, %p208
      %s211 = sadd.s32 %s210, 1
      %p214 = scmp.eq.s32.totalorder %s24, 1
      %p215 = scmp.ne.s32.totalorder %s210, %s212
      %p216 = scmp.eq.s32.totalorder %s24, 0
      %p217 = por %p215, %p216
      %p218 = scmp.ne.s32.totalorder %s210, %s212
      %p219 = scmp.eq.s32.totalorder %s29, 1
      %p220 = por %p218, %p219
      %p221 = scmp.ne.s32.totalorder %s212, %s213
      %p222 = scmp.eq.s32.totalorder %s29, 0
      %p223 = por %p221, %p222
      %p224 = scmp.ne.s32.totalorder %s212, %s213
      %p225 = scmp.eq.s32.totalorder %s30, 1
      %p226 = por %p224, %p225
      %p228 = scmp.ne.s32.totalorder %s213, %s227
      %p229 = scmp.eq.s32.totalorder %s30, 0
      %p230 = por %p228, %p229
      %s232 = sadd.s32 %s231, 1
      %p235 = scmp.eq.s32.totalorder %s24, 1
      %p236 = scmp.ne.s32.totalorder %s231, %s233
      %p237 = scmp.eq.s32.totalorder %s24, 0
      %p238 = por %p236, %p237
      %p239 = scmp.ne.s32.totalorder %s231, %s233
      %p240 = scmp.eq.s32.totalorder %s29, 1
      %p241 = por %p239, %p240
      %p242 = scmp.ne.s32.totalorder %s233, %s234
      %p243 = scmp.eq.s32.totalorder %s29, 0
      %p244 = por %p242, %p243
      %p245 = scmp.ne.s32.totalorder %s233, %s234
      %p246 = scmp.eq.s32.totalorder %s30, 1
      %p247 = por %p245, %p246
      %p249 = scmp.ne.s32.totalorder %s234, %s248
      %p250 = scmp.eq.s32.totalorder %s30, 0
      %p251 = por %p249, %p250
      %s253 = sadd.s32 %s252, 1
      %p256 = scmp.eq.s32.totalorder %s24, 1
      %p257 = scmp.ne.s32.totalorder %s252, %s254
      %p258 = scmp.eq.s32.totalorder %s24, 0
      %p259 = por %p257, %p258
      %p260 = scmp.ne.s32.totalorder %s252, %s254
      %p261 = scmp.eq.s32.totalorder %s29, 1
      %p262 = por %p260, %p261
      %p263 = scmp.ne.s32.totalorder %s254, %s255
      %p264 = scmp.eq.s32.totalorder %s29, 0
      %p265 = por %p263, %p264
      %p266 = scmp.ne.s32.totalorder %s254, %s255
      %p267 = scmp.eq.s32.totalorder %s30, 1
      %p268 = por %p266, %p267
      %p270 = scmp.ne.s32.totalorder %s255, %s269
      %p271 = scmp.eq.s32.totalorder %s30, 0
      %p272 = por %p270, %p271
      %s274 = sadd.s32 %s273, 1
      %p277 = scmp.eq.s32.totalorder %s24, 1
      %p278 = scmp.ne.s32.totalorder %s273, %s275
      %p279 = scmp.eq.s32.totalorder %s24, 0
      %p280 = por %p278, %p279
      %p281 = scmp.ne.s32.totalorder %s273, %s275
      %p282 = scmp.eq.s32.totalorder %s29, 1
      %p283 = por %p281, %p282
      %p284 = scmp.ne.s32.totalorder %s275, %s276
      %p285 = scmp.eq.s32.totalorder %s29, 0
      %p286 = por %p284, %p285
      %p287 = scmp.ne.s32.totalorder %s275, %s276
      %p288 = scmp.eq.s32.totalorder %s30, 1
      %p289 = por %p287, %p288
      %p291 = scmp.ne.s32.totalorder %s276, %s290
      %p292 = scmp.eq.s32.totalorder %s30, 0
      %p293 = por %p291, %p292
      %s294 = ssub.s32 %s24, %s31
      %p295 = scmp.eq.s32.totalorder %s294, 0
      %s297 = sadd.s32 %s296, 1
      %s298 = scalar_select %p295, %s296, %s297
      %p301 = pneg %p295
      %p302 = scmp.eq.s32.totalorder %s24, 1
      %p303 = por %p301, %p302
      %p304 = scmp.ne.s32.totalorder %s296, %s299
      %p305 = scmp.eq.s32.totalorder %s24, 0
      %p306 = por %p304, %p305
      %p307 = scmp.ne.s32.totalorder %s296, %s299
      %p308 = scmp.eq.s32.totalorder %s29, 1
      %p309 = por %p307, %p308
      %p310 = scmp.ne.s32.totalorder %s299, %s300
      %p311 = scmp.eq.s32.totalorder %s29, 0
      %p312 = por %p310, %p311
      %p313 = scmp.ne.s32.totalorder %s299, %s300
      %p314 = scmp.eq.s32.totalorder %s30, 1
      %p315 = por %p313, %p314
      %p317 = scmp.ne.s32.totalorder %s300, %s316
      %p318 = scmp.eq.s32.totalorder %s30, 0
      %p319 = por %p317, %p318
      %p320 = scmp.le.s32.totalorder 1, %s24
      %p321 = scmp.lt.s32.totalorder %s24, 3
      %p322 = pnand %p320, %p321
      %p323 = pneg %p322
      // Predicated region
      $region9: #{tpu_custom_call.1} parent=5 // pred_check
        _
      $region10: #{tpu_custom_call.1} parent=5 // pred_check_branch
        %325 = sbr.rel (%p322) target = $region12
      $region11: #{tpu_custom_call.1} parent=5 // pred_region
        %s326 = ssub.s32 %s24, 1
        // Predicated region
        $region13: #{tpu_custom_call.1} parent=11 // pred_check
          %p327 = pneg %p97
        $region14: #{tpu_custom_call.1} parent=11 // pred_check_branch
          %329 = sbr.rel (%p327) target = $region16
        $region15: #{tpu_custom_call.1} parent=11 // pred_region
          %s331 = ssub.s32 2304, 2304
          %332 = vsyncadd [#allocation4], %s331
          %s333 = sshll.u32 [#allocation3], 4
          %s334 = int_to_ptr.vmem [resolvable:$true] %s333
          %339 = dma.hbm_to_vmem [thread:$0]  %s2, 2304, %s334, [#allocation4], 128, 128, 8
        $region16: #{tpu_custom_call.1} parent=11 // pred_fallthru
          _
        // Predicated region
        $region17: #{tpu_custom_call.1} parent=11 // pred_check
          %p340 = pneg %p118
        $region18: #{tpu_custom_call.1} parent=11 // pred_check_branch
          %342 = sbr.rel (%p340) target = $region20
        $region19: #{tpu_custom_call.1} parent=11 // pred_region
          _
        $region20: #{tpu_custom_call.1} parent=11 // pred_fallthru
          _
        // Predicated region
        $region21: #{tpu_custom_call.1} parent=11 // pred_check
          %p343 = pneg %p139
        $region22: #{tpu_custom_call.1} parent=11 // pred_check_branch
          %345 = sbr.rel (%p343) target = $region24
        $region23: #{tpu_custom_call.1} parent=11 // pred_region
          _
        $region24: #{tpu_custom_call.1} parent=11 // pred_fallthru
          _
        // Predicated region
        $region25: #{tpu_custom_call.1} parent=11 // pred_check
          %p346 = pneg %p160
        $region26: #{tpu_custom_call.1} parent=11 // pred_check_branch
          %348 = sbr.rel (%p346) target = $region28
        $region27: #{tpu_custom_call.1} parent=11 // pred_region
          _
        $region28: #{tpu_custom_call.1} parent=11 // pred_fallthru
          _
        // Predicated region
        $region29: #{tpu_custom_call.1} parent=11 // pred_check
          %p349 = pneg %p181
        $region30: #{tpu_custom_call.1} parent=11 // pred_check_branch
          %351 = sbr.rel (%p349) target = $region32
        $region31: #{tpu_custom_call.1} parent=11 // pred_region
          _
        $region32: #{tpu_custom_call.1} parent=11 // pred_fallthru
          _
        // Predicated region
        $region33: #{tpu_custom_call.1} parent=11 // pred_check
          %p352 = pneg %p202
        $region34: #{tpu_custom_call.1} parent=11 // pred_check_branch
          %354 = sbr.rel (%p352) target = $region36
        $region35: #{tpu_custom_call.1} parent=11 // pred_region
          _
        $region36: #{tpu_custom_call.1} parent=11 // pred_fallthru
          _
        // Predicated region
        $region37: #{tpu_custom_call.1} parent=11 // pred_check
          %p355 = pneg %p223
        $region38: #{tpu_custom_call.1} parent=11 // pred_check_branch
          %357 = sbr.rel (%p355) target = $region40
        $region39: #{tpu_custom_call.1} parent=11 // pred_region
          _
        $region40: #{tpu_custom_call.1} parent=11 // pred_fallthru
          _
        // Predicated region
        $region41: #{tpu_custom_call.1} parent=11 // pred_check
          %p358 = pneg %p244
        $region42: #{tpu_custom_call.1} parent=11 // pred_check_branch
          %360 = sbr.rel (%p358) target = $region44
        $region43: #{tpu_custom_call.1} parent=11 // pred_region
          _
        $region44: #{tpu_custom_call.1} parent=11 // pred_fallthru
          _
        // Predicated region
        $region45: #{tpu_custom_call.1} parent=11 // pred_check
          %p361 = pneg %p265
        $region46: #{tpu_custom_call.1} parent=11 // pred_check_branch
          %363 = sbr.rel (%p361) target = $region48
        $region47: #{tpu_custom_call.1} parent=11 // pred_region
          _
        $region48: #{tpu_custom_call.1} parent=11 // pred_fallthru
          _
        // Predicated region
        $region49: #{tpu_custom_call.1} parent=11 // pred_check
          %p364 = pneg %p286
        $region50: #{tpu_custom_call.1} parent=11 // pred_check_branch
          %366 = sbr.rel (%p364) target = $region52
        $region51: #{tpu_custom_call.1} parent=11 // pred_region
          _
        $region52: #{tpu_custom_call.1} parent=11 // pred_fallthru
          _
      $region12: #{tpu_custom_call.1} parent=5 // pred_fallthru
        _
      %p367 = scmp.lt.s32.totalorder %s24, 2
      // Predicated region
      $region53: #{tpu_custom_call.1} parent=5 // pred_check
        %p368 = pneg %p367
      $region54: #{tpu_custom_call.1} parent=5 // pred_check_branch
        %370 = sbr.rel (%p368) target = $region56
      $region55: #{tpu_custom_call.1} parent=5 // pred_region
        // Predicated region
        $region57: #{tpu_custom_call.1} parent=55 // pred_check
          %p371 = pneg %p44
        $region58: #{tpu_custom_call.1} parent=55 // pred_check_branch
          %373 = sbr.rel (%p371) target = $region60
        $region59: #{tpu_custom_call.1} parent=55 // pred_region
          %s374 = smul.u32 16, %s24
          %p375 = scmp.lt.s32.totalorder %s374, 31
          %s376 = scalar_select %p375, %s374, 31
          %s377 = smul.addr %s376, 8
          %s378 = scalar_lea.vmem %s0, %s377
          %s379 = smul.u32 16, %s24
        $region60: #{tpu_custom_call.1} parent=55 // pred_fallthru
          _
        // Predicated region
        $region61: #{tpu_custom_call.1} parent=55 // pred_check
          %p380 = pneg %p70
        $region62: #{tpu_custom_call.1} parent=55 // pred_check_branch
          %382 = sbr.rel (%p380) target = $region64
        $region63: #{tpu_custom_call.1} parent=55 // pred_region
          %p383 = scmp.lt.s32.totalorder %s24, 1
          %s384 = scalar_select %p383, %s24, 1
          %s385 = scalar_lea.vmem %s1, %s384
        $region64: #{tpu_custom_call.1} parent=55 // pred_fallthru
          _
      $region56: #{tpu_custom_call.1} parent=5 // pred_fallthru
        _
      %p386 = scmp.le.s32.totalorder 1, %s24
      %p387 = scmp.lt.s32.totalorder %s24, 3
      %p388 = pnand %p386, %p387
      %p389 = pneg %p388
      // Predicated region
      $region65: #{tpu_custom_call.1} parent=5 // pred_check
        _
      $region66: #{tpu_custom_call.1} parent=5 // pred_check_branch
        %391 = sbr.rel (%p388) target = $region68
      $region67: #{tpu_custom_call.1} parent=5 // pred_region
        %s392 = ssub.s32 %s24, 1
        // Predicated region
        $region69: #{tpu_custom_call.1} parent=67 // pred_check
          %p393 = pneg %p97
        $region70: #{tpu_custom_call.1} parent=67 // pred_check_branch
          %395 = sbr.rel (%p393) target = $region72
        $region71: #{tpu_custom_call.1} parent=67 // pred_region
          %396 = dma.done [#allocation4], 2304
        $region72: #{tpu_custom_call.1} parent=67 // pred_fallthru
          _
        %s397 = smul.u32 16, %s29
        %p398 = scmp.lt.s32.totalorder %s397, 31
        %s399 = scalar_select %p398, %s397, 31
        %s400 = smul.addr %s399, 8
        %s401 = scalar_lea.vmem %s0, %s400
        %p402 = pneg %p50
        %p403 = pneg %p47
        %p404 = scmp.lt.s32.totalorder %s29, 1
        %s405 = scalar_select %p404, %s29, 1
        %s406 = scalar_lea.vmem %s1, %s405
        %p407 = pneg %p76
        %p408 = pneg %p73
        %p409 = pneg %p97
        %p410 = pneg %p94
        %p411 = pneg %p118
        %p412 = pneg %p115
        %p413 = pneg %p139
        %p414 = pneg %p136
        %p415 = pneg %p160
        %p416 = pneg %p157
        %p417 = pneg %p181
        %p418 = pneg %p178
        %p419 = pneg %p202
        %p420 = pneg %p199
        %p421 = pneg %p223
        %p422 = pneg %p220
        %p423 = pneg %p244
        %p424 = pneg %p241
        %p425 = pneg %p265
        %p426 = pneg %p262
        %p427 = pneg %p286
        %p428 = pneg %p283
        %p429 = pneg %p312
        %p430 = pneg %p309
        %s431 = sand.u32 %s299, 1
        %s432 = scalar_lea.sflag [#allocation5], %s431
        %s433 = sand.u32 %s299, 1
        %s434 = scalar_lea.vmem [#allocation6], %s433
        %s435 = smul.u32 16, %s29
        %p436 = scmp.lt.s32.totalorder %s435, 31
        %s437 = scalar_select %p436, %s435, 31
        %s438 = smul.addr %s437, 8
        %s439 = scalar_lea.vmem %s0, %s438
        %s440 = smul.u32 16, %s29
        %p441 = scmp.lt.s32.totalorder %s29, 1
        %s442 = scalar_select %p441, %s29, 1
        %s443 = scalar_lea.vmem %s1, %s442
        %v444 = vld [vmem:[%s439] sm:$0xff]
        %v445 = vld [vmem:[%s439 + $0x8] sm:$0xff]
        %v446 = vld [vmem:[%s439 + $0x10] sm:$0xff]
        %v447 = vld [vmem:[%s439 + $0x18] sm:$0xff]
        %v448 = vld [vmem:[%s439 + $0x20] sm:$0xff]
        %v449 = vld [vmem:[%s439 + $0x28] sm:$0xff]
        %v450 = vld [vmem:[%s439 + $0x30] sm:$0xff]
        %v451 = vld [vmem:[%s439 + $0x38] sm:$0xff]
        %v452 = vld [vmem:[%s439 + $0x40] sm:$0xff]
        %v453 = vld [vmem:[%s439 + $0x48] sm:$0xff]
        %v454 = vld [vmem:[%s439 + $0x50] sm:$0xff]
        %v455 = vld [vmem:[%s439 + $0x58] sm:$0xff]
        %v456 = vld [vmem:[%s439 + $0x60] sm:$0xff]
        %v457 = vld [vmem:[%s439 + $0x68] sm:$0xff]
        %v458 = vld [vmem:[%s439 + $0x70] sm:$0xff]
        %v459 = vld [vmem:[%s439 + $0x78] sm:$0xff]
        %v460 = vlaneseq
        %v461 = vshrl.u32 %v460, 7
        %v462 = vadd.s32 %v461, 8
        %v463 = vadd.s32 %v461, 16
        %v464 = vadd.s32 %v461, 24
        %v465 = vadd.s32 %v461, 32
        %v466 = vadd.s32 %v461, 40
        %v467 = vadd.s32 %v461, 48
        %v468 = vadd.s32 %v461, 56
        %v469 = vadd.s32 %v461, 64
        %v470 = vadd.s32 %v461, 72
        %v471 = vadd.s32 %v461, 80
        %v472 = vadd.s32 %v461, 88
        %v473 = vadd.s32 %v461, 96
        %v474 = vadd.s32 %v461, 104
        %v475 = vadd.s32 %v461, 112
        %v476 = vadd.s32 %v461, 120
        %vm477 = vcmp.lt.s32.totalorder %v461, 0
        %v478 = vsub.s32 0, %v461
        %v479 = vsel %vm477, %v478, %v461
        %v480 = vshrl.u32 %v479, 6
        %v481 = vand.u32 %v479, 63
        %v482 = vsub.s32 0, %v481
        %v483 = vsel %vm477, %v482, %v481
        %vm484 = vcmp.lt.s32.totalorder %v462, 0
        %v485 = vsub.s32 0, %v462
        %v486 = vsel %vm484, %v485, %v462
        %v487 = vshrl.u32 %v486, 6
        %v488 = vand.u32 %v486, 63
        %v489 = vsub.s32 0, %v488
        %v490 = vsel %vm484, %v489, %v488
        %vm491 = vcmp.lt.s32.totalorder %v463, 0
        %v492 = vsub.s32 0, %v463
        %v493 = vsel %vm491, %v492, %v463
        %v494 = vshrl.u32 %v493, 6
        %v495 = vand.u32 %v493, 63
        %v496 = vsub.s32 0, %v495
        %v497 = vsel %vm491, %v496, %v495
        %vm498 = vcmp.lt.s32.totalorder %v464, 0
        %v499 = vsub.s32 0, %v464
        %v500 = vsel %vm498, %v499, %v464
        %v501 = vshrl.u32 %v500, 6
        %v502 = vand.u32 %v500, 63
        %v503 = vsub.s32 0, %v502
        %v504 = vsel %vm498, %v503, %v502
        %vm505 = vcmp.lt.s32.totalorder %v465, 0
        %v506 = vsub.s32 0, %v465
        %v507 = vsel %vm505, %v506, %v465
        %v508 = vshrl.u32 %v507, 6
        %v509 = vand.u32 %v507, 63
        %v510 = vsub.s32 0, %v509
        %v511 = vsel %vm505, %v510, %v509
        %vm512 = vcmp.lt.s32.totalorder %v466, 0
        %v513 = vsub.s32 0, %v466
        %v514 = vsel %vm512, %v513, %v466
        %v515 = vshrl.u32 %v514, 6
        %v516 = vand.u32 %v514, 63
        %v517 = vsub.s32 0, %v516
        %v518 = vsel %vm512, %v517, %v516
        %vm519 = vcmp.lt.s32.totalorder %v467, 0
        %v520 = vsub.s32 0, %v467
        %v521 = vsel %vm519, %v520, %v467
        %v522 = vshrl.u32 %v521, 6
        %v523 = vand.u32 %v521, 63
        %v524 = vsub.s32 0, %v523
        %v525 = vsel %vm519, %v524, %v523
        %vm526 = vcmp.lt.s32.totalorder %v468, 0
        %v527 = vsub.s32 0, %v468
        %v528 = vsel %vm526, %v527, %v468
        %v529 = vshrl.u32 %v528, 6
        %v530 = vand.u32 %v528, 63
        %v531 = vsub.s32 0, %v530
        %v532 = vsel %vm526, %v531, %v530
        %vm533 = vcmp.lt.s32.totalorder %v469, 0
        %v534 = vsub.s32 0, %v469
        %v535 = vsel %vm533, %v534, %v469
        %v536 = vshrl.u32 %v535, 6
        %v537 = vand.u32 %v535, 63
        %v538 = vsub.s32 0, %v537
        %v539 = vsel %vm533, %v538, %v537
        %vm540 = vcmp.lt.s32.totalorder %v470, 0
        %v541 = vsub.s32 0, %v470
        %v542 = vsel %vm540, %v541, %v470
        %v543 = vshrl.u32 %v542, 6
        %v544 = vand.u32 %v542, 63
        %v545 = vsub.s32 0, %v544
        %v546 = vsel %vm540, %v545, %v544
        %vm547 = vcmp.lt.s32.totalorder %v471, 0
        %v548 = vsub.s32 0, %v471
        %v549 = vsel %vm547, %v548, %v471
        %v550 = vshrl.u32 %v549, 6
        %v551 = vand.u32 %v549, 63
        %v552 = vsub.s32 0, %v551
        %v553 = vsel %vm547, %v552, %v551
        %vm554 = vcmp.lt.s32.totalorder %v472, 0
        %v555 = vsub.s32 0, %v472
        %v556 = vsel %vm554, %v555, %v472
        %v557 = vshrl.u32 %v556, 6
        %v558 = vand.u32 %v556, 63
        %v559 = vsub.s32 0, %v558
        %v560 = vsel %vm554, %v559, %v558
        %vm561 = vcmp.lt.s32.totalorder %v473, 0
        %v562 = vsub.s32 0, %v473
        %v563 = vsel %vm561, %v562, %v473
        %v564 = vshrl.u32 %v563, 6
        %v565 = vand.u32 %v563, 63
        %v566 = vsub.s32 0, %v565
        %v567 = vsel %vm561, %v566, %v565
        %vm568 = vcmp.lt.s32.totalorder %v474, 0
        %v569 = vsub.s32 0, %v474
        %v570 = vsel %vm568, %v569, %v474
        %v571 = vshrl.u32 %v570, 6
        %v572 = vand.u32 %v570, 63
        %v573 = vsub.s32 0, %v572
        %v574 = vsel %vm568, %v573, %v572
        %vm575 = vcmp.lt.s32.totalorder %v475, 0
        %v576 = vsub.s32 0, %v475
        %v577 = vsel %vm575, %v576, %v475
        %v578 = vshrl.u32 %v577, 6
        %v579 = vand.u32 %v577, 63
        %v580 = vsub.s32 0, %v579
        %v581 = vsel %vm575, %v580, %v579
        %vm582 = vcmp.lt.s32.totalorder %v476, 0
        %v583 = vsub.s32 0, %v476
        %v584 = vsel %vm582, %v583, %v476
        %v585 = vshrl.u32 %v584, 6
        %v586 = vand.u32 %v584, 63
        %v587 = vsub.s32 0, %v586
        %v588 = vsel %vm582, %v587, %v586
        %vm589 = vcmp.ne.s32.totalorder %v483, 0
        %vm590 = vcmp.ne.s32.totalorder %v490, 0
        %vm591 = vcmp.ne.s32.totalorder %v497, 0
        %vm592 = vcmp.ne.s32.totalorder %v504, 0
        %vm593 = vcmp.ne.s32.totalorder %v511, 0
        %vm594 = vcmp.ne.s32.totalorder %v518, 0
        %vm595 = vcmp.ne.s32.totalorder %v525, 0
        %vm596 = vcmp.ne.s32.totalorder %v532, 0
        %vm597 = vcmp.ne.s32.totalorder %v539, 0
        %vm598 = vcmp.ne.s32.totalorder %v546, 0
        %vm599 = vcmp.ne.s32.totalorder %v553, 0
        %vm600 = vcmp.ne.s32.totalorder %v560, 0
        %vm601 = vcmp.ne.s32.totalorder %v567, 0
        %vm602 = vcmp.ne.s32.totalorder %v574, 0
        %vm603 = vcmp.ne.s32.totalorder %v581, 0
        %vm604 = vcmp.ne.s32.totalorder %v588, 0
        %vm605 = vcmp.lt.s32.totalorder %v483, 0
        %vm606 = vcmp.lt.s32.totalorder %v490, 0
        %vm607 = vcmp.lt.s32.totalorder %v497, 0
        %vm608 = vcmp.lt.s32.totalorder %v504, 0
        %vm609 = vcmp.lt.s32.totalorder %v511, 0
        %vm610 = vcmp.lt.s32.totalorder %v518, 0
        %vm611 = vcmp.lt.s32.totalorder %v525, 0
        %vm612 = vcmp.lt.s32.totalorder %v532, 0
        %vm613 = vcmp.lt.s32.totalorder %v539, 0
        %vm614 = vcmp.lt.s32.totalorder %v546, 0
        %vm615 = vcmp.lt.s32.totalorder %v553, 0
        %vm616 = vcmp.lt.s32.totalorder %v560, 0
        %vm617 = vcmp.lt.s32.totalorder %v567, 0
        %vm618 = vcmp.lt.s32.totalorder %v574, 0
        %vm619 = vcmp.lt.s32.totalorder %v581, 0
        %vm620 = vcmp.lt.s32.totalorder %v588, 0
        %vm621 = vmand %vm605, %vm589
        %vm622 = vmand %vm606, %vm590
        %vm623 = vmand %vm607, %vm591
        %vm624 = vmand %vm608, %vm592
        %vm625 = vmand %vm609, %vm593
        %vm626 = vmand %vm610, %vm594
        %vm627 = vmand %vm611, %vm595
        %vm628 = vmand %vm612, %vm596
        %vm629 = vmand %vm613, %vm597
        %vm630 = vmand %vm614, %vm598
        %vm631 = vmand %vm615, %vm599
        %vm632 = vmand %vm616, %vm600
        %vm633 = vmand %vm617, %vm601
        %vm634 = vmand %vm618, %vm602
        %vm635 = vmand %vm619, %vm603
        %vm636 = vmand %vm620, %vm604
        %v637 = vadd.s32 %v483, 64
        %v638 = vadd.s32 %v490, 64
        %v639 = vadd.s32 %v497, 64
        %v640 = vadd.s32 %v504, 64
        %v641 = vadd.s32 %v511, 64
        %v642 = vadd.s32 %v518, 64
        %v643 = vadd.s32 %v525, 64
        %v644 = vadd.s32 %v532, 64
        %v645 = vadd.s32 %v539, 64
        %v646 = vadd.s32 %v546, 64
        %v647 = vadd.s32 %v553, 64
        %v648 = vadd.s32 %v560, 64
        %v649 = vadd.s32 %v567, 64
        %v650 = vadd.s32 %v574, 64
        %v651 = vadd.s32 %v581, 64
        %v652 = vadd.s32 %v588, 64
        %v653 = vsel %vm621, %v637, %v483
        %v654 = vsel %vm622, %v638, %v490
        %v655 = vsel %vm623, %v639, %v497
        %v656 = vsel %vm624, %v640, %v504
        %v657 = vsel %vm625, %v641, %v511
        %v658 = vsel %vm626, %v642, %v518
        %v659 = vsel %vm627, %v643, %v525
        %v660 = vsel %vm628, %v644, %v532
        %v661 = vsel %vm629, %v645, %v539
        %v662 = vsel %vm630, %v646, %v546
        %v663 = vsel %vm631, %v647, %v553
        %v664 = vsel %vm632, %v648, %v560
        %v665 = vsel %vm633, %v649, %v567
        %v666 = vsel %vm634, %v650, %v574
        %v667 = vsel %vm635, %v651, %v581
        %v668 = vsel %vm636, %v652, %v588
        %vm669 = vcmp.eq.s32.totalorder %v653, 0
        %vm670 = vcmp.eq.s32.totalorder %v654, 0
        %vm671 = vcmp.eq.s32.totalorder %v655, 0
        %vm672 = vcmp.eq.s32.totalorder %v656, 0
        %vm673 = vcmp.eq.s32.totalorder %v657, 0
        %vm674 = vcmp.eq.s32.totalorder %v658, 0
        %vm675 = vcmp.eq.s32.totalorder %v659, 0
        %vm676 = vcmp.eq.s32.totalorder %v660, 0
        %vm677 = vcmp.eq.s32.totalorder %v661, 0
        %vm678 = vcmp.eq.s32.totalorder %v662, 0
        %vm679 = vcmp.eq.s32.totalorder %v663, 0
        %vm680 = vcmp.eq.s32.totalorder %v664, 0
        %vm681 = vcmp.eq.s32.totalorder %v665, 0
        %vm682 = vcmp.eq.s32.totalorder %v666, 0
        %vm683 = vcmp.eq.s32.totalorder %v667, 0
        %vm684 = vcmp.eq.s32.totalorder %v668, 0
        %vm685 = vcmp.eq.s32.totalorder %v653, 63
        %vm686 = vcmp.eq.s32.totalorder %v654, 63
        %vm687 = vcmp.eq.s32.totalorder %v655, 63
        %vm688 = vcmp.eq.s32.totalorder %v656, 63
        %vm689 = vcmp.eq.s32.totalorder %v657, 63
        %vm690 = vcmp.eq.s32.totalorder %v658, 63
        %vm691 = vcmp.eq.s32.totalorder %v659, 63
        %vm692 = vcmp.eq.s32.totalorder %v660, 63
        %vm693 = vcmp.eq.s32.totalorder %v661, 63
        %vm694 = vcmp.eq.s32.totalorder %v662, 63
        %vm695 = vcmp.eq.s32.totalorder %v663, 63
        %vm696 = vcmp.eq.s32.totalorder %v664, 63
        %vm697 = vcmp.eq.s32.totalorder %v665, 63
        %vm698 = vcmp.eq.s32.totalorder %v666, 63
        %vm699 = vcmp.eq.s32.totalorder %v667, 63
        %vm700 = vcmp.eq.s32.totalorder %v668, 63
        %v701 = vrot.slane %v444, 7
        %v702 = vrot.slane %v445, 7
        %v703 = vrot.slane %v446, 7
        %v704 = vrot.slane %v447, 7
        %v705 = vrot.slane %v448, 7
        %v706 = vrot.slane %v449, 7
        %v707 = vrot.slane %v450, 7
        %v708 = vrot.slane %v451, 7
        %v709 = vrot.slane %v452, 7
        %v710 = vrot.slane %v453, 7
        %v711 = vrot.slane %v454, 7
        %v712 = vrot.slane %v455, 7
        %v713 = vrot.slane %v456, 7
        %v714 = vrot.slane %v457, 7
        %v715 = vrot.slane %v458, 7
        %v716 = vrot.slane %v459, 7
        %vm717 = vcmp.lt.s32.totalorder %v461, 1
        %v718 = vsel %vm717, %v715, %v716
        %v719 = vsel %vm717, %v714, %v715
        %v720 = vsel %vm717, %v713, %v714
        %v721 = vsel %vm717, %v712, %v713
        %v722 = vsel %vm717, %v711, %v712
        %v723 = vsel %vm717, %v710, %v711
        %v724 = vsel %vm717, %v709, %v710
        %v725 = vsel %vm717, %v708, %v709
        %v726 = vsel %vm717, %v707, %v708
        %v727 = vsel %vm717, %v706, %v707
        %v728 = vsel %vm717, %v705, %v706
        %v729 = vsel %vm717, %v704, %v705
        %v730 = vsel %vm717, %v703, %v704
        %v731 = vsel %vm717, %v702, %v703
        %v732 = vsel %vm717, %v701, %v702
        %v733 = vsel %vm717, %v716, %v701
        %v734 = vsel %vm669, 1, 0
        %v735 = vsel %vm670, 1, 0
        %v736 = vsel %vm671, 1, 0
        %v737 = vsel %vm672, 1, 0
        %v738 = vsel %vm673, 1, 0
        %v739 = vsel %vm674, 1, 0
        %v740 = vsel %vm675, 1, 0
        %v741 = vsel %vm676, 1, 0
        %v742 = vsel %vm677, 1, 0
        %v743 = vsel %vm678, 1, 0
        %v744 = vsel %vm679, 1, 0
        %v745 = vsel %vm680, 1, 0
        %v746 = vsel %vm681, 1, 0
        %v747 = vsel %vm682, 1, 0
        %v748 = vsel %vm683, 1, 0
        %v749 = vsel %vm684, 1, 0
        %vm750 = vcmp.eq.s32.totalorder %v734, 1
        %vm751 = vcmp.eq.s32.totalorder %v735, 1
        %vm752 = vcmp.eq.s32.totalorder %v736, 1
        %vm753 = vcmp.eq.s32.totalorder %v737, 1
        %vm754 = vcmp.eq.s32.totalorder %v738, 1
        %vm755 = vcmp.eq.s32.totalorder %v739, 1
        %vm756 = vcmp.eq.s32.totalorder %v740, 1
        %vm757 = vcmp.eq.s32.totalorder %v741, 1
        %vm758 = vcmp.eq.s32.totalorder %v742, 1
        %vm759 = vcmp.eq.s32.totalorder %v743, 1
        %vm760 = vcmp.eq.s32.totalorder %v744, 1
        %vm761 = vcmp.eq.s32.totalorder %v745, 1
        %vm762 = vcmp.eq.s32.totalorder %v746, 1
        %vm763 = vcmp.eq.s32.totalorder %v747, 1
        %vm764 = vcmp.eq.s32.totalorder %v748, 1
        %vm765 = vcmp.eq.s32.totalorder %v749, 1
        %v766 = vsel %vm750, 0.0, %v733
        %v767 = vsel %vm751, 0.0, %v732
        %v768 = vsel %vm752, 0.0, %v731
        %v769 = vsel %vm753, 0.0, %v730
        %v770 = vsel %vm754, 0.0, %v729
        %v771 = vsel %vm755, 0.0, %v728
        %v772 = vsel %vm756, 0.0, %v727
        %v773 = vsel %vm757, 0.0, %v726
        %v774 = vsel %vm758, 0.0, %v725
        %v775 = vsel %vm759, 0.0, %v724
        %v776 = vsel %vm760, 0.0, %v723
        %v777 = vsel %vm761, 0.0, %v722
        %v778 = vsel %vm762, 0.0, %v721
        %v779 = vsel %vm763, 0.0, %v720
        %v780 = vsel %vm764, 0.0, %v719
        %v781 = vsel %vm765, 0.0, %v718
        %v782 = vrot.slane %v444, 1
        %v783 = vrot.slane %v445, 1
        %v784 = vrot.slane %v446, 1
        %v785 = vrot.slane %v447, 1
        %v786 = vrot.slane %v448, 1
        %v787 = vrot.slane %v449, 1
        %v788 = vrot.slane %v450, 1
        %v789 = vrot.slane %v451, 1
        %v790 = vrot.slane %v452, 1
        %v791 = vrot.slane %v453, 1
        %v792 = vrot.slane %v454, 1
        %v793 = vrot.slane %v455, 1
        %v794 = vrot.slane %v456, 1
        %v795 = vrot.slane %v457, 1
        %v796 = vrot.slane %v458, 1
        %v797 = vrot.slane %v459, 1
        %vm798 = vcmp.lt.s32.totalorder %v461, 7
        %v799 = vsel %vm798, %v796, %v797
        %v800 = vsel %vm798, %v795, %v796
        %v801 = vsel %vm798, %v794, %v795
        %v802 = vsel %vm798, %v793, %v794
        %v803 = vsel %vm798, %v792, %v793
        %v804 = vsel %vm798, %v791, %v792
        %v805 = vsel %vm798, %v790, %v791
        %v806 = vsel %vm798, %v789, %v790
        %v807 = vsel %vm798, %v788, %v789
        %v808 = vsel %vm798, %v787, %v788
        %v809 = vsel %vm798, %v786, %v787
        %v810 = vsel %vm798, %v785, %v786
        %v811 = vsel %vm798, %v784, %v785
        %v812 = vsel %vm798, %v783, %v784
        %v813 = vsel %vm798, %v782, %v783
        %v814 = vsel %vm798, %v797, %v782
        %v815 = vsel %vm685, 1, 0
        %v816 = vsel %vm686, 1, 0
        %v817 = vsel %vm687, 1, 0
        %v818 = vsel %vm688, 1, 0
        %v819 = vsel %vm689, 1, 0
        %v820 = vsel %vm690, 1, 0
        %v821 = vsel %vm691, 1, 0
        %v822 = vsel %vm692, 1, 0
        %v823 = vsel %vm693, 1, 0
        %v824 = vsel %vm694, 1, 0
        %v825 = vsel %vm695, 1, 0
        %v826 = vsel %vm696, 1, 0
        %v827 = vsel %vm697, 1, 0
        %v828 = vsel %vm698, 1, 0
        %v829 = vsel %vm699, 1, 0
        %v830 = vsel %vm700, 1, 0
        %vm831 = vcmp.eq.s32.totalorder %v815, 1
        %vm832 = vcmp.eq.s32.totalorder %v816, 1
        %vm833 = vcmp.eq.s32.totalorder %v817, 1
        %vm834 = vcmp.eq.s32.totalorder %v818, 1
        %vm835 = vcmp.eq.s32.totalorder %v819, 1
        %vm836 = vcmp.eq.s32.totalorder %v820, 1
        %vm837 = vcmp.eq.s32.totalorder %v821, 1
        %vm838 = vcmp.eq.s32.totalorder %v822, 1
        %vm839 = vcmp.eq.s32.totalorder %v823, 1
        %vm840 = vcmp.eq.s32.totalorder %v824, 1
        %vm841 = vcmp.eq.s32.totalorder %v825, 1
        %vm842 = vcmp.eq.s32.totalorder %v826, 1
        %vm843 = vcmp.eq.s32.totalorder %v827, 1
        %vm844 = vcmp.eq.s32.totalorder %v828, 1
        %vm845 = vcmp.eq.s32.totalorder %v829, 1
        %vm846 = vcmp.eq.s32.totalorder %v830, 1
        %v847 = vsel %vm831, 0.0, %v813
        %v848 = vsel %vm832, 0.0, %v812
        %v849 = vsel %vm833, 0.0, %v811
        %v850 = vsel %vm834, 0.0, %v810
        %v851 = vsel %vm835, 0.0, %v809
        %v852 = vsel %vm836, 0.0, %v808
        %v853 = vsel %vm837, 0.0, %v807
        %v854 = vsel %vm838, 0.0, %v806
        %v855 = vsel %vm839, 0.0, %v805
        %v856 = vsel %vm840, 0.0, %v804
        %v857 = vsel %vm841, 0.0, %v803
        %v858 = vsel %vm842, 0.0, %v802
        %v859 = vsel %vm843, 0.0, %v801
        %v860 = vsel %vm844, 0.0, %v800
        %v861 = vsel %vm845, 0.0, %v799
        %v862 = vsel %vm846, 0.0, %v814
        %v863 = vld [vmem:[#allocation3] sm:$0xff]
        %v864 = vld [vmem:[#allocation3 + $0x8] sm:$0xff]
        %v865 = vld [vmem:[#allocation3 + $0x10] sm:$0xff]
        %v866 = vld [vmem:[#allocation3 + $0x18] sm:$0xff]
        %v867 = vld [vmem:[#allocation3 + $0x20] sm:$0xff]
        %v868 = vld [vmem:[#allocation3 + $0x28] sm:$0xff]
        %s869 = scalar_lea.vmem [#allocation3], 48
        %v870 = vld [vmem:[%s869] sm:$0xff]
        %v871 = vld [vmem:[%s869 + $0x8] sm:$0xff]
        %v872 = vld [vmem:[%s869 + $0x10] sm:$0xff]
        %v873 = vld [vmem:[%s869 + $0x18] sm:$0xff]
        %v874 = vld [vmem:[%s869 + $0x20] sm:$0xff]
        %v875 = vld [vmem:[%s869 + $0x28] sm:$0xff]
        %vm876 = vcmask 392192
        %v878 = vsel %vm876, %v444, 0
        %v881 = vsel %vm876, %v445, 0
        %v884 = vsel %vm876, %v446, 0
        %v887 = vsel %vm876, %v447, 0
        %v890 = vsel %vm876, %v448, 0
        %v893 = vsel %vm876, %v449, 0
        %v896 = vsel %vm876, %v450, 0
        %v899 = vsel %vm876, %v451, 0
        %v902 = vsel %vm876, %v452, 0
        %v905 = vsel %vm876, %v453, 0
        %v908 = vsel %vm876, %v454, 0
        %v911 = vsel %vm876, %v455, 0
        %v914 = vsel %vm876, %v456, 0
        %v917 = vsel %vm876, %v457, 0
        %v920 = vsel %vm876, %v458, 0
        %v923 = vsel %vm876, %v459, 0
        %925 = vmatprep.subr.mxu0 0.0
        %926 = vmatpush1.msra.mxu0 %v870
        %927 = vmatprep.subr.mxu0 0.0
        %928 = vmatpush1.msra.mxu0 %v871
        %929 = vmatprep.subr.mxu0 0.0
        %930 = vmatpush1.msra.mxu0 %v872
        %931 = vmatprep.subr.mxu0 0.0
        %932 = vmatpush1.msra.mxu0 %v873
        %933 = vmatprep.subr.mxu0 0.0
        %934 = vmatpush1.msra.mxu0 %v874
        %935 = vmatprep.subr.mxu0 0.0
        %936 = vmatpush1.msra.mxu0 %v875
        %937 = vmatprep.subr.mxu0 0.0
        %938 = vmatpush1.msra.mxu0 0.0
        %939 = vmatprep.subr.mxu0 0.0
        %940 = vmatpush1.msra.mxu0 0.0
        %941 = vmatprep.subr.mxu0 0.0
        %942 = vmatpush1.msra.mxu0 0.0
        %943 = vmatprep.subr.mxu0 0.0
        %944 = vmatpush1.msra.mxu0 0.0
        %945 = vmatprep.subr.mxu0 0.0
        %946 = vmatpush1.msra.mxu0 0.0
        %947 = vmatprep.subr.mxu0 0.0
        %948 = vmatpush1.msra.mxu0 0.0
        %949 = vmatprep.subr.mxu0 0.0
        %950 = vmatpush1.msra.mxu0 0.0
        %951 = vmatprep.subr.mxu0 0.0
        %952 = vmatpush1.msra.mxu0 0.0
        %953 = vmatprep.subr.mxu0 0.0
        %954 = vmatpush1.msra.mxu0 0.0
        %955 = vmatprep.subr.mxu0 0.0
        %956 = vmatpush1.msra.mxu0 0.0
        %957 = vmatprep.subr.mxu0 0.0
        %958 = vmatpush1.msra.mxu0 0.0
        %959 = vmatprep.subr.mxu0 0.0
        %960 = vmatpush1.msra.mxu0 0.0
        %961 = vmatprep.subr.mxu0 0.0
        %962 = vmatpush1.msra.mxu0 0.0
        %963 = vmatprep.subr.mxu0 0.0
        %964 = vmatpush1.msra.mxu0 0.0
        %965 = vmatprep.subr.mxu0 0.0
        %966 = vmatpush1.msra.mxu0 0.0
        %967 = vmatprep.subr.mxu0 0.0
        %968 = vmatpush1.msra.mxu0 0.0
        %969 = vmatprep.subr.mxu0 0.0
        %970 = vmatpush1.msra.mxu0 0.0
        %971 = vmatprep.subr.mxu0 0.0
        %972 = vmatpush1.msra.mxu0 0.0
        %973 = vmatprep.subr.mxu0 0.0
        %974 = vmatpush1.msra.mxu0 0.0
        %975 = vmatprep.subr.mxu0 0.0
        %976 = vmatpush1.msra.mxu0 0.0
        %977 = vmatprep.subr.mxu0 0.0
        %978 = vmatpush1.msra.mxu0 0.0
        %979 = vmatprep.subr.mxu0 0.0
        %980 = vmatpush1.msra.mxu0 0.0
        %981 = vmatprep.subr.mxu0 0.0
        %982 = vmatpush1.msra.mxu0 0.0
        %983 = vmatprep.subr.mxu0 0.0
        %984 = vmatpush1.msra.mxu0 0.0
        %985 = vmatprep.subr.mxu0 0.0
        %986 = vmatpush1.msra.mxu0 0.0
        %987 = vmatprep.subr.mxu0 0.0
        %988 = vmatpush1.msra.mxu0 0.0
        %989 = vmatprep.mubr.f32.mxu0 0.0
        %990 = vmatmul.mubr.f32.gmra.mrb[0].mxu0 %v878
        %v991 = vpop.f32.mrb[0].mxu0
        %v992 = vadd.f32 0.0, %v991
        %v993 = vpop.f32.mrb[0].mxu0
        %994 = vmatprep.mubr.f32.mxu0 0.0
        %995 = vmatmul.mubr.f32.gmra.mrb[0].mxu0 %v881
        %v996 = vpop.f32.mrb[0].mxu0
        %v997 = vadd.f32 0.0, %v996
        %v998 = vpop.f32.mrb[0].mxu0
        %999 = vmatprep.mubr.f32.mxu0 0.0
        %1000 = vmatmul.mubr.f32.gmra.mrb[0].mxu0 %v884
        %v1001 = vpop.f32.mrb[0].mxu0
        %v1002 = vadd.f32 0.0, %v1001
        %v1003 = vpop.f32.mrb[0].mxu0
        %1004 = vmatprep.mubr.f32.mxu0 0.0
        %1005 = vmatmul.mubr.f32.gmra.mrb[0].mxu0 %v887
        %v1006 = vpop.f32.mrb[0].mxu0
        %v1007 = vadd.f32 0.0, %v1006
        %v1008 = vpop.f32.mrb[0].mxu0
        %1009 = vmatprep.mubr.f32.mxu0 0.0
        %1010 = vmatmul.mubr.f32.gmra.mrb[0].mxu0 %v890
        %v1011 = vpop.f32.mrb[0].mxu0
        %v1012 = vadd.f32 0.0, %v1011
        %v1013 = vpop.f32.mrb[0].mxu0
        %1014 = vmatprep.mubr.f32.mxu0 0.0
        %1015 = vmatmul.mubr.f32.gmra.mrb[0].mxu0 %v893
        %v1016 = vpop.f32.mrb[0].mxu0
        %v1017 = vadd.f32 0.0, %v1016
        %v1018 = vpop.f32.mrb[0].mxu0
        %1019 = vmatprep.mubr.f32.mxu0 0.0
        %1020 = vmatmul.mubr.f32.gmra.mrb[0].mxu0 %v896
        %v1021 = vpop.f32.mrb[0].mxu0
        %v1022 = vadd.f32 0.0, %v1021
        %v1023 = vpop.f32.mrb[0].mxu0
        %1024 = vmatprep.mubr.f32.mxu0 0.0
        %1025 = vmatmul.mubr.f32.gmra.mrb[0].mxu0 %v899
        %v1026 = vpop.f32.mrb[0].mxu0
        %v1027 = vadd.f32 0.0, %v1026
        %v1028 = vpop.f32.mrb[0].mxu0
        %1029 = vmatprep.mubr.f32.mxu0 0.0
        %1030 = vmatmul.mubr.f32.gmra.mrb[0].mxu0 %v902
        %v1031 = vpop.f32.mrb[0].mxu0
        %v1032 = vadd.f32 0.0, %v1031
        %v1033 = vpop.f32.mrb[0].mxu0
        %1034 = vmatprep.mubr.f32.mxu0 0.0
        %1035 = vmatmul.mubr.f32.gmra.mrb[0].mxu0 %v905
        %v1036 = vpop.f32.mrb[0].mxu0
        %v1037 = vadd.f32 0.0, %v1036
        %v1038 = vpop.f32.mrb[0].mxu0
        %1039 = vmatprep.mubr.f32.mxu0 0.0
        %1040 = vmatmul.mubr.f32.gmra.mrb[0].mxu0 %v908
        %v1041 = vpop.f32.mrb[0].mxu0
        %v1042 = vadd.f32 0.0, %v1041
        %v1043 = vpop.f32.mrb[0].mxu0
        %1044 = vmatprep.mubr.f32.mxu0 0.0
        %1045 = vmatmul.mubr.f32.gmra.mrb[0].mxu0 %v911
        %v1046 = vpop.f32.mrb[0].mxu0
        %v1047 = vadd.f32 0.0, %v1046
        %v1048 = vpop.f32.mrb[0].mxu0
        %1049 = vmatprep.mubr.f32.mxu0 0.0
        %1050 = vmatmul.mubr.f32.gmra.mrb[0].mxu0 %v914
        %v1051 = vpop.f32.mrb[0].mxu0
        %v1052 = vadd.f32 0.0, %v1051
        %v1053 = vpop.f32.mrb[0].mxu0
        %1054 = vmatprep.mubr.f32.mxu0 0.0
        %1055 = vmatmul.mubr.f32.gmra.mrb[0].mxu0 %v917
        %v1056 = vpop.f32.mrb[0].mxu0
        %v1057 = vadd.f32 0.0, %v1056
        %v1058 = vpop.f32.mrb[0].mxu0
        %1059 = vmatprep.mubr.f32.mxu0 0.0
        %1060 = vmatmul.mubr.f32.gmra.mrb[0].mxu0 %v920
        %v1061 = vpop.f32.mrb[0].mxu0
        %v1062 = vadd.f32 0.0, %v1061
        %v1063 = vpop.f32.mrb[0].mxu0
        %1064 = vmatprep.mubr.f32.mxu0 0.0
        %1065 = vmatmul.mubr.f32.gmra.mrb[0].mxu0 %v923
        %v1066 = vpop.f32.mrb[0].mxu0
        %v1067 = vadd.f32 0.0, %v1066
        %v1068 = vpop.f32.mrb[0].mxu0
        %1069 = vdwg.mxu0
        %v1071 = vsel %vm876, %v766, 0
        %v1074 = vsel %vm876, %v767, 0
        %v1077 = vsel %vm876, %v768, 0
        %v1080 = vsel %vm876, %v769, 0
        %v1083 = vsel %vm876, %v770, 0
        %v1086 = vsel %vm876, %v771, 0
        %v1089 = vsel %vm876, %v772, 0
        %v1092 = vsel %vm876, %v773, 0
        %v1095 = vsel %vm876, %v774, 0
        %v1098 = vsel %vm876, %v775, 0
        %v1101 = vsel %vm876, %v776, 0
        %v1104 = vsel %vm876, %v777, 0
        %v1107 = vsel %vm876, %v778, 0
        %v1110 = vsel %vm876, %v779, 0
        %v1113 = vsel %vm876, %v780, 0
        %v1116 = vsel %vm876, %v781, 0
        %1118 = vmatprep.subr.mxu0 0.0
        %1119 = vmatpush1.msra.mxu0 %v863
        %1120 = vmatprep.subr.mxu0 0.0
        %1121 = vmatpush1.msra.mxu0 %v864
        %1122 = vmatprep.subr.mxu0 0.0
        %1123 = vmatpush1.msra.mxu0 %v865
        %1124 = vmatprep.subr.mxu0 0.0
        %1125 = vmatpush1.msra.mxu0 %v866
        %1126 = vmatprep.subr.mxu0 0.0
        %1127 = vmatpush1.msra.mxu0 %v867
        %1128 = vmatprep.subr.mxu0 0.0
        %1129 = vmatpush1.msra.mxu0 %v868
        %1130 = vmatprep.subr.mxu0 0.0
        %1131 = vmatpush1.msra.mxu0 0.0
        %1132 = vmatprep.subr.mxu0 0.0
        %1133 = vmatpush1.msra.mxu0 0.0
        %1134 = vmatprep.subr.mxu0 0.0
        %1135 = vmatpush1.msra.mxu0 0.0
        %1136 = vmatprep.subr.mxu0 0.0
        %1137 = vmatpush1.msra.mxu0 0.0
        %1138 = vmatprep.subr.mxu0 0.0
        %1139 = vmatpush1.msra.mxu0 0.0
        %1140 = vmatprep.subr.mxu0 0.0
        %1141 = vmatpush1.msra.mxu0 0.0
        %1142 = vmatprep.subr.mxu0 0.0
        %1143 = vmatpush1.msra.mxu0 0.0
        %1144 = vmatprep.subr.mxu0 0.0
        %1145 = vmatpush1.msra.mxu0 0.0
        %1146 = vmatprep.subr.mxu0 0.0
        %1147 = vmatpush1.msra.mxu0 0.0
        %1148 = vmatprep.subr.mxu0 0.0
        %1149 = vmatpush1.msra.mxu0 0.0
        %1150 = vmatprep.subr.mxu0 0.0
        %1151 = vmatpush1.msra.mxu0 0.0
        %1152 = vmatprep.subr.mxu0 0.0
        %1153 = vmatpush1.msra.mxu0 0.0
        %1154 = vmatprep.subr.mxu0 0.0
        %1155 = vmatpush1.msra.mxu0 0.0
        %1156 = vmatprep.subr.mxu0 0.0
        %1157 = vmatpush1.msra.mxu0 0.0
        %1158 = vmatprep.subr.mxu0 0.0
        %1159 = vmatpush1.msra.mxu0 0.0
        %1160 = vmatprep.subr.mxu0 0.0
        %1161 = vmatpush1.msra.mxu0 0.0
        %1162 = vmatprep.subr.mxu0 0.0
        %1163 = vmatpush1.msra.mxu0 0.0
        %1164 = vmatprep.subr.mxu0 0.0
        %1165 = vmatpush1.msra.mxu0 0.0
        %1166 = vmatprep.subr.mxu0 0.0
        %1167 = vmatpush1.msra.mxu0 0.0
        %1168 = vmatprep.subr.mxu0 0.0
        %1169 = vmatpush1.msra.mxu0 0.0
        %1170 = vmatprep.subr.mxu0 0.0
        %1171 = vmatpush1.msra.mxu0 0.0
        %1172 = vmatprep.subr.mxu0 0.0
        %1173 = vmatpush1.msra.mxu0 0.0
        %1174 = vmatprep.subr.mxu0 0.0
        %1175 = vmatpush1.msra.mxu0 0.0
        %1176 = vmatprep.subr.mxu0 0.0
        %1177 = vmatpush1.msra.mxu0 0.0
        %1178 = vmatprep.subr.mxu0 0.0
        %1179 = vmatpush1.msra.mxu0 0.0
        %1180 = vmatprep.subr.mxu0 0.0
        %1181 = vmatpush1.msra.mxu0 0.0
        %1182 = vmatprep.mubr.f32.mxu0 0.0
        %1183 = vmatmul.mubr.f32.gmra.mrb[0].mxu0 %v1071
        %v1184 = vpop.f32.mrb[0].mxu0
        %v1185 = vadd.f32 %v992, %v1184
        %v1186 = vpop.f32.mrb[0].mxu0
        %1187 = vmatprep.mubr.f32.mxu0 0.0
        %1188 = vmatmul.mubr.f32.gmra.mrb[0].mxu0 %v1074
        %v1189 = vpop.f32.mrb[0].mxu0
        %v1190 = vadd.f32 %v997, %v1189
        %v1191 = vpop.f32.mrb[0].mxu0
        %1192 = vmatprep.mubr.f32.mxu0 0.0
        %1193 = vmatmul.mubr.f32.gmra.mrb[0].mxu0 %v1077
        %v1194 = vpop.f32.mrb[0].mxu0
        %v1195 = vadd.f32 %v1002, %v1194
        %v1196 = vpop.f32.mrb[0].mxu0
        %1197 = vmatprep.mubr.f32.mxu0 0.0
        %1198 = vmatmul.mubr.f32.gmra.mrb[0].mxu0 %v1080
        %v1199 = vpop.f32.mrb[0].mxu0
        %v1200 = vadd.f32 %v1007, %v1199
        %v1201 = vpop.f32.mrb[0].mxu0
        %1202 = vmatprep.mubr.f32.mxu0 0.0
        %1203 = vmatmul.mubr.f32.gmra.mrb[0].mxu0 %v1083
        %v1204 = vpop.f32.mrb[0].mxu0
        %v1205 = vadd.f32 %v1012, %v1204
        %v1206 = vpop.f32.mrb[0].mxu0
        %1207 = vmatprep.mubr.f32.mxu0 0.0
        %1208 = vmatmul.mubr.f32.gmra.mrb[0].mxu0 %v1086
        %v1209 = vpop.f32.mrb[0].mxu0
        %v1210 = vadd.f32 %v1017, %v1209
        %v1211 = vpop.f32.mrb[0].mxu0
        %1212 = vmatprep.mubr.f32.mxu0 0.0
        %1213 = vmatmul.mubr.f32.gmra.mrb[0].mxu0 %v1089
        %v1214 = vpop.f32.mrb[0].mxu0
        %v1215 = vadd.f32 %v1022, %v1214
        %v1216 = vpop.f32.mrb[0].mxu0
        %1217 = vmatprep.mubr.f32.mxu0 0.0
        %1218 = vmatmul.mubr.f32.gmra.mrb[0].mxu0 %v1092
        %v1219 = vpop.f32.mrb[0].mxu0
        %v1220 = vadd.f32 %v1027, %v1219
        %v1221 = vpop.f32.mrb[0].mxu0
        %1222 = vmatprep.mubr.f32.mxu0 0.0
        %1223 = vmatmul.mubr.f32.gmra.mrb[0].mxu0 %v1095
        %v1224 = vpop.f32.mrb[0].mxu0
        %v1225 = vadd.f32 %v1032, %v1224
        %v1226 = vpop.f32.mrb[0].mxu0
        %1227 = vmatprep.mubr.f32.mxu0 0.0
        %1228 = vmatmul.mubr.f32.gmra.mrb[0].mxu0 %v1098
        %v1229 = vpop.f32.mrb[0].mxu0
        %v1230 = vadd.f32 %v1037, %v1229
        %v1231 = vpop.f32.mrb[0].mxu0
        %1232 = vmatprep.mubr.f32.mxu0 0.0
        %1233 = vmatmul.mubr.f32.gmra.mrb[0].mxu0 %v1101
        %v1234 = vpop.f32.mrb[0].mxu0
        %v1235 = vadd.f32 %v1042, %v1234
        %v1236 = vpop.f32.mrb[0].mxu0
        %1237 = vmatprep.mubr.f32.mxu0 0.0
        %1238 = vmatmul.mubr.f32.gmra.mrb[0].mxu0 %v1104
        %v1239 = vpop.f32.mrb[0].mxu0
        %v1240 = vadd.f32 %v1047, %v1239
        %v1241 = vpop.f32.mrb[0].mxu0
        %1242 = vmatprep.mubr.f32.mxu0 0.0
        %1243 = vmatmul.mubr.f32.gmra.mrb[0].mxu0 %v1107
        %v1244 = vpop.f32.mrb[0].mxu0
        %v1245 = vadd.f32 %v1052, %v1244
        %v1246 = vpop.f32.mrb[0].mxu0
        %1247 = vmatprep.mubr.f32.mxu0 0.0
        %1248 = vmatmul.mubr.f32.gmra.mrb[0].mxu0 %v1110
        %v1249 = vpop.f32.mrb[0].mxu0
        %v1250 = vadd.f32 %v1057, %v1249
        %v1251 = vpop.f32.mrb[0].mxu0
        %1252 = vmatprep.mubr.f32.mxu0 0.0
        %1253 = vmatmul.mubr.f32.gmra.mrb[0].mxu0 %v1113
        %v1254 = vpop.f32.mrb[0].mxu0
        %v1255 = vadd.f32 %v1062, %v1254
        %v1256 = vpop.f32.mrb[0].mxu0
        %1257 = vmatprep.mubr.f32.mxu0 0.0
        %1258 = vmatmul.mubr.f32.gmra.mrb[0].mxu0 %v1116
        %v1259 = vpop.f32.mrb[0].mxu0
        %v1260 = vadd.f32 %v1067, %v1259
        %v1261 = vpop.f32.mrb[0].mxu0
        %1262 = vdwg.mxu0
        %s1263 = scalar_lea.vmem [#allocation3], 96
        %v1264 = vld [vmem:[%s1263] sm:$0xff]
        %v1265 = vld [vmem:[%s1263 + $0x8] sm:$0xff]
        %v1266 = vld [vmem:[%s1263 + $0x10] sm:$0xff]
        %v1267 = vld [vmem:[%s1263 + $0x18] sm:$0xff]
        %v1268 = vld [vmem:[%s1263 + $0x20] sm:$0xff]
        %v1269 = vld [vmem:[%s1263 + $0x28] sm:$0xff]
        %v1271 = vsel %vm876, %v847, 0
        %v1274 = vsel %vm876, %v848, 0
        %v1277 = vsel %vm876, %v849, 0
        %v1280 = vsel %vm876, %v850, 0
        %v1283 = vsel %vm876, %v851, 0
        %v1286 = vsel %vm876, %v852, 0
        %v1289 = vsel %vm876, %v853, 0
        %v1292 = vsel %vm876, %v854, 0
        %v1295 = vsel %vm876, %v855, 0
        %v1298 = vsel %vm876, %v856, 0
        %v1301 = vsel %vm876, %v857, 0
        %v1304 = vsel %vm876, %v858, 0
        %v1307 = vsel %vm876, %v859, 0
        %v1310 = vsel %vm876, %v860, 0
        %v1313 = vsel %vm876, %v861, 0
        %v1316 = vsel %vm876, %v862, 0
        %1318 = vmatprep.subr.mxu0 0.0
        %1319 = vmatpush1.msra.mxu0 %v1264
        %1320 = vmatprep.subr.mxu0 0.0
        %1321 = vmatpush1.msra.mxu0 %v1265
        %1322 = vmatprep.subr.mxu0 0.0
        %1323 = vmatpush1.msra.mxu0 %v1266
        %1324 = vmatprep.subr.mxu0 0.0
        %1325 = vmatpush1.msra.mxu0 %v1267
        %1326 = vmatprep.subr.mxu0 0.0
        %1327 = vmatpush1.msra.mxu0 %v1268
        %1328 = vmatprep.subr.mxu0 0.0
        %1329 = vmatpush1.msra.mxu0 %v1269
        %1330 = vmatprep.subr.mxu0 0.0
        %1331 = vmatpush1.msra.mxu0 0.0
        %1332 = vmatprep.subr.mxu0 0.0
        %1333 = vmatpush1.msra.mxu0 0.0
        %1334 = vmatprep.subr.mxu0 0.0
        %1335 = vmatpush1.msra.mxu0 0.0
        %1336 = vmatprep.subr.mxu0 0.0
        %1337 = vmatpush1.msra.mxu0 0.0
        %1338 = vmatprep.subr.mxu0 0.0
        %1339 = vmatpush1.msra.mxu0 0.0
        %1340 = vmatprep.subr.mxu0 0.0
        %1341 = vmatpush1.msra.mxu0 0.0
        %1342 = vmatprep.subr.mxu0 0.0
        %1343 = vmatpush1.msra.mxu0 0.0
        %1344 = vmatprep.subr.mxu0 0.0
        %1345 = vmatpush1.msra.mxu0 0.0
        %1346 = vmatprep.subr.mxu0 0.0
        %1347 = vmatpush1.msra.mxu0 0.0
        %1348 = vmatprep.subr.mxu0 0.0
        %1349 = vmatpush1.msra.mxu0 0.0
        %1350 = vmatprep.subr.mxu0 0.0
        %1351 = vmatpush1.msra.mxu0 0.0
        %1352 = vmatprep.subr.mxu0 0.0
        %1353 = vmatpush1.msra.mxu0 0.0
        %1354 = vmatprep.subr.mxu0 0.0
        %1355 = vmatpush1.msra.mxu0 0.0
        %1356 = vmatprep.subr.mxu0 0.0
        %1357 = vmatpush1.msra.mxu0 0.0
        %1358 = vmatprep.subr.mxu0 0.0
        %1359 = vmatpush1.msra.mxu0 0.0
        %1360 = vmatprep.subr.mxu0 0.0
        %1361 = vmatpush1.msra.mxu0 0.0
        %1362 = vmatprep.subr.mxu0 0.0
        %1363 = vmatpush1.msra.mxu0 0.0
        %1364 = vmatprep.subr.mxu0 0.0
        %1365 = vmatpush1.msra.mxu0 0.0
        %1366 = vmatprep.subr.mxu0 0.0
        %1367 = vmatpush1.msra.mxu0 0.0
        %1368 = vmatprep.subr.mxu0 0.0
        %1369 = vmatpush1.msra.mxu0 0.0
        %1370 = vmatprep.subr.mxu0 0.0
        %1371 = vmatpush1.msra.mxu0 0.0
        %1372 = vmatprep.subr.mxu0 0.0
        %1373 = vmatpush1.msra.mxu0 0.0
        %1374 = vmatprep.subr.mxu0 0.0
        %1375 = vmatpush1.msra.mxu0 0.0
        %1376 = vmatprep.subr.mxu0 0.0
        %1377 = vmatpush1.msra.mxu0 0.0
        %1378 = vmatprep.subr.mxu0 0.0
        %1379 = vmatpush1.msra.mxu0 0.0
        %1380 = vmatprep.subr.mxu0 0.0
        %1381 = vmatpush1.msra.mxu0 0.0
        %1382 = vmatprep.mubr.f32.mxu0 0.0
        %1383 = vmatmul.mubr.f32.gmra.mrb[0].mxu0 %v1271
        %v1384 = vpop.f32.mrb[0].mxu0
        %v1385 = vadd.f32 0.0, %v1384
        %v1386 = vpop.f32.mrb[0].mxu0
        %1387 = vmatprep.mubr.f32.mxu0 0.0
        %1388 = vmatmul.mubr.f32.gmra.mrb[0].mxu0 %v1274
        %v1389 = vpop.f32.mrb[0].mxu0
        %v1390 = vadd.f32 0.0, %v1389
        %v1391 = vpop.f32.mrb[0].mxu0
        %1392 = vmatprep.mubr.f32.mxu0 0.0
        %1393 = vmatmul.mubr.f32.gmra.mrb[0].mxu0 %v1277
        %v1394 = vpop.f32.mrb[0].mxu0
        %v1395 = vadd.f32 0.0, %v1394
        %v1396 = vpop.f32.mrb[0].mxu0
        %1397 = vmatprep.mubr.f32.mxu0 0.0
        %1398 = vmatmul.mubr.f32.gmra.mrb[0].mxu0 %v1280
        %v1399 = vpop.f32.mrb[0].mxu0
        %v1400 = vadd.f32 0.0, %v1399
        %v1401 = vpop.f32.mrb[0].mxu0
        %1402 = vmatprep.mubr.f32.mxu0 0.0
        %1403 = vmatmul.mubr.f32.gmra.mrb[0].mxu0 %v1283
        %v1404 = vpop.f32.mrb[0].mxu0
        %v1405 = vadd.f32 0.0, %v1404
        %v1406 = vpop.f32.mrb[0].mxu0
        %1407 = vmatprep.mubr.f32.mxu0 0.0
        %1408 = vmatmul.mubr.f32.gmra.mrb[0].mxu0 %v1286
        %v1409 = vpop.f32.mrb[0].mxu0
        %v1410 = vadd.f32 0.0, %v1409
        %v1411 = vpop.f32.mrb[0].mxu0
        %1412 = vmatprep.mubr.f32.mxu0 0.0
        %1413 = vmatmul.mubr.f32.gmra.mrb[0].mxu0 %v1289
        %v1414 = vpop.f32.mrb[0].mxu0
        %v1415 = vadd.f32 0.0, %v1414
        %v1416 = vpop.f32.mrb[0].mxu0
        %1417 = vmatprep.mubr.f32.mxu0 0.0
        %1418 = vmatmul.mubr.f32.gmra.mrb[0].mxu0 %v1292
        %v1419 = vpop.f32.mrb[0].mxu0
        %v1420 = vadd.f32 0.0, %v1419
        %v1421 = vpop.f32.mrb[0].mxu0
        %1422 = vmatprep.mubr.f32.mxu0 0.0
        %1423 = vmatmul.mubr.f32.gmra.mrb[0].mxu0 %v1295
        %v1424 = vpop.f32.mrb[0].mxu0
        %v1425 = vadd.f32 0.0, %v1424
        %v1426 = vpop.f32.mrb[0].mxu0
        %1427 = vmatprep.mubr.f32.mxu0 0.0
        %1428 = vmatmul.mubr.f32.gmra.mrb[0].mxu0 %v1298
        %v1429 = vpop.f32.mrb[0].mxu0
        %v1430 = vadd.f32 0.0, %v1429
        %v1431 = vpop.f32.mrb[0].mxu0
        %1432 = vmatprep.mubr.f32.mxu0 0.0
        %1433 = vmatmul.mubr.f32.gmra.mrb[0].mxu0 %v1301
        %v1434 = vpop.f32.mrb[0].mxu0
        %v1435 = vadd.f32 0.0, %v1434
        %v1436 = vpop.f32.mrb[0].mxu0
        %1437 = vmatprep.mubr.f32.mxu0 0.0
        %1438 = vmatmul.mubr.f32.gmra.mrb[0].mxu0 %v1304
        %v1439 = vpop.f32.mrb[0].mxu0
        %v1440 = vadd.f32 0.0, %v1439
        %v1441 = vpop.f32.mrb[0].mxu0
        %1442 = vmatprep.mubr.f32.mxu0 0.0
        %1443 = vmatmul.mubr.f32.gmra.mrb[0].mxu0 %v1307
        %v1444 = vpop.f32.mrb[0].mxu0
        %v1445 = vadd.f32 0.0, %v1444
        %v1446 = vpop.f32.mrb[0].mxu0
        %1447 = vmatprep.mubr.f32.mxu0 0.0
        %1448 = vmatmul.mubr.f32.gmra.mrb[0].mxu0 %v1310
        %v1449 = vpop.f32.mrb[0].mxu0
        %v1450 = vadd.f32 0.0, %v1449
        %v1451 = vpop.f32.mrb[0].mxu0
        %1452 = vmatprep.mubr.f32.mxu0 0.0
        %1453 = vmatmul.mubr.f32.gmra.mrb[0].mxu0 %v1313
        %v1454 = vpop.f32.mrb[0].mxu0
        %v1455 = vadd.f32 0.0, %v1454
        %v1456 = vpop.f32.mrb[0].mxu0
        %1457 = vmatprep.mubr.f32.mxu0 0.0
        %1458 = vmatmul.mubr.f32.gmra.mrb[0].mxu0 %v1316
        %v1459 = vpop.f32.mrb[0].mxu0
        %v1460 = vadd.f32 0.0, %v1459
        %v1461 = vpop.f32.mrb[0].mxu0
        %1462 = vdwg.mxu0
        %v1463 = vadd.f32 %v1185, %v1385
        %v1464 = vadd.f32 %v1190, %v1390
        %v1465 = vadd.f32 %v1195, %v1395
        %v1466 = vadd.f32 %v1200, %v1400
        %v1467 = vadd.f32 %v1205, %v1405
        %v1468 = vadd.f32 %v1210, %v1410
        %v1469 = vadd.f32 %v1215, %v1415
        %v1470 = vadd.f32 %v1220, %v1420
        %v1471 = vadd.f32 %v1225, %v1425
        %v1472 = vadd.f32 %v1230, %v1430
        %v1473 = vadd.f32 %v1235, %v1435
        %v1474 = vadd.f32 %v1240, %v1440
        %v1475 = vadd.f32 %v1245, %v1445
        %v1476 = vadd.f32 %v1250, %v1450
        %v1477 = vadd.f32 %v1255, %v1455
        %v1478 = vadd.f32 %v1260, %v1460
        %v1479 = vld [vmem:[%s3] sm:$0x1]
        %v1481 = vlaneseq
        %v1482 = vshrl.u32 %v1481, 7
        %v1483 = vsub.s32 0, %v1482
        %v1484 = vrot.slane %v1479, %v1483
        %v1486 = vadd.f32 %v1463, %v1484
        %v1487 = vadd.f32 %v1464, %v1484
        %v1488 = vadd.f32 %v1465, %v1484
        %v1489 = vadd.f32 %v1466, %v1484
        %v1490 = vadd.f32 %v1467, %v1484
        %v1491 = vadd.f32 %v1468, %v1484
        %v1492 = vadd.f32 %v1469, %v1484
        %v1493 = vadd.f32 %v1470, %v1484
        %v1494 = vadd.f32 %v1471, %v1484
        %v1495 = vadd.f32 %v1472, %v1484
        %v1496 = vadd.f32 %v1473, %v1484
        %v1497 = vadd.f32 %v1474, %v1484
        %v1498 = vadd.f32 %v1475, %v1484
        %v1499 = vadd.f32 %v1476, %v1484
        %v1500 = vadd.f32 %v1477, %v1484
        %v1501 = vadd.f32 %v1478, %v1484
        %v1502 = vmax.f32 %v1486, 0.0
        %v1503 = vmax.f32 %v1487, 0.0
        %v1504 = vmax.f32 %v1488, 0.0
        %v1505 = vmax.f32 %v1489, 0.0
        %v1506 = vmax.f32 %v1490, 0.0
        %v1507 = vmax.f32 %v1491, 0.0
        %v1508 = vmax.f32 %v1492, 0.0
        %v1509 = vmax.f32 %v1493, 0.0
        %v1510 = vmax.f32 %v1494, 0.0
        %v1511 = vmax.f32 %v1495, 0.0
        %v1512 = vmax.f32 %v1496, 0.0
        %v1513 = vmax.f32 %v1497, 0.0
        %v1514 = vmax.f32 %v1498, 0.0
        %v1515 = vmax.f32 %v1499, 0.0
        %v1516 = vmax.f32 %v1500, 0.0
        %v1517 = vmax.f32 %v1501, 0.0
        %1518 = vadd.xlane.f32.xlu0 %v1502
        %v1519 = vpop.xlane.xlu0 %1518
        %1520 = vadd.xlane.f32.xlu0 %v1503
        %v1521 = vpop.xlane.xlu0 %1520
        %1522 = vadd.xlane.f32.xlu0 %v1504
        %v1523 = vpop.xlane.xlu0 %1522
        %1524 = vadd.xlane.f32.xlu0 %v1505
        %v1525 = vpop.xlane.xlu0 %1524
        %1526 = vadd.xlane.f32.xlu0 %v1506
        %v1527 = vpop.xlane.xlu0 %1526
        %1528 = vadd.xlane.f32.xlu0 %v1507
        %v1529 = vpop.xlane.xlu0 %1528
        %1530 = vadd.xlane.f32.xlu0 %v1508
        %v1531 = vpop.xlane.xlu0 %1530
        %1532 = vadd.xlane.f32.xlu0 %v1509
        %v1533 = vpop.xlane.xlu0 %1532
        %1534 = vadd.xlane.f32.xlu0 %v1510
        %v1535 = vpop.xlane.xlu0 %1534
        %1536 = vadd.xlane.f32.xlu0 %v1511
        %v1537 = vpop.xlane.xlu0 %1536
        %1538 = vadd.xlane.f32.xlu0 %v1512
        %v1539 = vpop.xlane.xlu0 %1538
        %1540 = vadd.xlane.f32.xlu0 %v1513
        %v1541 = vpop.xlane.xlu0 %1540
        %1542 = vadd.xlane.f32.xlu0 %v1514
        %v1543 = vpop.xlane.xlu0 %1542
        %1544 = vadd.xlane.f32.xlu0 %v1515
        %v1545 = vpop.xlane.xlu0 %1544
        %1546 = vadd.xlane.f32.xlu0 %v1516
        %v1547 = vpop.xlane.xlu0 %1546
        %1548 = vadd.xlane.f32.xlu0 %v1517
        %v1549 = vpop.xlane.xlu0 %1548
        %v1550 = vmul.f32 %v1519, 0.0125
        %v1551 = vmul.f32 %v1521, 0.0125
        %v1552 = vmul.f32 %v1523, 0.0125
        %v1553 = vmul.f32 %v1525, 0.0125
        %v1554 = vmul.f32 %v1527, 0.0125
        %v1555 = vmul.f32 %v1529, 0.0125
        %v1556 = vmul.f32 %v1531, 0.0125
        %v1557 = vmul.f32 %v1533, 0.0125
        %v1558 = vmul.f32 %v1535, 0.0125
        %v1559 = vmul.f32 %v1537, 0.0125
        %v1560 = vmul.f32 %v1539, 0.0125
        %v1561 = vmul.f32 %v1541, 0.0125
        %v1562 = vmul.f32 %v1543, 0.0125
        %v1563 = vmul.f32 %v1545, 0.0125
        %v1564 = vmul.f32 %v1547, 0.0125
        %v1565 = vmul.f32 %v1549, 0.0125
        %v1566 = vmul.f32 %v1502, %v1502
        %v1567 = vmul.f32 %v1503, %v1503
        %v1568 = vmul.f32 %v1504, %v1504
        %v1569 = vmul.f32 %v1505, %v1505
        %v1570 = vmul.f32 %v1506, %v1506
        %v1571 = vmul.f32 %v1507, %v1507
        %v1572 = vmul.f32 %v1508, %v1508
        %v1573 = vmul.f32 %v1509, %v1509
        %v1574 = vmul.f32 %v1510, %v1510
        %v1575 = vmul.f32 %v1511, %v1511
        %v1576 = vmul.f32 %v1512, %v1512
        %v1577 = vmul.f32 %v1513, %v1513
        %v1578 = vmul.f32 %v1514, %v1514
        %v1579 = vmul.f32 %v1515, %v1515
        %v1580 = vmul.f32 %v1516, %v1516
        %v1581 = vmul.f32 %v1517, %v1517
        %1582 = vadd.xlane.f32.xlu0 %v1566
        %v1583 = vpop.xlane.xlu0 %1582
        %1584 = vadd.xlane.f32.xlu0 %v1567
        %v1585 = vpop.xlane.xlu0 %1584
        %1586 = vadd.xlane.f32.xlu0 %v1568
        %v1587 = vpop.xlane.xlu0 %1586
        %1588 = vadd.xlane.f32.xlu0 %v1569
        %v1589 = vpop.xlane.xlu0 %1588
        %1590 = vadd.xlane.f32.xlu0 %v1570
        %v1591 = vpop.xlane.xlu0 %1590
        %1592 = vadd.xlane.f32.xlu0 %v1571
        %v1593 = vpop.xlane.xlu0 %1592
        %1594 = vadd.xlane.f32.xlu0 %v1572
        %v1595 = vpop.xlane.xlu0 %1594
        %1596 = vadd.xlane.f32.xlu0 %v1573
        %v1597 = vpop.xlane.xlu0 %1596
        %1598 = vadd.xlane.f32.xlu0 %v1574
        %v1599 = vpop.xlane.xlu0 %1598
        %1600 = vadd.xlane.f32.xlu0 %v1575
        %v1601 = vpop.xlane.xlu0 %1600
        %1602 = vadd.xlane.f32.xlu0 %v1576
        %v1603 = vpop.xlane.xlu0 %1602
        %1604 = vadd.xlane.f32.xlu0 %v1577
        %v1605 = vpop.xlane.xlu0 %1604
        %1606 = vadd.xlane.f32.xlu0 %v1578
        %v1607 = vpop.xlane.xlu0 %1606
        %1608 = vadd.xlane.f32.xlu0 %v1579
        %v1609 = vpop.xlane.xlu0 %1608
        %1610 = vadd.xlane.f32.xlu0 %v1580
        %v1611 = vpop.xlane.xlu0 %1610
        %1612 = vadd.xlane.f32.xlu0 %v1581
        %v1613 = vpop.xlane.xlu0 %1612
        %v1614 = vmul.f32 %v1583, 0.0125
        %v1615 = vmul.f32 %v1585, 0.0125
        %v1616 = vmul.f32 %v1587, 0.0125
        %v1617 = vmul.f32 %v1589, 0.0125
        %v1618 = vmul.f32 %v1591, 0.0125
        %v1619 = vmul.f32 %v1593, 0.0125
        %v1620 = vmul.f32 %v1595, 0.0125
        %v1621 = vmul.f32 %v1597, 0.0125
        %v1622 = vmul.f32 %v1599, 0.0125
        %v1623 = vmul.f32 %v1601, 0.0125
        %v1624 = vmul.f32 %v1603, 0.0125
        %v1625 = vmul.f32 %v1605, 0.0125
        %v1626 = vmul.f32 %v1607, 0.0125
        %v1627 = vmul.f32 %v1609, 0.0125
        %v1628 = vmul.f32 %v1611, 0.0125
        %v1629 = vmul.f32 %v1613, 0.0125
        %v1630 = vmul.f32 %v1550, %v1550
        %v1631 = vmul.f32 %v1551, %v1551
        %v1632 = vmul.f32 %v1552, %v1552
        %v1633 = vmul.f32 %v1553, %v1553
        %v1634 = vmul.f32 %v1554, %v1554
        %v1635 = vmul.f32 %v1555, %v1555
        %v1636 = vmul.f32 %v1556, %v1556
        %v1637 = vmul.f32 %v1557, %v1557
        %v1638 = vmul.f32 %v1558, %v1558
        %v1639 = vmul.f32 %v1559, %v1559
        %v1640 = vmul.f32 %v1560, %v1560
        %v1641 = vmul.f32 %v1561, %v1561
        %v1642 = vmul.f32 %v1562, %v1562
        %v1643 = vmul.f32 %v1563, %v1563
        %v1644 = vmul.f32 %v1564, %v1564
        %v1645 = vmul.f32 %v1565, %v1565
        %v1646 = vsub.f32 %v1614, %v1630
        %v1647 = vsub.f32 %v1615, %v1631
        %v1648 = vsub.f32 %v1616, %v1632
        %v1649 = vsub.f32 %v1617, %v1633
        %v1650 = vsub.f32 %v1618, %v1634
        %v1651 = vsub.f32 %v1619, %v1635
        %v1652 = vsub.f32 %v1620, %v1636
        %v1653 = vsub.f32 %v1621, %v1637
        %v1654 = vsub.f32 %v1622, %v1638
        %v1655 = vsub.f32 %v1623, %v1639
        %v1656 = vsub.f32 %v1624, %v1640
        %v1657 = vsub.f32 %v1625, %v1641
        %v1658 = vsub.f32 %v1626, %v1642
        %v1659 = vsub.f32 %v1627, %v1643
        %v1660 = vsub.f32 %v1628, %v1644
        %v1661 = vsub.f32 %v1629, %v1645
        %v1662 = vmax.f32 %v1646, 0.0
        %v1663 = vmax.f32 %v1647, 0.0
        %v1664 = vmax.f32 %v1648, 0.0
        %v1665 = vmax.f32 %v1649, 0.0
        %v1666 = vmax.f32 %v1650, 0.0
        %v1667 = vmax.f32 %v1651, 0.0
        %v1668 = vmax.f32 %v1652, 0.0
        %v1669 = vmax.f32 %v1653, 0.0
        %v1670 = vmax.f32 %v1654, 0.0
        %v1671 = vmax.f32 %v1655, 0.0
        %v1672 = vmax.f32 %v1656, 0.0
        %v1673 = vmax.f32 %v1657, 0.0
        %v1674 = vmax.f32 %v1658, 0.0
        %v1675 = vmax.f32 %v1659, 0.0
        %v1676 = vmax.f32 %v1660, 0.0
        %v1677 = vmax.f32 %v1661, 0.0
        %v1678 = vsub.f32 %v1502, %v1550
        %v1679 = vsub.f32 %v1503, %v1551
        %v1680 = vsub.f32 %v1504, %v1552
        %v1681 = vsub.f32 %v1505, %v1553
        %v1682 = vsub.f32 %v1506, %v1554
        %v1683 = vsub.f32 %v1507, %v1555
        %v1684 = vsub.f32 %v1508, %v1556
        %v1685 = vsub.f32 %v1509, %v1557
        %v1686 = vsub.f32 %v1510, %v1558
        %v1687 = vsub.f32 %v1511, %v1559
        %v1688 = vsub.f32 %v1512, %v1560
        %v1689 = vsub.f32 %v1513, %v1561
        %v1690 = vsub.f32 %v1514, %v1562
        %v1691 = vsub.f32 %v1515, %v1563
        %v1692 = vsub.f32 %v1516, %v1564
        %v1693 = vsub.f32 %v1517, %v1565
        %v1694 = vadd.f32 %v1662, 1e-05
        %v1695 = vadd.f32 %v1663, 1e-05
        %v1696 = vadd.f32 %v1664, 1e-05
        %v1697 = vadd.f32 %v1665, 1e-05
        %v1698 = vadd.f32 %v1666, 1e-05
        %v1699 = vadd.f32 %v1667, 1e-05
        %v1700 = vadd.f32 %v1668, 1e-05
        %v1701 = vadd.f32 %v1669, 1e-05
        %v1702 = vadd.f32 %v1670, 1e-05
        %v1703 = vadd.f32 %v1671, 1e-05
        %v1704 = vadd.f32 %v1672, 1e-05
        %v1705 = vadd.f32 %v1673, 1e-05
        %v1706 = vadd.f32 %v1674, 1e-05
        %v1707 = vadd.f32 %v1675, 1e-05
        %v1708 = vadd.f32 %v1676, 1e-05
        %v1709 = vadd.f32 %v1677, 1e-05
        %v1710 = vrsqrt.pop %v1694
        %v1711 = vrsqrt.pop %v1695
        %v1712 = vrsqrt.pop %v1696
        %v1713 = vrsqrt.pop %v1697
        %v1714 = vrsqrt.pop %v1698
        %v1715 = vrsqrt.pop %v1699
        %v1716 = vrsqrt.pop %v1700
        %v1717 = vrsqrt.pop %v1701
        %v1718 = vrsqrt.pop %v1702
        %v1719 = vrsqrt.pop %v1703
        %v1720 = vrsqrt.pop %v1704
        %v1721 = vrsqrt.pop %v1705
        %v1722 = vrsqrt.pop %v1706
        %v1723 = vrsqrt.pop %v1707
        %v1724 = vrsqrt.pop %v1708
        %v1725 = vrsqrt.pop %v1709
        %v1726 = vmul.f32 %v1678, %v1710
        %v1727 = vmul.f32 %v1679, %v1711
        %v1728 = vmul.f32 %v1680, %v1712
        %v1729 = vmul.f32 %v1681, %v1713
        %v1730 = vmul.f32 %v1682, %v1714
        %v1731 = vmul.f32 %v1683, %v1715
        %v1732 = vmul.f32 %v1684, %v1716
        %v1733 = vmul.f32 %v1685, %v1717
        %v1734 = vmul.f32 %v1686, %v1718
        %v1735 = vmul.f32 %v1687, %v1719
        %v1736 = vmul.f32 %v1688, %v1720
        %v1737 = vmul.f32 %v1689, %v1721
        %v1738 = vmul.f32 %v1690, %v1722
        %v1739 = vmul.f32 %v1691, %v1723
        %v1740 = vmul.f32 %v1692, %v1724
        %v1741 = vmul.f32 %v1693, %v1725
        %v1742 = vld [vmem:[%s4] sm:$0x1]
        %v1744 = vlaneseq
        %v1745 = vshrl.u32 %v1744, 7
        %v1746 = vsub.s32 0, %v1745
        %v1747 = vrot.slane %v1742, %v1746
        %v1749 = vmul.f32 %v1726, %v1747
        %v1750 = vmul.f32 %v1727, %v1747
        %v1751 = vmul.f32 %v1728, %v1747
        %v1752 = vmul.f32 %v1729, %v1747
        %v1753 = vmul.f32 %v1730, %v1747
        %v1754 = vmul.f32 %v1731, %v1747
        %v1755 = vmul.f32 %v1732, %v1747
        %v1756 = vmul.f32 %v1733, %v1747
        %v1757 = vmul.f32 %v1734, %v1747
        %v1758 = vmul.f32 %v1735, %v1747
        %v1759 = vmul.f32 %v1736, %v1747
        %v1760 = vmul.f32 %v1737, %v1747
        %v1761 = vmul.f32 %v1738, %v1747
        %v1762 = vmul.f32 %v1739, %v1747
        %v1763 = vmul.f32 %v1740, %v1747
        %v1764 = vmul.f32 %v1741, %v1747
        %v1765 = vld [vmem:[%s5] sm:$0x1]
        %v1767 = vlaneseq
        %v1768 = vshrl.u32 %v1767, 7
        %v1769 = vsub.s32 0, %v1768
        %v1770 = vrot.slane %v1765, %v1769
        %v1772 = vadd.f32 %v1749, %v1770
        %v1773 = vadd.f32 %v1750, %v1770
        %v1774 = vadd.f32 %v1751, %v1770
        %v1775 = vadd.f32 %v1752, %v1770
        %v1776 = vadd.f32 %v1753, %v1770
        %v1777 = vadd.f32 %v1754, %v1770
        %v1778 = vadd.f32 %v1755, %v1770
        %v1779 = vadd.f32 %v1756, %v1770
        %v1780 = vadd.f32 %v1757, %v1770
        %v1781 = vadd.f32 %v1758, %v1770
        %v1782 = vadd.f32 %v1759, %v1770
        %v1783 = vadd.f32 %v1760, %v1770
        %v1784 = vadd.f32 %v1761, %v1770
        %v1785 = vadd.f32 %v1762, %v1770
        %v1786 = vadd.f32 %v1763, %v1770
        %v1787 = vadd.f32 %v1764, %v1770
        %v1788 = vrot.slane %v1772, 7
        %v1789 = vrot.slane %v1773, 7
        %v1790 = vrot.slane %v1774, 7
        %v1791 = vrot.slane %v1775, 7
        %v1792 = vrot.slane %v1776, 7
        %v1793 = vrot.slane %v1777, 7
        %v1794 = vrot.slane %v1778, 7
        %v1795 = vrot.slane %v1779, 7
        %v1796 = vrot.slane %v1780, 7
        %v1797 = vrot.slane %v1781, 7
        %v1798 = vrot.slane %v1782, 7
        %v1799 = vrot.slane %v1783, 7
        %v1800 = vrot.slane %v1784, 7
        %v1801 = vrot.slane %v1785, 7
        %v1802 = vrot.slane %v1786, 7
        %v1803 = vrot.slane %v1787, 7
        %v1804 = vsel %vm717, %v1802, %v1803
        %v1805 = vsel %vm717, %v1801, %v1802
        %v1806 = vsel %vm717, %v1800, %v1801
        %v1807 = vsel %vm717, %v1799, %v1800
        %v1808 = vsel %vm717, %v1798, %v1799
        %v1809 = vsel %vm717, %v1797, %v1798
        %v1810 = vsel %vm717, %v1796, %v1797
        %v1811 = vsel %vm717, %v1795, %v1796
        %v1812 = vsel %vm717, %v1794, %v1795
        %v1813 = vsel %vm717, %v1793, %v1794
        %v1814 = vsel %vm717, %v1792, %v1793
        %v1815 = vsel %vm717, %v1791, %v1792
        %v1816 = vsel %vm717, %v1790, %v1791
        %v1817 = vsel %vm717, %v1789, %v1790
        %v1818 = vsel %vm717, %v1788, %v1789
        %v1819 = vsel %vm717, %v1803, %v1788
        %v1820 = vsel %vm750, 0.0, %v1819
        %v1821 = vsel %vm751, 0.0, %v1818
        %v1822 = vsel %vm752, 0.0, %v1817
        %v1823 = vsel %vm753, 0.0, %v1816
        %v1824 = vsel %vm754, 0.0, %v1815
        %v1825 = vsel %vm755, 0.0, %v1814
        %v1826 = vsel %vm756, 0.0, %v1813
        %v1827 = vsel %vm757, 0.0, %v1812
        %v1828 = vsel %vm758, 0.0, %v1811
        %v1829 = vsel %vm759, 0.0, %v1810
        %v1830 = vsel %vm760, 0.0, %v1809
        %v1831 = vsel %vm761, 0.0, %v1808
        %v1832 = vsel %vm762, 0.0, %v1807
        %v1833 = vsel %vm763, 0.0, %v1806
        %v1834 = vsel %vm764, 0.0, %v1805
        %v1835 = vsel %vm765, 0.0, %v1804
        %v1836 = vrot.slane %v1772, 1
        %v1837 = vrot.slane %v1773, 1
        %v1838 = vrot.slane %v1774, 1
        %v1839 = vrot.slane %v1775, 1
        %v1840 = vrot.slane %v1776, 1
        %v1841 = vrot.slane %v1777, 1
        %v1842 = vrot.slane %v1778, 1
        %v1843 = vrot.slane %v1779, 1
        %v1844 = vrot.slane %v1780, 1
        %v1845 = vrot.slane %v1781, 1
        %v1846 = vrot.slane %v1782, 1
        %v1847 = vrot.slane %v1783, 1
        %v1848 = vrot.slane %v1784, 1
        %v1849 = vrot.slane %v1785, 1
        %v1850 = vrot.slane %v1786, 1
        %v1851 = vrot.slane %v1787, 1
        %v1852 = vsel %vm798, %v1850, %v1851
        %v1853 = vsel %vm798, %v1849, %v1850
        %v1854 = vsel %vm798, %v1848, %v1849
        %v1855 = vsel %vm798, %v1847, %v1848
        %v1856 = vsel %vm798, %v1846, %v1847
        %v1857 = vsel %vm798, %v1845, %v1846
        %v1858 = vsel %vm798, %v1844, %v1845
        %v1859 = vsel %vm798, %v1843, %v1844
        %v1860 = vsel %vm798, %v1842, %v1843
        %v1861 = vsel %vm798, %v1841, %v1842
        %v1862 = vsel %vm798, %v1840, %v1841
        %v1863 = vsel %vm798, %v1839, %v1840
        %v1864 = vsel %vm798, %v1838, %v1839
        %v1865 = vsel %vm798, %v1837, %v1838
        %v1866 = vsel %vm798, %v1836, %v1837
        %v1867 = vsel %vm798, %v1851, %v1836
        %v1868 = vsel %vm831, 0.0, %v1866
        %v1869 = vsel %vm832, 0.0, %v1865
        %v1870 = vsel %vm833, 0.0, %v1864
        %v1871 = vsel %vm834, 0.0, %v1863
        %v1872 = vsel %vm835, 0.0, %v1862
        %v1873 = vsel %vm836, 0.0, %v1861
        %v1874 = vsel %vm837, 0.0, %v1860
        %v1875 = vsel %vm838, 0.0, %v1859
        %v1876 = vsel %vm839, 0.0, %v1858
        %v1877 = vsel %vm840, 0.0, %v1857
        %v1878 = vsel %vm841, 0.0, %v1856
        %v1879 = vsel %vm842, 0.0, %v1855
        %v1880 = vsel %vm843, 0.0, %v1854
        %v1881 = vsel %vm844, 0.0, %v1853
        %v1882 = vsel %vm845, 0.0, %v1852
        %v1883 = vsel %vm846, 0.0, %v1867
        %v1884 = vld [vmem:[%s6] sm:$0xff]
        %v1885 = vld [vmem:[%s6 + $0x8] sm:$0xff]
        %v1886 = vld [vmem:[%s6 + $0x10] sm:$0xff]
        %v1887 = vld [vmem:[%s6 + $0x18] sm:$0xff]
        %v1888 = vld [vmem:[%s6 + $0x20] sm:$0xff]
        %v1889 = vld [vmem:[%s6 + $0x28] sm:$0xff]
        %v1890 = vld [vmem:[%s6 + $0x30] sm:$0xff]
        %v1891 = vld [vmem:[%s6 + $0x38] sm:$0xff]
        %v1892 = vld [vmem:[%s6 + $0x40] sm:$0xff]
        %v1893 = vld [vmem:[%s6 + $0x48] sm:$0xff]
        %v1894 = vld [vmem:[%s6 + $0x50] sm:$0xff]
        %v1895 = vld [vmem:[%s6 + $0x58] sm:$0xff]
        %v1896 = vld [vmem:[%s6 + $0x60] sm:$0xff]
        %v1897 = vld [vmem:[%s6 + $0x68] sm:$0xff]
        %v1898 = vld [vmem:[%s6 + $0x70] sm:$0xff]
        %v1899 = vld [vmem:[%s6 + $0x78] sm:$0xff]
        %s1900 = scalar_lea.vmem %s6, 128
        %v1901 = vld [vmem:[%s1900] sm:$0xff]
        %v1902 = vld [vmem:[%s1900 + $0x8] sm:$0xff]
        %v1903 = vld [vmem:[%s1900 + $0x10] sm:$0xff]
        %v1904 = vld [vmem:[%s1900 + $0x18] sm:$0xff]
        %v1905 = vld [vmem:[%s1900 + $0x20] sm:$0xff]
        %v1906 = vld [vmem:[%s1900 + $0x28] sm:$0xff]
        %v1907 = vld [vmem:[%s1900 + $0x30] sm:$0xff]
        %v1908 = vld [vmem:[%s1900 + $0x38] sm:$0xff]
        %v1909 = vld [vmem:[%s1900 + $0x40] sm:$0xff]
        %v1910 = vld [vmem:[%s1900 + $0x48] sm:$0xff]
        %v1911 = vld [vmem:[%s1900 + $0x50] sm:$0xff]
        %v1912 = vld [vmem:[%s1900 + $0x58] sm:$0xff]
        %v1913 = vld [vmem:[%s1900 + $0x60] sm:$0xff]
        %v1914 = vld [vmem:[%s1900 + $0x68] sm:$0xff]
        %v1915 = vld [vmem:[%s1900 + $0x70] sm:$0xff]
        %v1916 = vld [vmem:[%s1900 + $0x78] sm:$0xff]
        %1917 = vmatprep.subr.mxu0 0.0
        %1918 = vmatpush1.msra.mxu0 %v1901
        %1919 = vmatprep.subr.mxu0 0.0
        %1920 = vmatpush1.msra.mxu0 %v1902
        %1921 = vmatprep.subr.mxu0 0.0
        %1922 = vmatpush1.msra.mxu0 %v1903
        %1923 = vmatprep.subr.mxu0 0.0
        %1924 = vmatpush1.msra.mxu0 %v1904
        %1925 = vmatprep.subr.mxu0 0.0
        %1926 = vmatpush1.msra.mxu0 %v1905
        %1927 = vmatprep.subr.mxu0 0.0
        %1928 = vmatpush1.msra.mxu0 %v1906
        %1929 = vmatprep.subr.mxu0 0.0
        %1930 = vmatpush1.msra.mxu0 %v1907
        %1931 = vmatprep.subr.mxu0 0.0
        %1932 = vmatpush1.msra.mxu0 %v1908
        %1933 = vmatprep.subr.mxu0 0.0
        %1934 = vmatpush1.msra.mxu0 %v1909
        %1935 = vmatprep.subr.mxu0 0.0
        %1936 = vmatpush1.msra.mxu0 %v1910
        %1937 = vmatprep.subr.mxu0 0.0
        %1938 = vmatpush1.msra.mxu0 %v1911
        %1939 = vmatprep.subr.mxu0 0.0
        %1940 = vmatpush1.msra.mxu0 %v1912
        %1941 = vmatprep.subr.mxu0 0.0
        %1942 = vmatpush1.msra.mxu0 %v1913
        %1943 = vmatprep.subr.mxu0 0.0
        %1944 = vmatpush1.msra.mxu0 %v1914
        %1945 = vmatprep.subr.mxu0 0.0
        %1946 = vmatpush1.msra.mxu0 %v1915
        %1947 = vmatprep.subr.mxu0 0.0
        %1948 = vmatpush1.msra.mxu0 %v1916
        %1949 = vmatprep.subr.mxu0 0.0
        %1950 = vmatpush1.msra.mxu0 0.0
        %1951 = vmatprep.subr.mxu0 0.0
        %1952 = vmatpush1.msra.mxu0 0.0
        %1953 = vmatprep.subr.mxu0 0.0
        %1954 = vmatpush1.msra.mxu0 0.0
        %1955 = vmatprep.subr.mxu0 0.0
        %1956 = vmatpush1.msra.mxu0 0.0
        %1957 = vmatprep.subr.mxu0 0.0
        %1958 = vmatpush1.msra.mxu0 0.0
        %1959 = vmatprep.subr.mxu0 0.0
        %1960 = vmatpush1.msra.mxu0 0.0
        %1961 = vmatprep.subr.mxu0 0.0
        %1962 = vmatpush1.msra.mxu0 0.0
        %1963 = vmatprep.subr.mxu0 0.0
        %1964 = vmatpush1.msra.mxu0 0.0
        %1965 = vmatprep.subr.mxu0 0.0
        %1966 = vmatpush1.msra.mxu0 0.0
        %1967 = vmatprep.subr.mxu0 0.0
        %1968 = vmatpush1.msra.mxu0 0.0
        %1969 = vmatprep.subr.mxu0 0.0
        %1970 = vmatpush1.msra.mxu0 0.0
        %1971 = vmatprep.subr.mxu0 0.0
        %1972 = vmatpush1.msra.mxu0 0.0
        %1973 = vmatprep.subr.mxu0 0.0
        %1974 = vmatpush1.msra.mxu0 0.0
        %1975 = vmatprep.subr.mxu0 0.0
        %1976 = vmatpush1.msra.mxu0 0.0
        %1977 = vmatprep.subr.mxu0 0.0
        %1978 = vmatpush1.msra.mxu0 0.0
        %1979 = vmatprep.subr.mxu0 0.0
        %1980 = vmatpush1.msra.mxu0 0.0
        %1981 = vmatprep.mubr.f32.mxu0 0.0
        %1982 = vmatmul.mubr.f32.gmra.mrb[0].mxu0 %v1772
        %v1983 = vpop.f32.mrb[0].mxu0
        %v1984 = vadd.f32 0.0, %v1983
        %v1985 = vpop.f32.mrb[0].mxu0
        %1986 = vmatprep.mubr.f32.mxu0 0.0
        %1987 = vmatmul.mubr.f32.gmra.mrb[0].mxu0 %v1773
        %v1988 = vpop.f32.mrb[0].mxu0
        %v1989 = vadd.f32 0.0, %v1988
        %v1990 = vpop.f32.mrb[0].mxu0
        %1991 = vmatprep.mubr.f32.mxu0 0.0
        %1992 = vmatmul.mubr.f32.gmra.mrb[0].mxu0 %v1774
        %v1993 = vpop.f32.mrb[0].mxu0
        %v1994 = vadd.f32 0.0, %v1993
        %v1995 = vpop.f32.mrb[0].mxu0
        %1996 = vmatprep.mubr.f32.mxu0 0.0
        %1997 = vmatmul.mubr.f32.gmra.mrb[0].mxu0 %v1775
        %v1998 = vpop.f32.mrb[0].mxu0
        %v1999 = vadd.f32 0.0, %v1998
        %v2000 = vpop.f32.mrb[0].mxu0
        %2001 = vmatprep.mubr.f32.mxu0 0.0
        %2002 = vmatmul.mubr.f32.gmra.mrb[0].mxu0 %v1776
        %v2003 = vpop.f32.mrb[0].mxu0
        %v2004 = vadd.f32 0.0, %v2003
        %v2005 = vpop.f32.mrb[0].mxu0
        %2006 = vmatprep.mubr.f32.mxu0 0.0
        %2007 = vmatmul.mubr.f32.gmra.mrb[0].mxu0 %v1777
        %v2008 = vpop.f32.mrb[0].mxu0
        %v2009 = vadd.f32 0.0, %v2008
        %v2010 = vpop.f32.mrb[0].mxu0
        %2011 = vmatprep.mubr.f32.mxu0 0.0
        %2012 = vmatmul.mubr.f32.gmra.mrb[0].mxu0 %v1778
        %v2013 = vpop.f32.mrb[0].mxu0
        %v2014 = vadd.f32 0.0, %v2013
        %v2015 = vpop.f32.mrb[0].mxu0
        %2016 = vmatprep.mubr.f32.mxu0 0.0
        %2017 = vmatmul.mubr.f32.gmra.mrb[0].mxu0 %v1779
        %v2018 = vpop.f32.mrb[0].mxu0
        %v2019 = vadd.f32 0.0, %v2018
        %v2020 = vpop.f32.mrb[0].mxu0
        %2021 = vmatprep.mubr.f32.mxu0 0.0
        %2022 = vmatmul.mubr.f32.gmra.mrb[0].mxu0 %v1780
        %v2023 = vpop.f32.mrb[0].mxu0
        %v2024 = vadd.f32 0.0, %v2023
        %v2025 = vpop.f32.mrb[0].mxu0
        %2026 = vmatprep.mubr.f32.mxu0 0.0
        %2027 = vmatmul.mubr.f32.gmra.mrb[0].mxu0 %v1781
        %v2028 = vpop.f32.mrb[0].mxu0
        %v2029 = vadd.f32 0.0, %v2028
        %v2030 = vpop.f32.mrb[0].mxu0
        %2031 = vmatprep.mubr.f32.mxu0 0.0
        %2032 = vmatmul.mubr.f32.gmra.mrb[0].mxu0 %v1782
        %v2033 = vpop.f32.mrb[0].mxu0
        %v2034 = vadd.f32 0.0, %v2033
        %v2035 = vpop.f32.mrb[0].mxu0
        %2036 = vmatprep.mubr.f32.mxu0 0.0
        %2037 = vmatmul.mubr.f32.gmra.mrb[0].mxu0 %v1783
        %v2038 = vpop.f32.mrb[0].mxu0
        %v2039 = vadd.f32 0.0, %v2038
        %v2040 = vpop.f32.mrb[0].mxu0
        %2041 = vmatprep.mubr.f32.mxu0 0.0
        %2042 = vmatmul.mubr.f32.gmra.mrb[0].mxu0 %v1784
        %v2043 = vpop.f32.mrb[0].mxu0
        %v2044 = vadd.f32 0.0, %v2043
        %v2045 = vpop.f32.mrb[0].mxu0
        %2046 = vmatprep.mubr.f32.mxu0 0.0
        %2047 = vmatmul.mubr.f32.gmra.mrb[0].mxu0 %v1785
        %v2048 = vpop.f32.mrb[0].mxu0
        %v2049 = vadd.f32 0.0, %v2048
        %v2050 = vpop.f32.mrb[0].mxu0
        %2051 = vmatprep.mubr.f32.mxu0 0.0
        %2052 = vmatmul.mubr.f32.gmra.mrb[0].mxu0 %v1786
        %v2053 = vpop.f32.mrb[0].mxu0
        %v2054 = vadd.f32 0.0, %v2053
        %v2055 = vpop.f32.mrb[0].mxu0
        %2056 = vmatprep.mubr.f32.mxu0 0.0
        %2057 = vmatmul.mubr.f32.gmra.mrb[0].mxu0 %v1787
        %v2058 = vpop.f32.mrb[0].mxu0
        %v2059 = vadd.f32 0.0, %v2058
        %v2060 = vpop.f32.mrb[0].mxu0
        %2061 = vdwg.mxu0
        %2062 = vmatprep.subr.mxu0 0.0
        %2063 = vmatpush1.msra.mxu0 %v1884
        %2064 = vmatprep.subr.mxu0 0.0
        %2065 = vmatpush1.msra.mxu0 %v1885
        %2066 = vmatprep.subr.mxu0 0.0
        %2067 = vmatpush1.msra.mxu0 %v1886
        %2068 = vmatprep.subr.mxu0 0.0
        %2069 = vmatpush1.msra.mxu0 %v1887
        %2070 = vmatprep.subr.mxu0 0.0
        %2071 = vmatpush1.msra.mxu0 %v1888
        %2072 = vmatprep.subr.mxu0 0.0
        %2073 = vmatpush1.msra.mxu0 %v1889
        %2074 = vmatprep.subr.mxu0 0.0
        %2075 = vmatpush1.msra.mxu0 %v1890
        %2076 = vmatprep.subr.mxu0 0.0
        %2077 = vmatpush1.msra.mxu0 %v1891
        %2078 = vmatprep.subr.mxu0 0.0
        %2079 = vmatpush1.msra.mxu0 %v1892
        %2080 = vmatprep.subr.mxu0 0.0
        %2081 = vmatpush1.msra.mxu0 %v1893
        %2082 = vmatprep.subr.mxu0 0.0
        %2083 = vmatpush1.msra.mxu0 %v1894
        %2084 = vmatprep.subr.mxu0 0.0
        %2085 = vmatpush1.msra.mxu0 %v1895
        %2086 = vmatprep.subr.mxu0 0.0
        %2087 = vmatpush1.msra.mxu0 %v1896
        %2088 = vmatprep.subr.mxu0 0.0
        %2089 = vmatpush1.msra.mxu0 %v1897
        %2090 = vmatprep.subr.mxu0 0.0
        %2091 = vmatpush1.msra.mxu0 %v1898
        %2092 = vmatprep.subr.mxu0 0.0
        %2093 = vmatpush1.msra.mxu0 %v1899
        %2094 = vmatprep.subr.mxu0 0.0
        %2095 = vmatpush1.msra.mxu0 0.0
        %2096 = vmatprep.subr.mxu0 0.0
        %2097 = vmatpush1.msra.mxu0 0.0
        %2098 = vmatprep.subr.mxu0 0.0
        %2099 = vmatpush1.msra.mxu0 0.0
        %2100 = vmatprep.subr.mxu0 0.0
        %2101 = vmatpush1.msra.mxu0 0.0
        %2102 = vmatprep.subr.mxu0 0.0
        %2103 = vmatpush1.msra.mxu0 0.0
        %2104 = vmatprep.subr.mxu0 0.0
        %2105 = vmatpush1.msra.mxu0 0.0
        %2106 = vmatprep.subr.mxu0 0.0
        %2107 = vmatpush1.msra.mxu0 0.0
        %2108 = vmatprep.subr.mxu0 0.0
        %2109 = vmatpush1.msra.mxu0 0.0
        %2110 = vmatprep.subr.mxu0 0.0
        %2111 = vmatpush1.msra.mxu0 0.0
        %2112 = vmatprep.subr.mxu0 0.0
        %2113 = vmatpush1.msra.mxu0 0.0
        %2114 = vmatprep.subr.mxu0 0.0
        %2115 = vmatpush1.msra.mxu0 0.0
        %2116 = vmatprep.subr.mxu0 0.0
        %2117 = vmatpush1.msra.mxu0 0.0
        %2118 = vmatprep.subr.mxu0 0.0
        %2119 = vmatpush1.msra.mxu0 0.0
        %2120 = vmatprep.subr.mxu0 0.0
        %2121 = vmatpush1.msra.mxu0 0.0
        %2122 = vmatprep.subr.mxu0 0.0
        %2123 = vmatpush1.msra.mxu0 0.0
        %2124 = vmatprep.subr.mxu0 0.0
        %2125 = vmatpush1.msra.mxu0 0.0
        %2126 = vmatprep.mubr.f32.mxu0 0.0
        %2127 = vmatmul.mubr.f32.gmra.mrb[0].mxu0 %v1820
        %v2128 = vpop.f32.mrb[0].mxu0
        %v2129 = vadd.f32 %v1984, %v2128
        %v2130 = vpop.f32.mrb[0].mxu0
        %2131 = vmatprep.mubr.f32.mxu0 0.0
        %2132 = vmatmul.mubr.f32.gmra.mrb[0].mxu0 %v1821
        %v2133 = vpop.f32.mrb[0].mxu0
        %v2134 = vadd.f32 %v1989, %v2133
        %v2135 = vpop.f32.mrb[0].mxu0
        %2136 = vmatprep.mubr.f32.mxu0 0.0
        %2137 = vmatmul.mubr.f32.gmra.mrb[0].mxu0 %v1822
        %v2138 = vpop.f32.mrb[0].mxu0
        %v2139 = vadd.f32 %v1994, %v2138
        %v2140 = vpop.f32.mrb[0].mxu0
        %2141 = vmatprep.mubr.f32.mxu0 0.0
        %2142 = vmatmul.mubr.f32.gmra.mrb[0].mxu0 %v1823
        %v2143 = vpop.f32.mrb[0].mxu0
        %v2144 = vadd.f32 %v1999, %v2143
        %v2145 = vpop.f32.mrb[0].mxu0
        %2146 = vmatprep.mubr.f32.mxu0 0.0
        %2147 = vmatmul.mubr.f32.gmra.mrb[0].mxu0 %v1824
        %v2148 = vpop.f32.mrb[0].mxu0
        %v2149 = vadd.f32 %v2004, %v2148
        %v2150 = vpop.f32.mrb[0].mxu0
        %2151 = vmatprep.mubr.f32.mxu0 0.0
        %2152 = vmatmul.mubr.f32.gmra.mrb[0].mxu0 %v1825
        %v2153 = vpop.f32.mrb[0].mxu0
        %v2154 = vadd.f32 %v2009, %v2153
        %v2155 = vpop.f32.mrb[0].mxu0
        %2156 = vmatprep.mubr.f32.mxu0 0.0
        %2157 = vmatmul.mubr.f32.gmra.mrb[0].mxu0 %v1826
        %v2158 = vpop.f32.mrb[0].mxu0
        %v2159 = vadd.f32 %v2014, %v2158
        %v2160 = vpop.f32.mrb[0].mxu0
        %2161 = vmatprep.mubr.f32.mxu0 0.0
        %2162 = vmatmul.mubr.f32.gmra.mrb[0].mxu0 %v1827
        %v2163 = vpop.f32.mrb[0].mxu0
        %v2164 = vadd.f32 %v2019, %v2163
        %v2165 = vpop.f32.mrb[0].mxu0
        %2166 = vmatprep.mubr.f32.mxu0 0.0
        %2167 = vmatmul.mubr.f32.gmra.mrb[0].mxu0 %v1828
        %v2168 = vpop.f32.mrb[0].mxu0
        %v2169 = vadd.f32 %v2024, %v2168
        %v2170 = vpop.f32.mrb[0].mxu0
        %2171 = vmatprep.mubr.f32.mxu0 0.0
        %2172 = vmatmul.mubr.f32.gmra.mrb[0].mxu0 %v1829
        %v2173 = vpop.f32.mrb[0].mxu0
        %v2174 = vadd.f32 %v2029, %v2173
        %v2175 = vpop.f32.mrb[0].mxu0
        %2176 = vmatprep.mubr.f32.mxu0 0.0
        %2177 = vmatmul.mubr.f32.gmra.mrb[0].mxu0 %v1830
        %v2178 = vpop.f32.mrb[0].mxu0
        %v2179 = vadd.f32 %v2034, %v2178
        %v2180 = vpop.f32.mrb[0].mxu0
        %2181 = vmatprep.mubr.f32.mxu0 0.0
        %2182 = vmatmul.mubr.f32.gmra.mrb[0].mxu0 %v1831
        %v2183 = vpop.f32.mrb[0].mxu0
        %v2184 = vadd.f32 %v2039, %v2183
        %v2185 = vpop.f32.mrb[0].mxu0
        %2186 = vmatprep.mubr.f32.mxu0 0.0
        %2187 = vmatmul.mubr.f32.gmra.mrb[0].mxu0 %v1832
        %v2188 = vpop.f32.mrb[0].mxu0
        %v2189 = vadd.f32 %v2044, %v2188
        %v2190 = vpop.f32.mrb[0].mxu0
        %2191 = vmatprep.mubr.f32.mxu0 0.0
        %2192 = vmatmul.mubr.f32.gmra.mrb[0].mxu0 %v1833
        %v2193 = vpop.f32.mrb[0].mxu0
        %v2194 = vadd.f32 %v2049, %v2193
        %v2195 = vpop.f32.mrb[0].mxu0
        %2196 = vmatprep.mubr.f32.mxu0 0.0
        %2197 = vmatmul.mubr.f32.gmra.mrb[0].mxu0 %v1834
        %v2198 = vpop.f32.mrb[0].mxu0
        %v2199 = vadd.f32 %v2054, %v2198
        %v2200 = vpop.f32.mrb[0].mxu0
        %2201 = vmatprep.mubr.f32.mxu0 0.0
        %2202 = vmatmul.mubr.f32.gmra.mrb[0].mxu0 %v1835
        %v2203 = vpop.f32.mrb[0].mxu0
        %v2204 = vadd.f32 %v2059, %v2203
        %v2205 = vpop.f32.mrb[0].mxu0
        %2206 = vdwg.mxu0
        %s2207 = scalar_lea.vmem %s6, 256
        %v2208 = vld [vmem:[%s2207] sm:$0xff]
        %v2209 = vld [vmem:[%s2207 + $0x8] sm:$0xff]
        %v2210 = vld [vmem:[%s2207 + $0x10] sm:$0xff]
        %v2211 = vld [vmem:[%s2207 + $0x18] sm:$0xff]
        %v2212 = vld [vmem:[%s2207 + $0x20] sm:$0xff]
        %v2213 = vld [vmem:[%s2207 + $0x28] sm:$0xff]
        %v2214 = vld [vmem:[%s2207 + $0x30] sm:$0xff]
        %v2215 = vld [vmem:[%s2207 + $0x38] sm:$0xff]
        %v2216 = vld [vmem:[%s2207 + $0x40] sm:$0xff]
        %v2217 = vld [vmem:[%s2207 + $0x48] sm:$0xff]
        %v2218 = vld [vmem:[%s2207 + $0x50] sm:$0xff]
        %v2219 = vld [vmem:[%s2207 + $0x58] sm:$0xff]
        %v2220 = vld [vmem:[%s2207 + $0x60] sm:$0xff]
        %v2221 = vld [vmem:[%s2207 + $0x68] sm:$0xff]
        %v2222 = vld [vmem:[%s2207 + $0x70] sm:$0xff]
        %v2223 = vld [vmem:[%s2207 + $0x78] sm:$0xff]
        %2224 = vmatprep.subr.mxu0 0.0
        %2225 = vmatpush1.msra.mxu0 %v2208
        %2226 = vmatprep.subr.mxu0 0.0
        %2227 = vmatpush1.msra.mxu0 %v2209
        %2228 = vmatprep.subr.mxu0 0.0
        %2229 = vmatpush1.msra.mxu0 %v2210
        %2230 = vmatprep.subr.mxu0 0.0
        %2231 = vmatpush1.msra.mxu0 %v2211
        %2232 = vmatprep.subr.mxu0 0.0
        %2233 = vmatpush1.msra.mxu0 %v2212
        %2234 = vmatprep.subr.mxu0 0.0
        %2235 = vmatpush1.msra.mxu0 %v2213
        %2236 = vmatprep.subr.mxu0 0.0
        %2237 = vmatpush1.msra.mxu0 %v2214
        %2238 = vmatprep.subr.mxu0 0.0
        %2239 = vmatpush1.msra.mxu0 %v2215
        %2240 = vmatprep.subr.mxu0 0.0
        %2241 = vmatpush1.msra.mxu0 %v2216
        %2242 = vmatprep.subr.mxu0 0.0
        %2243 = vmatpush1.msra.mxu0 %v2217
        %2244 = vmatprep.subr.mxu0 0.0
        %2245 = vmatpush1.msra.mxu0 %v2218
        %2246 = vmatprep.subr.mxu0 0.0
        %2247 = vmatpush1.msra.mxu0 %v2219
        %2248 = vmatprep.subr.mxu0 0.0
        %2249 = vmatpush1.msra.mxu0 %v2220
        %2250 = vmatprep.subr.mxu0 0.0
        %2251 = vmatpush1.msra.mxu0 %v2221
        %2252 = vmatprep.subr.mxu0 0.0
        %2253 = vmatpush1.msra.mxu0 %v2222
        %2254 = vmatprep.subr.mxu0 0.0
        %2255 = vmatpush1.msra.mxu0 %v2223
        %2256 = vmatprep.subr.mxu0 0.0
        %2257 = vmatpush1.msra.mxu0 0.0
        %2258 = vmatprep.subr.mxu0 0.0
        %2259 = vmatpush1.msra.mxu0 0.0
        %2260 = vmatprep.subr.mxu0 0.0
        %2261 = vmatpush1.msra.mxu0 0.0
        %2262 = vmatprep.subr.mxu0 0.0
        %2263 = vmatpush1.msra.mxu0 0.0
        %2264 = vmatprep.subr.mxu0 0.0
        %2265 = vmatpush1.msra.mxu0 0.0
        %2266 = vmatprep.subr.mxu0 0.0
        %2267 = vmatpush1.msra.mxu0 0.0
        %2268 = vmatprep.subr.mxu0 0.0
        %2269 = vmatpush1.msra.mxu0 0.0
        %2270 = vmatprep.subr.mxu0 0.0
        %2271 = vmatpush1.msra.mxu0 0.0
        %2272 = vmatprep.subr.mxu0 0.0
        %2273 = vmatpush1.msra.mxu0 0.0
        %2274 = vmatprep.subr.mxu0 0.0
        %2275 = vmatpush1.msra.mxu0 0.0
        %2276 = vmatprep.subr.mxu0 0.0
        %2277 = vmatpush1.msra.mxu0 0.0
        %2278 = vmatprep.subr.mxu0 0.0
        %2279 = vmatpush1.msra.mxu0 0.0
        %2280 = vmatprep.subr.mxu0 0.0
        %2281 = vmatpush1.msra.mxu0 0.0
        %2282 = vmatprep.subr.mxu0 0.0
        %2283 = vmatpush1.msra.mxu0 0.0
        %2284 = vmatprep.subr.mxu0 0.0
        %2285 = vmatpush1.msra.mxu0 0.0
        %2286 = vmatprep.subr.mxu0 0.0
        %2287 = vmatpush1.msra.mxu0 0.0
        %2288 = vmatprep.mubr.f32.mxu0 0.0
        %2289 = vmatmul.mubr.f32.gmra.mrb[0].mxu0 %v1868
        %v2290 = vpop.f32.mrb[0].mxu0
        %v2291 = vadd.f32 0.0, %v2290
        %v2292 = vpop.f32.mrb[0].mxu0
        %2293 = vmatprep.mubr.f32.mxu0 0.0
        %2294 = vmatmul.mubr.f32.gmra.mrb[0].mxu0 %v1869
        %v2295 = vpop.f32.mrb[0].mxu0
        %v2296 = vadd.f32 0.0, %v2295
        %v2297 = vpop.f32.mrb[0].mxu0
        %2298 = vmatprep.mubr.f32.mxu0 0.0
        %2299 = vmatmul.mubr.f32.gmra.mrb[0].mxu0 %v1870
        %v2300 = vpop.f32.mrb[0].mxu0
        %v2301 = vadd.f32 0.0, %v2300
        %v2302 = vpop.f32.mrb[0].mxu0
        %2303 = vmatprep.mubr.f32.mxu0 0.0
        %2304 = vmatmul.mubr.f32.gmra.mrb[0].mxu0 %v1871
        %v2305 = vpop.f32.mrb[0].mxu0
        %v2306 = vadd.f32 0.0, %v2305
        %v2307 = vpop.f32.mrb[0].mxu0
        %2308 = vmatprep.mubr.f32.mxu0 0.0
        %2309 = vmatmul.mubr.f32.gmra.mrb[0].mxu0 %v1872
        %v2310 = vpop.f32.mrb[0].mxu0
        %v2311 = vadd.f32 0.0, %v2310
        %v2312 = vpop.f32.mrb[0].mxu0
        %2313 = vmatprep.mubr.f32.mxu0 0.0
        %2314 = vmatmul.mubr.f32.gmra.mrb[0].mxu0 %v1873
        %v2315 = vpop.f32.mrb[0].mxu0
        %v2316 = vadd.f32 0.0, %v2315
        %v2317 = vpop.f32.mrb[0].mxu0
        %2318 = vmatprep.mubr.f32.mxu0 0.0
        %2319 = vmatmul.mubr.f32.gmra.mrb[0].mxu0 %v1874
        %v2320 = vpop.f32.mrb[0].mxu0
        %v2321 = vadd.f32 0.0, %v2320
        %v2322 = vpop.f32.mrb[0].mxu0
        %2323 = vmatprep.mubr.f32.mxu0 0.0
        %2324 = vmatmul.mubr.f32.gmra.mrb[0].mxu0 %v1875
        %v2325 = vpop.f32.mrb[0].mxu0
        %v2326 = vadd.f32 0.0, %v2325
        %v2327 = vpop.f32.mrb[0].mxu0
        %2328 = vmatprep.mubr.f32.mxu0 0.0
        %2329 = vmatmul.mubr.f32.gmra.mrb[0].mxu0 %v1876
        %v2330 = vpop.f32.mrb[0].mxu0
        %v2331 = vadd.f32 0.0, %v2330
        %v2332 = vpop.f32.mrb[0].mxu0
        %2333 = vmatprep.mubr.f32.mxu0 0.0
        %2334 = vmatmul.mubr.f32.gmra.mrb[0].mxu0 %v1877
        %v2335 = vpop.f32.mrb[0].mxu0
        %v2336 = vadd.f32 0.0, %v2335
        %v2337 = vpop.f32.mrb[0].mxu0
        %2338 = vmatprep.mubr.f32.mxu0 0.0
        %2339 = vmatmul.mubr.f32.gmra.mrb[0].mxu0 %v1878
        %v2340 = vpop.f32.mrb[0].mxu0
        %v2341 = vadd.f32 0.0, %v2340
        %v2342 = vpop.f32.mrb[0].mxu0
        %2343 = vmatprep.mubr.f32.mxu0 0.0
        %2344 = vmatmul.mubr.f32.gmra.mrb[0].mxu0 %v1879
        %v2345 = vpop.f32.mrb[0].mxu0
        %v2346 = vadd.f32 0.0, %v2345
        %v2347 = vpop.f32.mrb[0].mxu0
        %2348 = vmatprep.mubr.f32.mxu0 0.0
        %2349 = vmatmul.mubr.f32.gmra.mrb[0].mxu0 %v1880
        %v2350 = vpop.f32.mrb[0].mxu0
        %v2351 = vadd.f32 0.0, %v2350
        %v2352 = vpop.f32.mrb[0].mxu0
        %2353 = vmatprep.mubr.f32.mxu0 0.0
        %2354 = vmatmul.mubr.f32.gmra.mrb[0].mxu0 %v1881
        %v2355 = vpop.f32.mrb[0].mxu0
        %v2356 = vadd.f32 0.0, %v2355
        %v2357 = vpop.f32.mrb[0].mxu0
        %2358 = vmatprep.mubr.f32.mxu0 0.0
        %2359 = vmatmul.mubr.f32.gmra.mrb[0].mxu0 %v1882
        %v2360 = vpop.f32.mrb[0].mxu0
        %v2361 = vadd.f32 0.0, %v2360
        %v2362 = vpop.f32.mrb[0].mxu0
        %2363 = vmatprep.mubr.f32.mxu0 0.0
        %2364 = vmatmul.mubr.f32.gmra.mrb[0].mxu0 %v1883
        %v2365 = vpop.f32.mrb[0].mxu0
        %v2366 = vadd.f32 0.0, %v2365
        %v2367 = vpop.f32.mrb[0].mxu0
        %2368 = vdwg.mxu0
        %v2369 = vadd.f32 %v2129, %v2291
        %v2370 = vadd.f32 %v2134, %v2296
        %v2371 = vadd.f32 %v2139, %v2301
        %v2372 = vadd.f32 %v2144, %v2306
        %v2373 = vadd.f32 %v2149, %v2311
        %v2374 = vadd.f32 %v2154, %v2316
        %v2375 = vadd.f32 %v2159, %v2321
        %v2376 = vadd.f32 %v2164, %v2326
        %v2377 = vadd.f32 %v2169, %v2331
        %v2378 = vadd.f32 %v2174, %v2336
        %v2379 = vadd.f32 %v2179, %v2341
        %v2380 = vadd.f32 %v2184, %v2346
        %v2381 = vadd.f32 %v2189, %v2351
        %v2382 = vadd.f32 %v2194, %v2356
        %v2383 = vadd.f32 %v2199, %v2361
        %v2384 = vadd.f32 %v2204, %v2366
        %v2385 = vld [vmem:[%s7] sm:$0x1]
        %v2387 = vlaneseq
        %v2388 = vshrl.u32 %v2387, 7
        %v2389 = vsub.s32 0, %v2388
        %v2390 = vrot.slane %v2385, %v2389
        %v2392 = vadd.f32 %v2369, %v2390
        %v2393 = vadd.f32 %v2370, %v2390
        %v2394 = vadd.f32 %v2371, %v2390
        %v2395 = vadd.f32 %v2372, %v2390
        %v2396 = vadd.f32 %v2373, %v2390
        %v2397 = vadd.f32 %v2374, %v2390
        %v2398 = vadd.f32 %v2375, %v2390
        %v2399 = vadd.f32 %v2376, %v2390
        %v2400 = vadd.f32 %v2377, %v2390
        %v2401 = vadd.f32 %v2378, %v2390
        %v2402 = vadd.f32 %v2379, %v2390
        %v2403 = vadd.f32 %v2380, %v2390
        %v2404 = vadd.f32 %v2381, %v2390
        %v2405 = vadd.f32 %v2382, %v2390
        %v2406 = vadd.f32 %v2383, %v2390
        %v2407 = vadd.f32 %v2384, %v2390
        %v2408 = vmax.f32 %v2392, 0.0
        %v2409 = vmax.f32 %v2393, 0.0
        %v2410 = vmax.f32 %v2394, 0.0
        %v2411 = vmax.f32 %v2395, 0.0
        %v2412 = vmax.f32 %v2396, 0.0
        %v2413 = vmax.f32 %v2397, 0.0
        %v2414 = vmax.f32 %v2398, 0.0
        %v2415 = vmax.f32 %v2399, 0.0
        %v2416 = vmax.f32 %v2400, 0.0
        %v2417 = vmax.f32 %v2401, 0.0
        %v2418 = vmax.f32 %v2402, 0.0
        %v2419 = vmax.f32 %v2403, 0.0
        %v2420 = vmax.f32 %v2404, 0.0
        %v2421 = vmax.f32 %v2405, 0.0
        %v2422 = vmax.f32 %v2406, 0.0
        %v2423 = vmax.f32 %v2407, 0.0
        %2424 = vadd.xlane.f32.xlu0 %v2408
        %v2425 = vpop.xlane.xlu0 %2424
        %2426 = vadd.xlane.f32.xlu0 %v2409
        %v2427 = vpop.xlane.xlu0 %2426
        %2428 = vadd.xlane.f32.xlu0 %v2410
        %v2429 = vpop.xlane.xlu0 %2428
        %2430 = vadd.xlane.f32.xlu0 %v2411
        %v2431 = vpop.xlane.xlu0 %2430
        %2432 = vadd.xlane.f32.xlu0 %v2412
        %v2433 = vpop.xlane.xlu0 %2432
        %2434 = vadd.xlane.f32.xlu0 %v2413
        %v2435 = vpop.xlane.xlu0 %2434
        %2436 = vadd.xlane.f32.xlu0 %v2414
        %v2437 = vpop.xlane.xlu0 %2436
        %2438 = vadd.xlane.f32.xlu0 %v2415
        %v2439 = vpop.xlane.xlu0 %2438
        %2440 = vadd.xlane.f32.xlu0 %v2416
        %v2441 = vpop.xlane.xlu0 %2440
        %2442 = vadd.xlane.f32.xlu0 %v2417
        %v2443 = vpop.xlane.xlu0 %2442
        %2444 = vadd.xlane.f32.xlu0 %v2418
        %v2445 = vpop.xlane.xlu0 %2444
        %2446 = vadd.xlane.f32.xlu0 %v2419
        %v2447 = vpop.xlane.xlu0 %2446
        %2448 = vadd.xlane.f32.xlu0 %v2420
        %v2449 = vpop.xlane.xlu0 %2448
        %2450 = vadd.xlane.f32.xlu0 %v2421
        %v2451 = vpop.xlane.xlu0 %2450
        %2452 = vadd.xlane.f32.xlu0 %v2422
        %v2453 = vpop.xlane.xlu0 %2452
        %2454 = vadd.xlane.f32.xlu0 %v2423
        %v2455 = vpop.xlane.xlu0 %2454
        %v2456 = vmul.f32 %v2425, 0.0125
        %v2457 = vmul.f32 %v2427, 0.0125
        %v2458 = vmul.f32 %v2429, 0.0125
        %v2459 = vmul.f32 %v2431, 0.0125
        %v2460 = vmul.f32 %v2433, 0.0125
        %v2461 = vmul.f32 %v2435, 0.0125
        %v2462 = vmul.f32 %v2437, 0.0125
        %v2463 = vmul.f32 %v2439, 0.0125
        %v2464 = vmul.f32 %v2441, 0.0125
        %v2465 = vmul.f32 %v2443, 0.0125
        %v2466 = vmul.f32 %v2445, 0.0125
        %v2467 = vmul.f32 %v2447, 0.0125
        %v2468 = vmul.f32 %v2449, 0.0125
        %v2469 = vmul.f32 %v2451, 0.0125
        %v2470 = vmul.f32 %v2453, 0.0125
        %v2471 = vmul.f32 %v2455, 0.0125
        %v2472 = vmul.f32 %v2408, %v2408
        %v2473 = vmul.f32 %v2409, %v2409
        %v2474 = vmul.f32 %v2410, %v2410
        %v2475 = vmul.f32 %v2411, %v2411
        %v2476 = vmul.f32 %v2412, %v2412
        %v2477 = vmul.f32 %v2413, %v2413
        %v2478 = vmul.f32 %v2414, %v2414
        %v2479 = vmul.f32 %v2415, %v2415
        %v2480 = vmul.f32 %v2416, %v2416
        %v2481 = vmul.f32 %v2417, %v2417
        %v2482 = vmul.f32 %v2418, %v2418
        %v2483 = vmul.f32 %v2419, %v2419
        %v2484 = vmul.f32 %v2420, %v2420
        %v2485 = vmul.f32 %v2421, %v2421
        %v2486 = vmul.f32 %v2422, %v2422
        %v2487 = vmul.f32 %v2423, %v2423
        %2488 = vadd.xlane.f32.xlu0 %v2472
        %v2489 = vpop.xlane.xlu0 %2488
        %2490 = vadd.xlane.f32.xlu0 %v2473
        %v2491 = vpop.xlane.xlu0 %2490
        %2492 = vadd.xlane.f32.xlu0 %v2474
        %v2493 = vpop.xlane.xlu0 %2492
        %2494 = vadd.xlane.f32.xlu0 %v2475
        %v2495 = vpop.xlane.xlu0 %2494
        %2496 = vadd.xlane.f32.xlu0 %v2476
        %v2497 = vpop.xlane.xlu0 %2496
        %2498 = vadd.xlane.f32.xlu0 %v2477
        %v2499 = vpop.xlane.xlu0 %2498
        %2500 = vadd.xlane.f32.xlu0 %v2478
        %v2501 = vpop.xlane.xlu0 %2500
        %2502 = vadd.xlane.f32.xlu0 %v2479
        %v2503 = vpop.xlane.xlu0 %2502
        %2504 = vadd.xlane.f32.xlu0 %v2480
        %v2505 = vpop.xlane.xlu0 %2504
        %2506 = vadd.xlane.f32.xlu0 %v2481
        %v2507 = vpop.xlane.xlu0 %2506
        %2508 = vadd.xlane.f32.xlu0 %v2482
        %v2509 = vpop.xlane.xlu0 %2508
        %2510 = vadd.xlane.f32.xlu0 %v2483
        %v2511 = vpop.xlane.xlu0 %2510
        %2512 = vadd.xlane.f32.xlu0 %v2484
        %v2513 = vpop.xlane.xlu0 %2512
        %2514 = vadd.xlane.f32.xlu0 %v2485
        %v2515 = vpop.xlane.xlu0 %2514
        %2516 = vadd.xlane.f32.xlu0 %v2486
        %v2517 = vpop.xlane.xlu0 %2516
        %2518 = vadd.xlane.f32.xlu0 %v2487
        %v2519 = vpop.xlane.xlu0 %2518
        %v2520 = vmul.f32 %v2489, 0.0125
        %v2521 = vmul.f32 %v2491, 0.0125
        %v2522 = vmul.f32 %v2493, 0.0125
        %v2523 = vmul.f32 %v2495, 0.0125
        %v2524 = vmul.f32 %v2497, 0.0125
        %v2525 = vmul.f32 %v2499, 0.0125
        %v2526 = vmul.f32 %v2501, 0.0125
        %v2527 = vmul.f32 %v2503, 0.0125
        %v2528 = vmul.f32 %v2505, 0.0125
        %v2529 = vmul.f32 %v2507, 0.0125
        %v2530 = vmul.f32 %v2509, 0.0125
        %v2531 = vmul.f32 %v2511, 0.0125
        %v2532 = vmul.f32 %v2513, 0.0125
        %v2533 = vmul.f32 %v2515, 0.0125
        %v2534 = vmul.f32 %v2517, 0.0125
        %v2535 = vmul.f32 %v2519, 0.0125
        %v2536 = vmul.f32 %v2456, %v2456
        %v2537 = vmul.f32 %v2457, %v2457
        %v2538 = vmul.f32 %v2458, %v2458
        %v2539 = vmul.f32 %v2459, %v2459
        %v2540 = vmul.f32 %v2460, %v2460
        %v2541 = vmul.f32 %v2461, %v2461
        %v2542 = vmul.f32 %v2462, %v2462
        %v2543 = vmul.f32 %v2463, %v2463
        %v2544 = vmul.f32 %v2464, %v2464
        %v2545 = vmul.f32 %v2465, %v2465
        %v2546 = vmul.f32 %v2466, %v2466
        %v2547 = vmul.f32 %v2467, %v2467
        %v2548 = vmul.f32 %v2468, %v2468
        %v2549 = vmul.f32 %v2469, %v2469
        %v2550 = vmul.f32 %v2470, %v2470
        %v2551 = vmul.f32 %v2471, %v2471
        %v2552 = vsub.f32 %v2520, %v2536
        %v2553 = vsub.f32 %v2521, %v2537
        %v2554 = vsub.f32 %v2522, %v2538
        %v2555 = vsub.f32 %v2523, %v2539
        %v2556 = vsub.f32 %v2524, %v2540
        %v2557 = vsub.f32 %v2525, %v2541
        %v2558 = vsub.f32 %v2526, %v2542
        %v2559 = vsub.f32 %v2527, %v2543
        %v2560 = vsub.f32 %v2528, %v2544
        %v2561 = vsub.f32 %v2529, %v2545
        %v2562 = vsub.f32 %v2530, %v2546
        %v2563 = vsub.f32 %v2531, %v2547
        %v2564 = vsub.f32 %v2532, %v2548
        %v2565 = vsub.f32 %v2533, %v2549
        %v2566 = vsub.f32 %v2534, %v2550
        %v2567 = vsub.f32 %v2535, %v2551
        %v2568 = vmax.f32 %v2552, 0.0
        %v2569 = vmax.f32 %v2553, 0.0
        %v2570 = vmax.f32 %v2554, 0.0
        %v2571 = vmax.f32 %v2555, 0.0
        %v2572 = vmax.f32 %v2556, 0.0
        %v2573 = vmax.f32 %v2557, 0.0
        %v2574 = vmax.f32 %v2558, 0.0
        %v2575 = vmax.f32 %v2559, 0.0
        %v2576 = vmax.f32 %v2560, 0.0
        %v2577 = vmax.f32 %v2561, 0.0
        %v2578 = vmax.f32 %v2562, 0.0
        %v2579 = vmax.f32 %v2563, 0.0
        %v2580 = vmax.f32 %v2564, 0.0
        %v2581 = vmax.f32 %v2565, 0.0
        %v2582 = vmax.f32 %v2566, 0.0
        %v2583 = vmax.f32 %v2567, 0.0
        %v2584 = vsub.f32 %v2408, %v2456
        %v2585 = vsub.f32 %v2409, %v2457
        %v2586 = vsub.f32 %v2410, %v2458
        %v2587 = vsub.f32 %v2411, %v2459
        %v2588 = vsub.f32 %v2412, %v2460
        %v2589 = vsub.f32 %v2413, %v2461
        %v2590 = vsub.f32 %v2414, %v2462
        %v2591 = vsub.f32 %v2415, %v2463
        %v2592 = vsub.f32 %v2416, %v2464
        %v2593 = vsub.f32 %v2417, %v2465
        %v2594 = vsub.f32 %v2418, %v2466
        %v2595 = vsub.f32 %v2419, %v2467
        %v2596 = vsub.f32 %v2420, %v2468
        %v2597 = vsub.f32 %v2421, %v2469
        %v2598 = vsub.f32 %v2422, %v2470
        %v2599 = vsub.f32 %v2423, %v2471
        %v2600 = vadd.f32 %v2568, 1e-05
        %v2601 = vadd.f32 %v2569, 1e-05
        %v2602 = vadd.f32 %v2570, 1e-05
        %v2603 = vadd.f32 %v2571, 1e-05
        %v2604 = vadd.f32 %v2572, 1e-05
        %v2605 = vadd.f32 %v2573, 1e-05
        %v2606 = vadd.f32 %v2574, 1e-05
        %v2607 = vadd.f32 %v2575, 1e-05
        %v2608 = vadd.f32 %v2576, 1e-05
        %v2609 = vadd.f32 %v2577, 1e-05
        %v2610 = vadd.f32 %v2578, 1e-05
        %v2611 = vadd.f32 %v2579, 1e-05
        %v2612 = vadd.f32 %v2580, 1e-05
        %v2613 = vadd.f32 %v2581, 1e-05
        %v2614 = vadd.f32 %v2582, 1e-05
        %v2615 = vadd.f32 %v2583, 1e-05
        %v2616 = vrsqrt.pop %v2600
        %v2617 = vrsqrt.pop %v2601
        %v2618 = vrsqrt.pop %v2602
        %v2619 = vrsqrt.pop %v2603
        %v2620 = vrsqrt.pop %v2604
        %v2621 = vrsqrt.pop %v2605
        %v2622 = vrsqrt.pop %v2606
        %v2623 = vrsqrt.pop %v2607
        %v2624 = vrsqrt.pop %v2608
        %v2625 = vrsqrt.pop %v2609
        %v2626 = vrsqrt.pop %v2610
        %v2627 = vrsqrt.pop %v2611
        %v2628 = vrsqrt.pop %v2612
        %v2629 = vrsqrt.pop %v2613
        %v2630 = vrsqrt.pop %v2614
        %v2631 = vrsqrt.pop %v2615
        %v2632 = vmul.f32 %v2584, %v2616
        %v2633 = vmul.f32 %v2585, %v2617
        %v2634 = vmul.f32 %v2586, %v2618
        %v2635 = vmul.f32 %v2587, %v2619
        %v2636 = vmul.f32 %v2588, %v2620
        %v2637 = vmul.f32 %v2589, %v2621
        %v2638 = vmul.f32 %v2590, %v2622
        %v2639 = vmul.f32 %v2591, %v2623
        %v2640 = vmul.f32 %v2592, %v2624
        %v2641 = vmul.f32 %v2593, %v2625
        %v2642 = vmul.f32 %v2594, %v2626
        %v2643 = vmul.f32 %v2595, %v2627
        %v2644 = vmul.f32 %v2596, %v2628
        %v2645 = vmul.f32 %v2597, %v2629
        %v2646 = vmul.f32 %v2598, %v2630
        %v2647 = vmul.f32 %v2599, %v2631
        %v2648 = vld [vmem:[%s8] sm:$0x1]
        %v2650 = vlaneseq
        %v2651 = vshrl.u32 %v2650, 7
        %v2652 = vsub.s32 0, %v2651
        %v2653 = vrot.slane %v2648, %v2652
        %v2655 = vmul.f32 %v2632, %v2653
        %v2656 = vmul.f32 %v2633, %v2653
        %v2657 = vmul.f32 %v2634, %v2653
        %v2658 = vmul.f32 %v2635, %v2653
        %v2659 = vmul.f32 %v2636, %v2653
        %v2660 = vmul.f32 %v2637, %v2653
        %v2661 = vmul.f32 %v2638, %v2653
        %v2662 = vmul.f32 %v2639, %v2653
        %v2663 = vmul.f32 %v2640, %v2653
        %v2664 = vmul.f32 %v2641, %v2653
        %v2665 = vmul.f32 %v2642, %v2653
        %v2666 = vmul.f32 %v2643, %v2653
        %v2667 = vmul.f32 %v2644, %v2653
        %v2668 = vmul.f32 %v2645, %v2653
        %v2669 = vmul.f32 %v2646, %v2653
        %v2670 = vmul.f32 %v2647, %v2653
        %v2671 = vld [vmem:[%s9] sm:$0x1]
        %v2673 = vlaneseq
        %v2674 = vshrl.u32 %v2673, 7
        %v2675 = vsub.s32 0, %v2674
        %v2676 = vrot.slane %v2671, %v2675
        %v2678 = vadd.f32 %v2655, %v2676
        %v2679 = vadd.f32 %v2656, %v2676
        %v2680 = vadd.f32 %v2657, %v2676
        %v2681 = vadd.f32 %v2658, %v2676
        %v2682 = vadd.f32 %v2659, %v2676
        %v2683 = vadd.f32 %v2660, %v2676
        %v2684 = vadd.f32 %v2661, %v2676
        %v2685 = vadd.f32 %v2662, %v2676
        %v2686 = vadd.f32 %v2663, %v2676
        %v2687 = vadd.f32 %v2664, %v2676
        %v2688 = vadd.f32 %v2665, %v2676
        %v2689 = vadd.f32 %v2666, %v2676
        %v2690 = vadd.f32 %v2667, %v2676
        %v2691 = vadd.f32 %v2668, %v2676
        %v2692 = vadd.f32 %v2669, %v2676
        %v2693 = vadd.f32 %v2670, %v2676
        %2694 = vxpose.xlu0.b32.start [1/16] %v2678, 128
        %2695 = vxpose.xlu0.b32.cont [2/16] %v2679, 128
        %2696 = vxpose.xlu0.b32.cont [3/16] %v2680, 128
        %2697 = vxpose.xlu0.b32.cont [4/16] %v2681, 128
        %2698 = vxpose.xlu0.b32.cont [5/16] %v2682, 128
        %2699 = vxpose.xlu0.b32.cont [6/16] %v2683, 128
        %2700 = vxpose.xlu0.b32.cont [7/16] %v2684, 128
        %2701 = vxpose.xlu0.b32.cont [8/16] %v2685, 128
        %2702 = vxpose.xlu0.b32.cont [9/16] %v2686, 128
        %2703 = vxpose.xlu0.b32.cont [10/16] %v2687, 128
        %2704 = vxpose.xlu0.b32.cont [11/16] %v2688, 128
        %2705 = vxpose.xlu0.b32.cont [12/16] %v2689, 128
        %2706 = vxpose.xlu0.b32.cont [13/16] %v2690, 128
        %2707 = vxpose.xlu0.b32.cont [14/16] %v2691, 128
        %2708 = vxpose.xlu0.b32.cont [15/16] %v2692, 128
        %2709 = vxpose.xlu0.b32.end [16/16] %v2693, 128
        %v2710 = vpop.trf.xlu0
        %v2711 = vpop.trf.xlu0
        %v2712 = vpop.trf.xlu0
        %v2713 = vpop.trf.xlu0
        %v2714 = vpop.trf.xlu0
        %v2715 = vpop.trf.xlu0
        %v2716 = vpop.trf.xlu0
        %v2717 = vpop.trf.xlu0
        %v2718 = vpop.trf.xlu0
        %v2719 = vpop.trf.xlu0
        %v2720 = vpop.trf.xlu0
        %v2721 = vpop.trf.xlu0
        %v2722 = vpop.trf.xlu0
        %v2723 = vpop.trf.xlu0
        %v2724 = vpop.trf.xlu0
        %v2725 = vpop.trf.xlu0
        %v2726 = vld [vmem:[%s10] sm:$0xff]
        %v2727 = vld [vmem:[%s10 + $0x8] sm:$0xff]
        %v2728 = vld [vmem:[%s10 + $0x10] sm:$0xff]
        %v2729 = vld [vmem:[%s10 + $0x18] sm:$0xff]
        %v2730 = vld [vmem:[%s10 + $0x20] sm:$0xff]
        %v2731 = vld [vmem:[%s10 + $0x28] sm:$0xff]
        %v2732 = vld [vmem:[%s10 + $0x30] sm:$0xff]
        %v2733 = vld [vmem:[%s10 + $0x38] sm:$0xff]
        %v2734 = vld [vmem:[%s10 + $0x40] sm:$0xff]
        %v2735 = vld [vmem:[%s10 + $0x48] sm:$0xff]
        %v2736 = vld [vmem:[%s10 + $0x50] sm:$0xff]
        %v2737 = vld [vmem:[%s10 + $0x58] sm:$0xff]
        %v2738 = vld [vmem:[%s10 + $0x60] sm:$0xff]
        %v2739 = vld [vmem:[%s10 + $0x68] sm:$0xff]
        %v2740 = vld [vmem:[%s10 + $0x70] sm:$0xff]
        %v2741 = vld [vmem:[%s10 + $0x78] sm:$0xff]
        %2743 = vset.pattern.permute.xlu0 0
        %2744 = vperm.xlu0 %2743, %v2726
        %v2745 = vpop.permute.xlu0 %2744
        %2748 = vset.pattern.permute.xlu0 0
        %2749 = vperm.xlu0 %2748, %v2727
        %v2750 = vpop.permute.xlu0 %2749
        %2753 = vset.pattern.permute.xlu0 0
        %2754 = vperm.xlu0 %2753, %v2728
        %v2755 = vpop.permute.xlu0 %2754
        %2758 = vset.pattern.permute.xlu0 0
        %2759 = vperm.xlu0 %2758, %v2729
        %v2760 = vpop.permute.xlu0 %2759
        %2763 = vset.pattern.permute.xlu0 0
        %2764 = vperm.xlu0 %2763, %v2730
        %v2765 = vpop.permute.xlu0 %2764
        %2768 = vset.pattern.permute.xlu0 0
        %2769 = vperm.xlu0 %2768, %v2731
        %v2770 = vpop.permute.xlu0 %2769
        %2773 = vset.pattern.permute.xlu0 0
        %2774 = vperm.xlu0 %2773, %v2732
        %v2775 = vpop.permute.xlu0 %2774
        %2778 = vset.pattern.permute.xlu0 0
        %2779 = vperm.xlu0 %2778, %v2733
        %v2780 = vpop.permute.xlu0 %2779
        %2783 = vset.pattern.permute.xlu0 0
        %2784 = vperm.xlu0 %2783, %v2734
        %v2785 = vpop.permute.xlu0 %2784
        %2788 = vset.pattern.permute.xlu0 0
        %2789 = vperm.xlu0 %2788, %v2735
        %v2790 = vpop.permute.xlu0 %2789
        %2793 = vset.pattern.permute.xlu0 0
        %2794 = vperm.xlu0 %2793, %v2736
        %v2795 = vpop.permute.xlu0 %2794
        %2798 = vset.pattern.permute.xlu0 0
        %2799 = vperm.xlu0 %2798, %v2737
        %v2800 = vpop.permute.xlu0 %2799
        %2803 = vset.pattern.permute.xlu0 0
        %2804 = vperm.xlu0 %2803, %v2738
        %v2805 = vpop.permute.xlu0 %2804
        %2808 = vset.pattern.permute.xlu0 0
        %2809 = vperm.xlu0 %2808, %v2739
        %v2810 = vpop.permute.xlu0 %2809
        %2813 = vset.pattern.permute.xlu0 0
        %2814 = vperm.xlu0 %2813, %v2740
        %v2815 = vpop.permute.xlu0 %2814
        %2818 = vset.pattern.permute.xlu0 0
        %2819 = vperm.xlu0 %2818, %v2741
        %v2820 = vpop.permute.xlu0 %2819
        %v2822 = vmul.f32 %v2710, %v2745
        %v2823 = vmul.f32 %v2711, %v2750
        %v2824 = vmul.f32 %v2712, %v2755
        %v2825 = vmul.f32 %v2713, %v2760
        %v2826 = vmul.f32 %v2714, %v2765
        %v2827 = vmul.f32 %v2715, %v2770
        %v2828 = vmul.f32 %v2716, %v2775
        %v2829 = vmul.f32 %v2717, %v2780
        %v2830 = vmul.f32 %v2718, %v2785
        %v2831 = vmul.f32 %v2719, %v2790
        %v2832 = vmul.f32 %v2720, %v2795
        %v2833 = vmul.f32 %v2721, %v2800
        %v2834 = vmul.f32 %v2722, %v2805
        %v2835 = vmul.f32 %v2723, %v2810
        %v2836 = vmul.f32 %v2724, %v2815
        %v2837 = vmul.f32 %v2725, %v2820
        %v2838 = vadd.f32 %v2822, %v2823
        %v2839 = vadd.f32 %v2838, %v2824
        %v2840 = vadd.f32 %v2839, %v2825
        %v2841 = vadd.f32 %v2840, %v2826
        %v2842 = vadd.f32 %v2841, %v2827
        %v2843 = vadd.f32 %v2842, %v2828
        %v2844 = vadd.f32 %v2843, %v2829
        %v2845 = vadd.f32 %v2844, %v2830
        %v2846 = vadd.f32 %v2845, %v2831
        %v2847 = vadd.f32 %v2846, %v2832
        %v2848 = vadd.f32 %v2847, %v2833
        %v2849 = vadd.f32 %v2848, %v2834
        %v2850 = vadd.f32 %v2849, %v2835
        %v2851 = vadd.f32 %v2850, %v2836
        %v2852 = vadd.f32 %v2851, %v2837
        %v2853 = vrot.slane %v2852, 4
        %v2854 = vadd.f32 %v2852, %v2853
        %v2855 = vrot.slane %v2854, 2
        %v2856 = vadd.f32 %v2854, %v2855
        %v2857 = vrot.slane %v2856, 1
        %v2858 = vadd.f32 %v2856, %v2857
        %v2859 = vld [vmem:[#allocation2] sm:$0x1]
        %2861 = vset.pattern.permute.xlu0 0
        %2862 = vperm.xlu0 %2861, %v2859
        %v2863 = vpop.permute.xlu0 %2862
        %v2865 = vlaneseq
        %v2866 = vshrl.u32 %v2865, 7
        %v2867 = vsub.s32 0, %v2866
        %v2868 = vrot.slane %v2863, %v2867
        %v2869 = vadd.f32 %v2858, %v2868
        %v2870 = vld [vmem:[%s443] sm:$0x1]
        %v2871 = vmul.f32 %v2869, %v2870
        %2872 = vst [vmem:[%s434] sm:$0x1] %v2871
        %s2873 = sand.u32 %s299, 1
        %s2874 = scalar_lea.sflag [#allocation5], %s2873
        %s2875 = sand.u32 %s299, 1
        %s2876 = scalar_lea.vmem [#allocation6], %s2875
        // Predicated region
        $region73: #{tpu_custom_call.1} parent=67 // pred_check
          %p2877 = pneg %p309
        $region74: #{tpu_custom_call.1} parent=67 // pred_check_branch
          %2879 = sbr.rel (%p2877) target = $region76
        $region75: #{tpu_custom_call.1} parent=67 // pred_region
          %s2881 = ssub.s32 16, 16
          %2882 = vsyncadd %s2874, %s2881
          %s2883 = smul.addr %s29, 16
          %s2884 = scalar_lea.hbm %s12, %s2883
          %s2886 = sshll.u32 %s2876, 4
          %s2887 = int_to_ptr.vmem [resolvable:$true] %s2886
          %2889 = dma.vmem_to_hbm [thread:$0]  %s2887, 16, %s2884, %s2874
        $region76: #{tpu_custom_call.1} parent=67 // pred_fallthru
          _
      $region68: #{tpu_custom_call.1} parent=5 // pred_fallthru
        _
      %p2890 = scmp.le.s32.totalorder 2, %s24
      // Predicated region
      $region77: #{tpu_custom_call.1} parent=5 // pred_check
        %p2891 = pneg %p2890
      $region78: #{tpu_custom_call.1} parent=5 // pred_check_branch
        %2893 = sbr.rel (%p2891) target = $region80
      $region79: #{tpu_custom_call.1} parent=5 // pred_region
        %s2894 = ssub.s32 %s24, 2
        // Predicated region
        $region81: #{tpu_custom_call.1} parent=79 // pred_check
          %p2895 = pneg %p315
        $region82: #{tpu_custom_call.1} parent=79 // pred_check_branch
          %2897 = sbr.rel (%p2895) target = $region84
        $region83: #{tpu_custom_call.1} parent=79 // pred_region
          %s2898 = sand.u32 %s300, 1
          %s2899 = scalar_lea.sflag [#allocation5], %s2898
          %s2900 = sand.u32 %s300, 1
          %s2901 = scalar_lea.vmem [#allocation6], %s2900
          %2902 = dma.done %s2899, 16
        $region84: #{tpu_custom_call.1} parent=79 // pred_fallthru
          _
      $region80: #{tpu_custom_call.1} parent=5 // pred_fallthru
        _
    $region6: #{tpu_custom_call.1} parent=1 // loop_footer
      %s28 = sadd.s32 1, %s24
    $region7: #{tpu_custom_call.1} parent=1 // loop_footer_branch
      %23 = sbr.rel target = $region3
    $region8: #{tpu_custom_call.1} parent=1 // loop_exit
      _
    %2903 = vsyncpa [#allocation4], 1
    %s2904 = scalar_lea.sflag [#allocation4], 1
    %2905 = vsyncpa %s2904, 1
    %2906 = vsyncpa [#allocation5], 1
    %s2907 = scalar_lea.sflag [#allocation5], 1
    %2908 = vsyncpa %s2907, 1

</llo_original>
